<compile_context>
chip_gen: v7x
topology: tpu7x:2x2x1
jax: 0.10.0
libtpu: 0.0.40
codegen_flags: <defaults>
</compile_context>

<pallas_src>
import functools

import numpy as np
import jax
import jax.numpy as jnp
from jax import lax
from jax.experimental import pallas as pl
from jax.experimental.pallas import tpu as pltpu


def _round_up(x, m):
    return ((x + m - 1) // m) * m


def _zero_halo(pad_ref, H, W):
    """Zero only the 1-wide halo of a (H+2, WP, C) padded scratch.

    The interior [1:H+1, 1:W+1] is overwritten for every image, so only the top/bottom rows,
    the left column and the right padding columns need clearing (O(H+W), not O(H*W)).  Done
    every grid step so it stays correct when the batch axis is sharded across TensorCores.
    """
    Hp, WP, C = pad_ref.shape
    zrow = jnp.zeros((1, WP, C), pad_ref.dtype)
    pad_ref[0:1] = zrow
    pad_ref[Hp - 1:Hp] = zrow
    pad_ref[:, 0:1, :] = jnp.zeros((Hp, 1, C), pad_ref.dtype)
    pad_ref[:, W + 1:WP, :] = jnp.zeros((Hp, WP - W - 1, C), pad_ref.dtype)


def _conv3x3_padded(pad_ref, w_ref, H, W):
    """3x3 conv (stride 1) over a zero-padded (H+2, WP, C) VMEM scratch.

    pad_ref: (H+2, WP, C) bf16/f32, zero halo, image in [1:H+1, 1:W+1].
    w_ref:   (3, 3*C, Co)   -> one matmul per kw tap, or
             (1, 3*C, 3*Co) -> one fused wide matmul (used when Co % 128 == 0 so the kw
             result slices are lane-aligned).
    Returns a f32 (H, W, Co) accumulator.

    kh taps are folded into the contraction axis (K = 3C) via a lane concat of three free
    leading-dim slices; kw taps are combined from sublane-shifted slices of the matmul
    result(s), accumulated one at a time so only one result slab is live.
    """
    Hp, WP, C = pad_ref.shape
    xp = pad_ref[...]
    a = jnp.concatenate([xp[kh:kh + H] for kh in range(3)], axis=-1)   # (H, WP, 3C)
    a = a.reshape(H * WP, 3 * C)                                       # WP % 16 == 0 -> aligned

    if w_ref.shape[0] == 1:
        # Fused-kw path (Co % 128 == 0): one wide matmul, lane-aligned result slices.
        Co = w_ref.shape[2] // 3
        z = jnp.dot(a, w_ref[0], preferred_element_type=jnp.float32).reshape(H, WP, 3 * Co)
        acc = z[:, 0:W, 0:Co]
        acc = acc + z[:, 1:W + 1, Co:2 * Co]
        acc = acc + z[:, 2:W + 2, 2 * Co:3 * Co]
        return acc

    Co = w_ref.shape[2]

    def tap(kw):
        z = jnp.dot(a, w_ref[kw], preferred_element_type=jnp.float32).reshape(H, WP, Co)
        return z[:, kw:W + kw]

    acc = tap(0)
    acc = acc + tap(1)
    acc = acc + tap(2)
    return acc


def _attn_basic_block_kernel(x_ref, w1_ref, s1_ref, b1_ref, w2_ref, s2_ref, b2_ref,
                             out_ref, pad1, pad2):
    Nb, H, W, _ = x_ref.shape

    _zero_halo(pad1, H, W)
    _zero_halo(pad2, H, W)

    s1 = s1_ref[...]
    b1 = b1_ref[...]
    s2 = s2_ref[...]
    b2 = b2_ref[...]

    for nb in range(Nb):                                   # static unroll; Nb kept small
        # conv1 -> bn1 -> relu.  The input goes straight into the padded scratch; the
        # identity is re-read from the resident block only at the residual add.
        pad1[1:H + 1, 1:W + 1, :] = x_ref[nb].astype(pad1.dtype)
        acc1 = _conv3x3_padded(pad1, w1_ref, H, W)         # (H, W, Cmid) f32
        h1 = jnp.maximum(acc1 * s1 + b1, 0.0)

        # conv2 -> bn2 -> +identity -> relu
        pad2[1:H + 1, 1:W + 1, :] = h1.astype(pad2.dtype)
        acc2 = _conv3x3_padded(pad2, w2_ref, H, W)         # (H, W, Cout) f32
        out = acc2 * s2 + b2 + x_ref[nb].astype(jnp.float32)
        out_ref[nb] = jnp.maximum(out, 0.0).astype(out_ref.dtype)


def _fold_bn(gamma, beta, mean, var, eps):
    inv = gamma / jnp.sqrt(var + eps)
    return inv, beta - mean * inv


def _prep_conv_weight(w_oihw, mxu_dtype):
    """OIHW -> MXU-friendly layout (rows = kh*Ci + ci, matching the kh lane-concat)."""
    Co, Ci, _, _ = w_oihw.shape
    if Co % 128 == 0:
        # (kh, ci, kw, co) -> (3Ci, 3Co): one fused matmul, lane-aligned kw column groups.
        w = jnp.transpose(w_oihw, (2, 1, 3, 0)).reshape(1, 3 * Ci, 3 * Co)
    else:
        # (kw, kh, ci, co) -> (3, 3Ci, Co): one matmul per kw tap.
        w = jnp.transpose(w_oihw, (3, 2, 1, 0)).reshape(3, 3 * Ci, Co)
    return w.astype(mxu_dtype)


def _pick_batch_block(N, per_image_io_bytes):
    """Images per grid step: amortize per-step overhead on tiny layers, but keep at least two
    grid steps so both v7x TensorCores get work."""
    for nb in (8, 4, 2):
        if N % nb == 0 and N // nb >= 2 and nb * per_image_io_bytes <= (1 << 20):
            return nb
    return 1


def _vmem_limit_bytes(Nb, H, W, WP, Cin, Cmid, Cout, io_bytes, mxu_bytes):
    """Scoped-VMEM budget from actual block/scratch/temporary sizes (+30% margin), clamped to
    [32 MiB, 0.9 * physical]: raises v5e's 16 MiB default, never over-commits v7x's 64 MiB."""
    in_blk = Nb * H * W * Cin * io_bytes
    out_blk = Nb * H * W * Cout * io_bytes
    w_b = 9 * (Cin * Cmid + Cmid * Cout) * mxu_bytes
    pads = (H + 2) * WP * (Cin + Cmid) * mxu_bytes
    tmp1 = H * WP * (3 * Cin * mxu_bytes + 2 * Cmid * 4)
    tmp2 = H * WP * (3 * Cmid * mxu_bytes + 2 * Cout * 4)
    est = 2 * (in_blk + out_blk + w_b) + pads + max(tmp1, tmp2) + (1 << 20)
    est = int(est * 1.3)
    try:
        phys = pltpu.get_tpu_info().vmem_capacity_bytes
    except Exception:
        phys = 64 << 20
    return int(max(32 << 20, min(est, int(phys * 0.9))))


@functools.partial(jax.jit, static_argnames=("eps", "mxu_dtype"))
def attn_basic_block_nhwc(x_nhwc,
                          w1_oihw, g1, beta1, m1, v1,
                          w2_oihw, g2, beta2, m2, v2,
                          eps=1e-5, mxu_dtype=jnp.bfloat16):
    """AttnBasicBlock forward (stride=1, no downsample), NHWC in / NHWC out.

    Preferred entry point: the input is read from HBM exactly once and the output written
    once (no boundary layout transposes)."""
    N, H, W, Cin = x_nhwc.shape
    Cmid = w1_oihw.shape[0]
    Cout = w2_oihw.shape[0]
    assert Cin == Cout, "identity path requires inplanes == planes (stride=1, no downsample)"

    WP = _round_up(W + 2, 16)                        # bf16 sublane pack alignment
    io_bytes = x_nhwc.dtype.itemsize
    mxu_bytes = np.dtype(mxu_dtype).itemsize
    Nb = _pick_batch_block(N, H * W * (Cin + Cout) * io_bytes)

    s1, b1 = _fold_bn(g1, beta1, m1, v1, eps)
    s2, b2 = _fold_bn(g2, beta2, m2, v2, eps)
    s1 = s1.reshape(1, 1, Cmid).astype(jnp.float32)
    b1 = b1.reshape(1, 1, Cmid).astype(jnp.float32)
    s2 = s2.reshape(1, 1, Cout).astype(jnp.float32)
    b2 = b2.reshape(1, 1, Cout).astype(jnp.float32)

    w1c = _prep_conv_weight(w1_oihw, mxu_dtype)
    w2c = _prep_conv_weight(w2_oihw, mxu_dtype)

    return pl.pallas_call(
        _attn_basic_block_kernel,
        out_shape=jax.ShapeDtypeStruct((N, H, W, Cout), x_nhwc.dtype),
        grid_spec=pltpu.PrefetchScalarGridSpec(
            num_scalar_prefetch=0,
            grid=(N // Nb,),
            in_specs=[
                pl.BlockSpec((Nb, H, W, Cin), lambda n: (n, 0, 0, 0)),
                pl.BlockSpec(w1c.shape, lambda n: (0, 0, 0)),
                pl.BlockSpec((1, 1, Cmid), lambda n: (0, 0, 0)),
                pl.BlockSpec((1, 1, Cmid), lambda n: (0, 0, 0)),
                pl.BlockSpec(w2c.shape, lambda n: (0, 0, 0)),
                pl.BlockSpec((1, 1, Cout), lambda n: (0, 0, 0)),
                pl.BlockSpec((1, 1, Cout), lambda n: (0, 0, 0)),
            ],
            out_specs=pl.BlockSpec((Nb, H, W, Cout), lambda n: (n, 0, 0, 0)),
            scratch_shapes=[
                pltpu.VMEM((H + 2, WP, Cin), mxu_dtype),   # padded conv1 input
                pltpu.VMEM((H + 2, WP, Cmid), mxu_dtype),  # padded conv2 input
            ],
        ),
        compiler_params=pltpu.CompilerParams(
            dimension_semantics=("parallel",),
            vmem_limit_bytes=_vmem_limit_bytes(Nb, H, W, WP, Cin, Cmid, Cout,
                                               io_bytes, mxu_bytes),
        ),
    )(x_nhwc, w1c, s1, b1, w2c, s2, b2)


@functools.partial(jax.jit, static_argnames=("eps", "mxu_dtype"))
def attn_basic_block(x_nchw,
                     w1_oihw, g1, beta1, m1, v1,
                     w2_oihw, g2, beta2, m2, v2,
                     eps=1e-5, mxu_dtype=jnp.bfloat16):
    """PyTorch-layout (NCHW) drop-in entry.  NHWC pipelines should call attn_basic_block_nhwc
    directly: the two transposes here are extra full-tensor HBM round-trips outside the kernel."""
    x_nhwc = jnp.transpose(x_nchw, (0, 2, 3, 1))
    out = attn_basic_block_nhwc(x_nhwc, w1_oihw, g1, beta1, m1, v1,
                                w2_oihw, g2, beta2, m2, v2,
                                eps=eps, mxu_dtype=mxu_dtype)
    return jnp.transpose(out, (0, 3, 1, 2))


def _reference(x, w1, g1, beta1, m1, v1, w2, g2, beta2, m2, v2, eps=1e-5):
    """Pure-JAX NCHW reference (matches the PyTorch module in eval mode, bias=False convs)."""
    def conv(x, w):
        return lax.conv_general_dilated(
            x, w, window_strides=(1, 1), padding=((1, 1), (1, 1)),
            dimension_numbers=("NCHW", "OIHW", "NCHW"))

    def bn(x, g, b, m, v):
        inv = g / jnp.sqrt(v + eps)
        return x * inv.reshape(1, -1, 1, 1) + (b - m * inv).reshape(1, -1, 1, 1)

    out = jax.nn.relu(bn(conv(x, w1), g1, beta1, m1, v1))
    out = bn(conv(out, w2), g2, beta2, m2, v2)
    return jax.nn.relu(out + x)


if __name__ == "__main__":
    # Small shapes consistent with the module (inplanes == planes, stride=1, no downsample).
    N, C, H, W = 2, 4, 16, 16
    key = jax.random.PRNGKey(0)
    ks = jax.random.split(key, 11)

    x = jax.random.normal(ks[0], (N, C, H, W), jnp.float32)

    # conv3x3 weights, PyTorch OIHW layout, bias=False.
    w1 = jax.random.normal(ks[1], (C, C, 3, 3), jnp.float32) * 0.1
    w2 = jax.random.normal(ks[2], (C, C, 3, 3), jnp.float32) * 0.1

    # BatchNorm params (deterministic, nontrivial).
    g1 = 1.0 + 0.1 * jax.random.normal(ks[3], (C,), jnp.float32)
    beta1 = 0.1 * jax.random.normal(ks[4], (C,), jnp.float32)
    m1 = 0.1 * jax.random.normal(ks[5], (C,), jnp.float32)
    v1 = 1.0 + 0.1 * jnp.abs(jax.random.normal(ks[6], (C,), jnp.float32))
    g2 = 1.0 + 0.1 * jax.random.normal(ks[7], (C,), jnp.float32)
    beta2 = 0.1 * jax.random.normal(ks[8], (C,), jnp.float32)
    m2 = 0.1 * jax.random.normal(ks[9], (C,), jnp.float32)
    v2 = 1.0 + 0.1 * jnp.abs(jax.random.normal(ks[10], (C,), jnp.float32))

    ref = _reference(x, w1, g1, beta1, m1, v1, w2, g2, beta2, m2, v2)

    # Production bf16-MXU path (relaxed tolerance: bf16 contraction, f32 accumulation).
    out_bf16 = attn_basic_block(x, w1, g1, beta1, m1, v1, w2, g2, beta2, m2, v2)
    out_bf16 = jax.block_until_ready(out_bf16)
    assert out_bf16.shape == (N, C, H, W)
    assert jnp.allclose(out_bf16, ref, atol=5e-2, rtol=5e-2), \
        float(jnp.max(jnp.abs(out_bf16 - ref)))

    # f32-MXU path (tight tolerance) to pin exact numerics of the conv decomposition.
    out_f32 = attn_basic_block(x, w1, g1, beta1, m1, v1, w2, g2, beta2, m2, v2,
                               mxu_dtype=jnp.float32)
    out_f32 = jax.block_until_ready(out_f32)
    assert jnp.allclose(out_f32, ref, atol=1e-4, rtol=1e-4), \
        float(jnp.max(jnp.abs(out_f32 - ref)))

    print("KERNEL_OK")
</pallas_src>

<mosaic_0001>
module attributes {stable_mosaic.version = 11 : i64} {
  func.func @_attn_basic_block_kernel(%arg0: i32, %arg1: memref<1x16x16x4xf32, #tpu.memory_space<vmem>>, %arg2: memref<3x12x4xbf16, #tpu.memory_space<vmem>>, %arg3: memref<1x1x4xf32, #tpu.memory_space<vmem>>, %arg4: memref<1x1x4xf32, #tpu.memory_space<vmem>>, %arg5: memref<3x12x4xbf16, #tpu.memory_space<vmem>>, %arg6: memref<1x1x4xf32, #tpu.memory_space<vmem>>, %arg7: memref<1x1x4xf32, #tpu.memory_space<vmem>>, %arg8: memref<1x16x16x4xf32, #tpu.memory_space<vmem>>, %arg9: memref<18x32x4xbf16, #tpu.memory_space<vmem>>, %arg10: memref<18x32x4xbf16, #tpu.memory_space<vmem>>) attributes {dimension_semantics = [#tpu.dimension_semantics<parallel>], iteration_bounds = array<i64: 2>, scalar_prefetch = 0 : i64, scratch_operands = 2 : i64, tpu.core_type = #tpu.core_type<tc>, window_params = [{transform_indices = @transform_0, window_bounds = array<i64: 1, 16, 16, 4>}, {pipeline_mode = #tpu.pipeline_mode<synchronous>, transform_indices = @transform_1, window_bounds = array<i64: 3, 12, 4>}, {pipeline_mode = #tpu.pipeline_mode<synchronous>, transform_indices = @transform_2, window_bounds = array<i64: 1, 1, 4>}, {pipeline_mode = #tpu.pipeline_mode<synchronous>, transform_indices = @transform_3, window_bounds = array<i64: 1, 1, 4>}, {pipeline_mode = #tpu.pipeline_mode<synchronous>, transform_indices = @transform_4, window_bounds = array<i64: 3, 12, 4>}, {pipeline_mode = #tpu.pipeline_mode<synchronous>, transform_indices = @transform_5, window_bounds = array<i64: 1, 1, 4>}, {pipeline_mode = #tpu.pipeline_mode<synchronous>, transform_indices = @transform_6, window_bounds = array<i64: 1, 1, 4>}, {transform_indices = @transform_7, window_bounds = array<i64: 1, 16, 16, 4>}]} {
    %cst = arith.constant 0.000000e+00 : bf16
    %0 = vector.broadcast %cst : bf16 to vector<1x32x4xbf16>
    %c0 = arith.constant 0 : index
    %c0_0 = arith.constant 0 : index
    %c0_1 = arith.constant 0 : index
    %1 = vector.load %arg9[%c0, %c0_0, %c0_1] : memref<18x32x4xbf16, #tpu.memory_space<vmem>>, vector<1x32x4xbf16>
    tpu.vector_store %arg9[%c0, %c0_0, %c0_1], %0 {strides = array<i32>} : memref<18x32x4xbf16, #tpu.memory_space<vmem>>, vector<1x32x4xbf16>,
    %c17 = arith.constant 17 : index
    %c0_2 = arith.constant 0 : index
    %c0_3 = arith.constant 0 : index
    %2 = vector.load %arg9[%c17, %c0_2, %c0_3] : memref<18x32x4xbf16, #tpu.memory_space<vmem>>, vector<1x32x4xbf16>
    tpu.vector_store %arg9[%c17, %c0_2, %c0_3], %0 {strides = array<i32>} : memref<18x32x4xbf16, #tpu.memory_space<vmem>>, vector<1x32x4xbf16>,
    %cst_4 = arith.constant 0.000000e+00 : bf16
    %3 = vector.broadcast %cst_4 : bf16 to vector<18x1x4xbf16>
    %c0_5 = arith.constant 0 : index
    %c0_6 = arith.constant 0 : index
    %c0_7 = arith.constant 0 : index
    %4 = vector.load %arg9[%c0_5, %c0_6, %c0_7] : memref<18x32x4xbf16, #tpu.memory_space<vmem>>, vector<18x1x4xbf16>
    tpu.vector_store %arg9[%c0_5, %c0_6, %c0_7], %3 {strides = array<i32>} : memref<18x32x4xbf16, #tpu.memory_space<vmem>>, vector<18x1x4xbf16>,
    %cst_8 = arith.constant 0.000000e+00 : bf16
    %5 = vector.broadcast %cst_8 : bf16 to vector<18x15x4xbf16>
    %c0_9 = arith.constant 0 : index
    %c17_10 = arith.constant 17 : index
    %c0_11 = arith.constant 0 : index
    %6 = vector.load %arg9[%c0_9, %c17_10, %c0_11] : memref<18x32x4xbf16, #tpu.memory_space<vmem>>, vector<18x15x4xbf16>
    tpu.vector_store %arg9[%c0_9, %c17_10, %c0_11], %5 {strides = array<i32>} : memref<18x32x4xbf16, #tpu.memory_space<vmem>>, vector<18x15x4xbf16>,
    %cst_12 = arith.constant 0.000000e+00 : bf16
    %7 = vector.broadcast %cst_12 : bf16 to vector<1x32x4xbf16>
    %c0_13 = arith.constant 0 : index
    %c0_14 = arith.constant 0 : index
    %c0_15 = arith.constant 0 : index
    %8 = vector.load %arg10[%c0_13, %c0_14, %c0_15] : memref<18x32x4xbf16, #tpu.memory_space<vmem>>, vector<1x32x4xbf16>
    tpu.vector_store %arg10[%c0_13, %c0_14, %c0_15], %7 {strides = array<i32>} : memref<18x32x4xbf16, #tpu.memory_space<vmem>>, vector<1x32x4xbf16>,
    %c17_16 = arith.constant 17 : index
    %c0_17 = arith.constant 0 : index
    %c0_18 = arith.constant 0 : index
    %9 = vector.load %arg10[%c17_16, %c0_17, %c0_18] : memref<18x32x4xbf16, #tpu.memory_space<vmem>>, vector<1x32x4xbf16>
    tpu.vector_store %arg10[%c17_16, %c0_17, %c0_18], %7 {strides = array<i32>} : memref<18x32x4xbf16, #tpu.memory_space<vmem>>, vector<1x32x4xbf16>,
    %cst_19 = arith.constant 0.000000e+00 : bf16
    %10 = vector.broadcast %cst_19 : bf16 to vector<18x1x4xbf16>
    %c0_20 = arith.constant 0 : index
    %c0_21 = arith.constant 0 : index
    %c0_22 = arith.constant 0 : index
    %11 = vector.load %arg10[%c0_20, %c0_21, %c0_22] : memref<18x32x4xbf16, #tpu.memory_space<vmem>>, vector<18x1x4xbf16>
    tpu.vector_store %arg10[%c0_20, %c0_21, %c0_22], %10 {strides = array<i32>} : memref<18x32x4xbf16, #tpu.memory_space<vmem>>, vector<18x1x4xbf16>,
    %cst_23 = arith.constant 0.000000e+00 : bf16
    %12 = vector.broadcast %cst_23 : bf16 to vector<18x15x4xbf16>
    %c0_24 = arith.constant 0 : index
    %c17_25 = arith.constant 17 : index
    %c0_26 = arith.constant 0 : index
    %13 = vector.load %arg10[%c0_24, %c17_25, %c0_26] : memref<18x32x4xbf16, #tpu.memory_space<vmem>>, vector<18x15x4xbf16>
    tpu.vector_store %arg10[%c0_24, %c17_25, %c0_26], %12 {strides = array<i32>} : memref<18x32x4xbf16, #tpu.memory_space<vmem>>, vector<18x15x4xbf16>,
    %c0_27 = arith.constant 0 : index
    %c0_28 = arith.constant 0 : index
    %c0_29 = arith.constant 0 : index
    %14 = vector.load %arg3[%c0_27, %c0_28, %c0_29] : memref<1x1x4xf32, #tpu.memory_space<vmem>>, vector<1x1x4xf32>
    %c0_30 = arith.constant 0 : index
    %c0_31 = arith.constant 0 : index
    %c0_32 = arith.constant 0 : index
    %15 = vector.load %arg4[%c0_30, %c0_31, %c0_32] : memref<1x1x4xf32, #tpu.memory_space<vmem>>, vector<1x1x4xf32>
    %c0_33 = arith.constant 0 : index
    %c0_34 = arith.constant 0 : index
    %c0_35 = arith.constant 0 : index
    %16 = vector.load %arg6[%c0_33, %c0_34, %c0_35] : memref<1x1x4xf32, #tpu.memory_space<vmem>>, vector<1x1x4xf32>
    %c0_36 = arith.constant 0 : index
    %c0_37 = arith.constant 0 : index
    %c0_38 = arith.constant 0 : index
    %17 = vector.load %arg7[%c0_36, %c0_37, %c0_38] : memref<1x1x4xf32, #tpu.memory_space<vmem>>, vector<1x1x4xf32>
    %c0_39 = arith.constant 0 : index
    %c0_40 = arith.constant 0 : index
    %c0_41 = arith.constant 0 : index
    %c0_42 = arith.constant 0 : index
    %18 = vector.load %arg1[%c0_39, %c0_40, %c0_41, %c0_42] : memref<1x16x16x4xf32, #tpu.memory_space<vmem>>, vector<1x16x16x4xf32>
    %19 = vector.shape_cast %18 : vector<1x16x16x4xf32> to vector<16x16x4xf32>
    %20 = arith.truncf %19 : vector<16x16x4xf32> to vector<16x16x4xbf16>
    %c1 = arith.constant 1 : index
    %c1_43 = arith.constant 1 : index
    %c0_44 = arith.constant 0 : index
    %21 = vector.load %arg9[%c1, %c1_43, %c0_44] : memref<18x32x4xbf16, #tpu.memory_space<vmem>>, vector<16x16x4xbf16>
    tpu.vector_store %arg9[%c1, %c1_43, %c0_44], %20 {strides = array<i32>} : memref<18x32x4xbf16, #tpu.memory_space<vmem>>, vector<16x16x4xbf16>,
    %c0_45 = arith.constant 0 : index
    %c0_46 = arith.constant 0 : index
    %c0_47 = arith.constant 0 : index
    %22 = vector.load %arg9[%c0_45, %c0_46, %c0_47] : memref<18x32x4xbf16, #tpu.memory_space<vmem>>, vector<18x32x4xbf16>
    %23 = vector.extract_strided_slice %22 {offsets = [0, 0, 0], sizes = [16, 32, 4], strides = [1, 1, 1]} : vector<18x32x4xbf16> to vector<16x32x4xbf16>
    %24 = vector.extract_strided_slice %22 {offsets = [1, 0, 0], sizes = [16, 32, 4], strides = [1, 1, 1]} : vector<18x32x4xbf16> to vector<16x32x4xbf16>
    %25 = vector.extract_strided_slice %22 {offsets = [2, 0, 0], sizes = [16, 32, 4], strides = [1, 1, 1]} : vector<18x32x4xbf16> to vector<16x32x4xbf16>
    %26 = tpu.concatenate %23, %24, %25 in 2 : vector<16x32x4xbf16>, vector<16x32x4xbf16>, vector<16x32x4xbf16> -> vector<16x32x12xbf16>
    %27 = vector.shape_cast %26 : vector<16x32x12xbf16> to vector<512x12xbf16>
    %c0_48 = arith.constant 0 : index
    %c0_49 = arith.constant 0 : index
    %c0_50 = arith.constant 0 : index
    %28 = vector.load %arg2[%c0_48, %c0_49, %c0_50] : memref<3x12x4xbf16, #tpu.memory_space<vmem>>, vector<1x12x4xbf16>
    %29 = vector.shape_cast %28 : vector<1x12x4xbf16> to vector<12x4xbf16>
    %cst_51 = arith.constant dense<0.000000e+00> : vector<512x4xf32>
    %30 = tpu.matmul %27, %29, %cst_51 {dimension_numbers = #tpu.dot_dimension_numbers<[1], [0], [0], [1], [0, 0, 1, 1], [], []>} : vector<512x12xbf16>, vector<12x4xbf16>, vector<512x4xf32> -> vector<512x4xf32>
    %31 = vector.shape_cast %30 : vector<512x4xf32> to vector<16x32x4xf32>
    %32 = vector.extract_strided_slice %31 {offsets = [0, 0, 0], sizes = [16, 16, 4], strides = [1, 1, 1]} : vector<16x32x4xf32> to vector<16x16x4xf32>
    %c1_52 = arith.constant 1 : index
    %c0_53 = arith.constant 0 : index
    %c0_54 = arith.constant 0 : index
    %33 = vector.load %arg2[%c1_52, %c0_53, %c0_54] : memref<3x12x4xbf16, #tpu.memory_space<vmem>>, vector<1x12x4xbf16>
    %34 = vector.shape_cast %33 : vector<1x12x4xbf16> to vector<12x4xbf16>
    %cst_55 = arith.constant dense<0.000000e+00> : vector<512x4xf32>
    %35 = tpu.matmul %27, %34, %cst_55 {dimension_numbers = #tpu.dot_dimension_numbers<[1], [0], [0], [1], [0, 0, 1, 1], [], []>} : vector<512x12xbf16>, vector<12x4xbf16>, vector<512x4xf32> -> vector<512x4xf32>
    %36 = vector.shape_cast %35 : vector<512x4xf32> to vector<16x32x4xf32>
    %37 = vector.extract_strided_slice %36 {offsets = [0, 1, 0], sizes = [16, 16, 4], strides = [1, 1, 1]} : vector<16x32x4xf32> to vector<16x16x4xf32>
    %38 = arith.addf %32, %37 : vector<16x16x4xf32>
    %c2 = arith.constant 2 : index
    %c0_56 = arith.constant 0 : index
    %c0_57 = arith.constant 0 : index
    %39 = vector.load %arg2[%c2, %c0_56, %c0_57] : memref<3x12x4xbf16, #tpu.memory_space<vmem>>, vector<1x12x4xbf16>
    %40 = vector.shape_cast %39 : vector<1x12x4xbf16> to vector<12x4xbf16>
    %cst_58 = arith.constant dense<0.000000e+00> : vector<512x4xf32>
    %41 = tpu.matmul %27, %40, %cst_58 {dimension_numbers = #tpu.dot_dimension_numbers<[1], [0], [0], [1], [0, 0, 1, 1], [], []>} : vector<512x12xbf16>, vector<12x4xbf16>, vector<512x4xf32> -> vector<512x4xf32>
    %42 = vector.shape_cast %41 : vector<512x4xf32> to vector<16x32x4xf32>
    %43 = vector.extract_strided_slice %42 {offsets = [0, 2, 0], sizes = [16, 16, 4], strides = [1, 1, 1]} : vector<16x32x4xf32> to vector<16x16x4xf32>
    %44 = arith.addf %38, %43 : vector<16x16x4xf32>
    %45 = vector.broadcast %14 : vector<1x1x4xf32> to vector<16x16x4xf32>
    %46 = arith.mulf %44, %45 : vector<16x16x4xf32>
    %47 = vector.broadcast %15 : vector<1x1x4xf32> to vector<16x16x4xf32>
    %48 = arith.addf %46, %47 : vector<16x16x4xf32>
    %cst_59 = arith.constant 0.000000e+00 : f32
    %49 = vector.broadcast %cst_59 : f32 to vector<16x16x4xf32>
    %50 = arith.maximumf %48, %49 : vector<16x16x4xf32>
    %51 = arith.truncf %50 : vector<16x16x4xf32> to vector<16x16x4xbf16>
    %c1_60 = arith.constant 1 : index
    %c1_61 = arith.constant 1 : index
    %c0_62 = arith.constant 0 : index
    %52 = vector.load %arg10[%c1_60, %c1_61, %c0_62] : memref<18x32x4xbf16, #tpu.memory_space<vmem>>, vector<16x16x4xbf16>
    tpu.vector_store %arg10[%c1_60, %c1_61, %c0_62], %51 {strides = array<i32>} : memref<18x32x4xbf16, #tpu.memory_space<vmem>>, vector<16x16x4xbf16>,
    %c0_63 = arith.constant 0 : index
    %c0_64 = arith.constant 0 : index
    %c0_65 = arith.constant 0 : index
    %53 = vector.load %arg10[%c0_63, %c0_64, %c0_65] : memref<18x32x4xbf16, #tpu.memory_space<vmem>>, vector<18x32x4xbf16>
    %54 = vector.extract_strided_slice %53 {offsets = [0, 0, 0], sizes = [16, 32, 4], strides = [1, 1, 1]} : vector<18x32x4xbf16> to vector<16x32x4xbf16>
    %55 = vector.extract_strided_slice %53 {offsets = [1, 0, 0], sizes = [16, 32, 4], strides = [1, 1, 1]} : vector<18x32x4xbf16> to vector<16x32x4xbf16>
    %56 = vector.extract_strided_slice %53 {offsets = [2, 0, 0], sizes = [16, 32, 4], strides = [1, 1, 1]} : vector<18x32x4xbf16> to vector<16x32x4xbf16>
    %57 = tpu.concatenate %54, %55, %56 in 2 : vector<16x32x4xbf16>, vector<16x32x4xbf16>, vector<16x32x4xbf16> -> vector<16x32x12xbf16>
    %58 = vector.shape_cast %57 : vector<16x32x12xbf16> to vector<512x12xbf16>
    %c0_66 = arith.constant 0 : index
    %c0_67 = arith.constant 0 : index
    %c0_68 = arith.constant 0 : index
    %59 = vector.load %arg5[%c0_66, %c0_67, %c0_68] : memref<3x12x4xbf16, #tpu.memory_space<vmem>>, vector<1x12x4xbf16>
    %60 = vector.shape_cast %59 : vector<1x12x4xbf16> to vector<12x4xbf16>
    %cst_69 = arith.constant dense<0.000000e+00> : vector<512x4xf32>
    %61 = tpu.matmul %58, %60, %cst_69 {dimension_numbers = #tpu.dot_dimension_numbers<[1], [0], [0], [1], [0, 0, 1, 1], [], []>} : vector<512x12xbf16>, vector<12x4xbf16>, vector<512x4xf32> -> vector<512x4xf32>
    %62 = vector.shape_cast %61 : vector<512x4xf32> to vector<16x32x4xf32>
    %63 = vector.extract_strided_slice %62 {offsets = [0, 0, 0], sizes = [16, 16, 4], strides = [1, 1, 1]} : vector<16x32x4xf32> to vector<16x16x4xf32>
    %c1_70 = arith.constant 1 : index
    %c0_71 = arith.constant 0 : index
    %c0_72 = arith.constant 0 : index
    %64 = vector.load %arg5[%c1_70, %c0_71, %c0_72] : memref<3x12x4xbf16, #tpu.memory_space<vmem>>, vector<1x12x4xbf16>
    %65 = vector.shape_cast %64 : vector<1x12x4xbf16> to vector<12x4xbf16>
    %cst_73 = arith.constant dense<0.000000e+00> : vector<512x4xf32>
    %66 = tpu.matmul %58, %65, %cst_73 {dimension_numbers = #tpu.dot_dimension_numbers<[1], [0], [0], [1], [0, 0, 1, 1], [], []>} : vector<512x12xbf16>, vector<12x4xbf16>, vector<512x4xf32> -> vector<512x4xf32>
    %67 = vector.shape_cast %66 : vector<512x4xf32> to vector<16x32x4xf32>
    %68 = vector.extract_strided_slice %67 {offsets = [0, 1, 0], sizes = [16, 16, 4], strides = [1, 1, 1]} : vector<16x32x4xf32> to vector<16x16x4xf32>
    %69 = arith.addf %63, %68 : vector<16x16x4xf32>
    %c2_74 = arith.constant 2 : index
    %c0_75 = arith.constant 0 : index
    %c0_76 = arith.constant 0 : index
    %70 = vector.load %arg5[%c2_74, %c0_75, %c0_76] : memref<3x12x4xbf16, #tpu.memory_space<vmem>>, vector<1x12x4xbf16>
    %71 = vector.shape_cast %70 : vector<1x12x4xbf16> to vector<12x4xbf16>
    %cst_77 = arith.constant dense<0.000000e+00> : vector<512x4xf32>
    %72 = tpu.matmul %58, %71, %cst_77 {dimension_numbers = #tpu.dot_dimension_numbers<[1], [0], [0], [1], [0, 0, 1, 1], [], []>} : vector<512x12xbf16>, vector<12x4xbf16>, vector<512x4xf32> -> vector<512x4xf32>
    %73 = vector.shape_cast %72 : vector<512x4xf32> to vector<16x32x4xf32>
    %74 = vector.extract_strided_slice %73 {offsets = [0, 2, 0], sizes = [16, 16, 4], strides = [1, 1, 1]} : vector<16x32x4xf32> to vector<16x16x4xf32>
    %75 = arith.addf %69, %74 : vector<16x16x4xf32>
    %76 = vector.broadcast %16 : vector<1x1x4xf32> to vector<16x16x4xf32>
    %77 = arith.mulf %75, %76 : vector<16x16x4xf32>
    %78 = vector.broadcast %17 : vector<1x1x4xf32> to vector<16x16x4xf32>
    %79 = arith.addf %77, %78 : vector<16x16x4xf32>
    %c0_78 = arith.constant 0 : index
    %c0_79 = arith.constant 0 : index
    %c0_80 = arith.constant 0 : index
    %c0_81 = arith.constant 0 : index
    %80 = vector.load %arg1[%c0_78, %c0_79, %c0_80, %c0_81] : memref<1x16x16x4xf32, #tpu.memory_space<vmem>>, vector<1x16x16x4xf32>
    %81 = vector.shape_cast %80 : vector<1x16x16x4xf32> to vector<16x16x4xf32>
    %82 = arith.addf %79, %81 : vector<16x16x4xf32>
    %cst_82 = arith.constant 0.000000e+00 : f32
    %83 = vector.broadcast %cst_82 : f32 to vector<16x16x4xf32>
    %84 = arith.maximumf %82, %83 : vector<16x16x4xf32>
    %c0_83 = arith.constant 0 : index
    %c0_84 = arith.constant 0 : index
    %c0_85 = arith.constant 0 : index
    %c0_86 = arith.constant 0 : index
    %85 = vector.load %arg8[%c0_83, %c0_84, %c0_85, %c0_86] : memref<1x16x16x4xf32, #tpu.memory_space<vmem>>, vector<1x16x16x4xf32>
    %86 = vector.shape_cast %85 : vector<1x16x16x4xf32> to vector<16x16x4xf32>
    %87 = vector.shape_cast %84 : vector<16x16x4xf32> to vector<1x16x16x4xf32>
    tpu.vector_store %arg8[%c0_83, %c0_84, %c0_85, %c0_86], %87 {strides = array<i32>} : memref<1x16x16x4xf32, #tpu.memory_space<vmem>>, vector<1x16x16x4xf32>,
    return
  }
  func.func @transform_0(%arg0: i32) -> (i32, i32, i32, i32) {
    %c0_i32 = arith.constant 0 : i32
    %c0_i32_0 = arith.constant 0 : i32
    %c0_i32_1 = arith.constant 0 : i32
    %c0_i32_2 = arith.constant 0 : i32
    return %arg0, %c0_i32, %c0_i32_0, %c0_i32_1 : i32, i32, i32, i32
  }
  func.func @transform_1(%arg0: i32) -> (i32, i32, i32) {
    %c0_i32 = arith.constant 0 : i32
    %c0_i32_0 = arith.constant 0 : i32
    %c0_i32_1 = arith.constant 0 : i32
    %c0_i32_2 = arith.constant 0 : i32
    return %c0_i32, %c0_i32_0, %c0_i32_1 : i32, i32, i32
  }
  func.func @transform_2(%arg0: i32) -> (i32, i32, i32) {
    %c0_i32 = arith.constant 0 : i32
    %c0_i32_0 = arith.constant 0 : i32
    %c0_i32_1 = arith.constant 0 : i32
    %c0_i32_2 = arith.constant 0 : i32
    return %c0_i32, %c0_i32_0, %c0_i32_1 : i32, i32, i32
  }
  func.func @transform_3(%arg0: i32) -> (i32, i32, i32) {
    %c0_i32 = arith.constant 0 : i32
    %c0_i32_0 = arith.constant 0 : i32
    %c0_i32_1 = arith.constant 0 : i32
    %c0_i32_2 = arith.constant 0 : i32
    return %c0_i32, %c0_i32_0, %c0_i32_1 : i32, i32, i32
  }
  func.func @transform_4(%arg0: i32) -> (i32, i32, i32) {
    %c0_i32 = arith.constant 0 : i32
    %c0_i32_0 = arith.constant 0 : i32
    %c0_i32_1 = arith.constant 0 : i32
    %c0_i32_2 = arith.constant 0 : i32
    return %c0_i32, %c0_i32_0, %c0_i32_1 : i32, i32, i32
  }
  func.func @transform_5(%arg0: i32) -> (i32, i32, i32) {
    %c0_i32 = arith.constant 0 : i32
    %c0_i32_0 = arith.constant 0 : i32
    %c0_i32_1 = arith.constant 0 : i32
    %c0_i32_2 = arith.constant 0 : i32
    return %c0_i32, %c0_i32_0, %c0_i32_1 : i32, i32, i32
  }
  func.func @transform_6(%arg0: i32) -> (i32, i32, i32) {
    %c0_i32 = arith.constant 0 : i32
    %c0_i32_0 = arith.constant 0 : i32
    %c0_i32_1 = arith.constant 0 : i32
    %c0_i32_2 = arith.constant 0 : i32
    return %c0_i32, %c0_i32_0, %c0_i32_1 : i32, i32, i32
  }
  func.func @transform_7(%arg0: i32) -> (i32, i32, i32, i32) {
    %c0_i32 = arith.constant 0 : i32
    %c0_i32_0 = arith.constant 0 : i32
    %c0_i32_1 = arith.constant 0 : i32
    %c0_i32_2 = arith.constant 0 : i32
    return %arg0, %c0_i32, %c0_i32_0, %c0_i32_1 : i32, i32, i32, i32
  }
}

</mosaic_0001>

<llo_original>
// kernel: attn_basic_block_nhwc.1
$region0: #{attn_basic_block_nhwc.1}
  #allocation0 [shape = 'u32[]', space=smem, size = 0x4, offset = 0x4, fixed_abs, tag = 'smem constant byte address 0x4 - core index']
  #allocation1 [shape = 'u32[144,128]{1,0:T(1,128)}', space=vmem, size = 0x12000, scoped, tag = 'internal scratch']
  #allocation2 [shape = 'bf16[18,32,4]{2,1,0:T(16,128)(2,1)}', space=vmem, size = 0x24000, scoped, tag = 'scratch operand']
  #allocation3 [shape = 'bf16[18,32,4]{2,1,0:T(16,128)(2,1)}', space=vmem, size = 0x24000, scoped, tag = 'scratch operand']
  %s0 = inlined_call_operand.vmem [shape: f32[2,16,16,4], index: 0, kind: input, shape index: {}]
  %s1 = inlined_call_operand.vmem [shape: bf16[3,12,4], index: 1, kind: input, shape index: {}]
  %s2 = inlined_call_operand.vmem [shape: f32[1,1,4], index: 2, kind: input, shape index: {}]
  %s3 = inlined_call_operand.vmem [shape: f32[1,1,4], index: 3, kind: input, shape index: {}]
  %s4 = inlined_call_operand.vmem [shape: bf16[3,12,4], index: 4, kind: input, shape index: {}]
  %s5 = inlined_call_operand.vmem [shape: f32[1,1,4], index: 5, kind: input, shape index: {}]
  %s6 = inlined_call_operand.vmem [shape: f32[1,1,4], index: 6, kind: input, shape index: {}]
  %s7 = inlined_call_operand.vmem [shape: f32[2,16,16,4], index: 7, kind: output, shape index: {}]
  %s8 = sld [smem:[#allocation0]]
  $region61: #{attn_basic_block_nhwc.1} parent=0
    _
  %s10 = ssub.s32 1, %s8
  %s11 = scalar_select 0, %s10, %s8
  loop: start=0, step=1, limit=4
  $region2: #{attn_basic_block_nhwc.1} parent=0 // loop_pre_header
    _
  $region3: #{attn_basic_block_nhwc.1} parent=0 // loop_header
    %s13 = sphi 0, %s17
    %p14 = scmp.ge.s32.totalorder %s13, 4
    %s23 = sphi 0, %s25
    %s26 = sphi 0, %s23
    %s27 = sphi 0, %s26
    %s43 = sphi 0, %s27
    %s47 = sphi 0, %s47
    %s49 = sphi 0, %s47
    %s50 = sphi 0, %s49
    %s64 = sphi 0, %s50
    %s68 = sphi 0, %s68
    %s70 = sphi 0, %s68
    %s71 = sphi 0, %s70
    %s85 = sphi 0, %s71
    %s89 = sphi 0, %s89
    %s91 = sphi 0, %s89
    %s92 = sphi 0, %s91
    %s106 = sphi 0, %s92
    %s110 = sphi 0, %s110
    %s112 = sphi 0, %s110
    %s113 = sphi 0, %s112
    %s127 = sphi 0, %s113
    %s131 = sphi 0, %s131
    %s133 = sphi 0, %s131
    %s134 = sphi 0, %s133
    %s148 = sphi 0, %s134
    %s152 = sphi 0, %s152
    %s154 = sphi 0, %s152
    %s155 = sphi 0, %s154
    %s169 = sphi 0, %s155
    %s175 = sphi 0, %s177
    %s178 = sphi 0, %s175
    %s179 = sphi 0, %s178
    %s195 = sphi 0, %s179
  $region4: #{attn_basic_block_nhwc.1} parent=0 // loop_header_branch
    %16 = sbr.rel (%p14) target = $region8
  $region5: #{attn_basic_block_nhwc.1} parent=0 // loop_body
    %s18 = ssub.s32 %s13, 1
    %s19 = ssub.s32 %s13, 2
    %s20 = sadd.s32 %s13, 1
    %s21 = ssub.s32 %s13, %s20
    %p22 = scmp.eq.s32.totalorder %s21, 0
    %s24 = sadd.s32 %s23, 1
    %s25 = scalar_select %p22, %s23, %s24
    %p28 = pneg %p22
    %p29 = scmp.eq.s32.totalorder %s13, 1
    %p30 = por %p28, %p29
    %p31 = scmp.ne.s32.totalorder %s23, %s26
    %p32 = scmp.eq.s32.totalorder %s13, 0
    %p33 = por %p31, %p32
    %p34 = scmp.ne.s32.totalorder %s23, %s26
    %p35 = scmp.eq.s32.totalorder %s18, 1
    %p36 = por %p34, %p35
    %p37 = scmp.ne.s32.totalorder %s26, %s27
    %p38 = scmp.eq.s32.totalorder %s18, 0
    %p39 = por %p37, %p38
    %p40 = scmp.ne.s32.totalorder %s26, %s27
    %p41 = scmp.eq.s32.totalorder %s19, 1
    %p42 = por %p40, %p41
    %p44 = scmp.ne.s32.totalorder %s27, %s43
    %p45 = scmp.eq.s32.totalorder %s19, 0
    %p46 = por %p44, %p45
    %s48 = sadd.s32 %s47, 1
    %p51 = scmp.eq.s32.totalorder %s13, 1
    %p52 = scmp.ne.s32.totalorder %s47, %s49
    %p53 = scmp.eq.s32.totalorder %s13, 0
    %p54 = por %p52, %p53
    %p55 = scmp.ne.s32.totalorder %s47, %s49
    %p56 = scmp.eq.s32.totalorder %s18, 1
    %p57 = por %p55, %p56
    %p58 = scmp.ne.s32.totalorder %s49, %s50
    %p59 = scmp.eq.s32.totalorder %s18, 0
    %p60 = por %p58, %p59
    %p61 = scmp.ne.s32.totalorder %s49, %s50
    %p62 = scmp.eq.s32.totalorder %s19, 1
    %p63 = por %p61, %p62
    %p65 = scmp.ne.s32.totalorder %s50, %s64
    %p66 = scmp.eq.s32.totalorder %s19, 0
    %p67 = por %p65, %p66
    %s69 = sadd.s32 %s68, 1
    %p72 = scmp.eq.s32.totalorder %s13, 1
    %p73 = scmp.ne.s32.totalorder %s68, %s70
    %p74 = scmp.eq.s32.totalorder %s13, 0
    %p75 = por %p73, %p74
    %p76 = scmp.ne.s32.totalorder %s68, %s70
    %p77 = scmp.eq.s32.totalorder %s18, 1
    %p78 = por %p76, %p77
    %p79 = scmp.ne.s32.totalorder %s70, %s71
    %p80 = scmp.eq.s32.totalorder %s18, 0
    %p81 = por %p79, %p80
    %p82 = scmp.ne.s32.totalorder %s70, %s71
    %p83 = scmp.eq.s32.totalorder %s19, 1
    %p84 = por %p82, %p83
    %p86 = scmp.ne.s32.totalorder %s71, %s85
    %p87 = scmp.eq.s32.totalorder %s19, 0
    %p88 = por %p86, %p87
    %s90 = sadd.s32 %s89, 1
    %p93 = scmp.eq.s32.totalorder %s13, 1
    %p94 = scmp.ne.s32.totalorder %s89, %s91
    %p95 = scmp.eq.s32.totalorder %s13, 0
    %p96 = por %p94, %p95
    %p97 = scmp.ne.s32.totalorder %s89, %s91
    %p98 = scmp.eq.s32.totalorder %s18, 1
    %p99 = por %p97, %p98
    %p100 = scmp.ne.s32.totalorder %s91, %s92
    %p101 = scmp.eq.s32.totalorder %s18, 0
    %p102 = por %p100, %p101
    %p103 = scmp.ne.s32.totalorder %s91, %s92
    %p104 = scmp.eq.s32.totalorder %s19, 1
    %p105 = por %p103, %p104
    %p107 = scmp.ne.s32.totalorder %s92, %s106
    %p108 = scmp.eq.s32.totalorder %s19, 0
    %p109 = por %p107, %p108
    %s111 = sadd.s32 %s110, 1
    %p114 = scmp.eq.s32.totalorder %s13, 1
    %p115 = scmp.ne.s32.totalorder %s110, %s112
    %p116 = scmp.eq.s32.totalorder %s13, 0
    %p117 = por %p115, %p116
    %p118 = scmp.ne.s32.totalorder %s110, %s112
    %p119 = scmp.eq.s32.totalorder %s18, 1
    %p120 = por %p118, %p119
    %p121 = scmp.ne.s32.totalorder %s112, %s113
    %p122 = scmp.eq.s32.totalorder %s18, 0
    %p123 = por %p121, %p122
    %p124 = scmp.ne.s32.totalorder %s112, %s113
    %p125 = scmp.eq.s32.totalorder %s19, 1
    %p126 = por %p124, %p125
    %p128 = scmp.ne.s32.totalorder %s113, %s127
    %p129 = scmp.eq.s32.totalorder %s19, 0
    %p130 = por %p128, %p129
    %s132 = sadd.s32 %s131, 1
    %p135 = scmp.eq.s32.totalorder %s13, 1
    %p136 = scmp.ne.s32.totalorder %s131, %s133
    %p137 = scmp.eq.s32.totalorder %s13, 0
    %p138 = por %p136, %p137
    %p139 = scmp.ne.s32.totalorder %s131, %s133
    %p140 = scmp.eq.s32.totalorder %s18, 1
    %p141 = por %p139, %p140
    %p142 = scmp.ne.s32.totalorder %s133, %s134
    %p143 = scmp.eq.s32.totalorder %s18, 0
    %p144 = por %p142, %p143
    %p145 = scmp.ne.s32.totalorder %s133, %s134
    %p146 = scmp.eq.s32.totalorder %s19, 1
    %p147 = por %p145, %p146
    %p149 = scmp.ne.s32.totalorder %s134, %s148
    %p150 = scmp.eq.s32.totalorder %s19, 0
    %p151 = por %p149, %p150
    %s153 = sadd.s32 %s152, 1
    %p156 = scmp.eq.s32.totalorder %s13, 1
    %p157 = scmp.ne.s32.totalorder %s152, %s154
    %p158 = scmp.eq.s32.totalorder %s13, 0
    %p159 = por %p157, %p158
    %p160 = scmp.ne.s32.totalorder %s152, %s154
    %p161 = scmp.eq.s32.totalorder %s18, 1
    %p162 = por %p160, %p161
    %p163 = scmp.ne.s32.totalorder %s154, %s155
    %p164 = scmp.eq.s32.totalorder %s18, 0
    %p165 = por %p163, %p164
    %p166 = scmp.ne.s32.totalorder %s154, %s155
    %p167 = scmp.eq.s32.totalorder %s19, 1
    %p168 = por %p166, %p167
    %p170 = scmp.ne.s32.totalorder %s155, %s169
    %p171 = scmp.eq.s32.totalorder %s19, 0
    %p172 = por %p170, %p171
    %s173 = ssub.s32 %s13, %s20
    %p174 = scmp.eq.s32.totalorder %s173, 0
    %s176 = sadd.s32 %s175, 1
    %s177 = scalar_select %p174, %s175, %s176
    %p180 = pneg %p174
    %p181 = scmp.eq.s32.totalorder %s13, 1
    %p182 = por %p180, %p181
    %p183 = scmp.ne.s32.totalorder %s175, %s178
    %p184 = scmp.eq.s32.totalorder %s13, 0
    %p185 = por %p183, %p184
    %p186 = scmp.ne.s32.totalorder %s175, %s178
    %p187 = scmp.eq.s32.totalorder %s18, 1
    %p188 = por %p186, %p187
    %p189 = scmp.ne.s32.totalorder %s178, %s179
    %p190 = scmp.eq.s32.totalorder %s18, 0
    %p191 = por %p189, %p190
    %p192 = scmp.ne.s32.totalorder %s178, %s179
    %p193 = scmp.eq.s32.totalorder %s19, 1
    %p194 = por %p192, %p193
    %p196 = scmp.ne.s32.totalorder %s179, %s195
    %p197 = scmp.eq.s32.totalorder %s19, 0
    %p198 = por %p196, %p197
    %p199 = scmp.le.s32.totalorder 1, %s13
    %p200 = scmp.lt.s32.totalorder %s13, 3
    %p201 = pnand %p199, %p200
    %p202 = pneg %p201
    // Predicated region
    $region9: #{attn_basic_block_nhwc.1} parent=5 // pred_check
      _
    $region10: #{attn_basic_block_nhwc.1} parent=5 // pred_check_branch
      %204 = sbr.rel (%p201) target = $region12
    $region11: #{attn_basic_block_nhwc.1} parent=5 // pred_region
      %s205 = ssub.s32 %s13, 1
      // Predicated region
      $region13: #{attn_basic_block_nhwc.1} parent=11 // pred_check
        %p206 = pneg %p60
      $region14: #{attn_basic_block_nhwc.1} parent=11 // pred_check_branch
        %208 = sbr.rel (%p206) target = $region16
      $region15: #{attn_basic_block_nhwc.1} parent=11 // pred_region
        _
      $region16: #{attn_basic_block_nhwc.1} parent=11 // pred_fallthru
        _
      // Predicated region
      $region17: #{attn_basic_block_nhwc.1} parent=11 // pred_check
        %p209 = pneg %p81
      $region18: #{attn_basic_block_nhwc.1} parent=11 // pred_check_branch
        %211 = sbr.rel (%p209) target = $region20
      $region19: #{attn_basic_block_nhwc.1} parent=11 // pred_region
        _
      $region20: #{attn_basic_block_nhwc.1} parent=11 // pred_fallthru
        _
      // Predicated region
      $region21: #{attn_basic_block_nhwc.1} parent=11 // pred_check
        %p212 = pneg %p102
      $region22: #{attn_basic_block_nhwc.1} parent=11 // pred_check_branch
        %214 = sbr.rel (%p212) target = $region24
      $region23: #{attn_basic_block_nhwc.1} parent=11 // pred_region
        _
      $region24: #{attn_basic_block_nhwc.1} parent=11 // pred_fallthru
        _
      // Predicated region
      $region25: #{attn_basic_block_nhwc.1} parent=11 // pred_check
        %p215 = pneg %p123
      $region26: #{attn_basic_block_nhwc.1} parent=11 // pred_check_branch
        %217 = sbr.rel (%p215) target = $region28
      $region27: #{attn_basic_block_nhwc.1} parent=11 // pred_region
        _
      $region28: #{attn_basic_block_nhwc.1} parent=11 // pred_fallthru
        _
      // Predicated region
      $region29: #{attn_basic_block_nhwc.1} parent=11 // pred_check
        %p218 = pneg %p144
      $region30: #{attn_basic_block_nhwc.1} parent=11 // pred_check_branch
        %220 = sbr.rel (%p218) target = $region32
      $region31: #{attn_basic_block_nhwc.1} parent=11 // pred_region
        _
      $region32: #{attn_basic_block_nhwc.1} parent=11 // pred_fallthru
        _
      // Predicated region
      $region33: #{attn_basic_block_nhwc.1} parent=11 // pred_check
        %p221 = pneg %p165
      $region34: #{attn_basic_block_nhwc.1} parent=11 // pred_check_branch
        %223 = sbr.rel (%p221) target = $region36
      $region35: #{attn_basic_block_nhwc.1} parent=11 // pred_region
        _
      $region36: #{attn_basic_block_nhwc.1} parent=11 // pred_fallthru
        _
    $region12: #{attn_basic_block_nhwc.1} parent=5 // pred_fallthru
      _
    %p224 = scmp.lt.s32.totalorder %s13, 2
    // Predicated region
    $region37: #{attn_basic_block_nhwc.1} parent=5 // pred_check
      %p225 = pneg %p224
    $region38: #{attn_basic_block_nhwc.1} parent=5 // pred_check_branch
      %227 = sbr.rel (%p225) target = $region40
    $region39: #{attn_basic_block_nhwc.1} parent=5 // pred_region
      // Predicated region
      $region41: #{attn_basic_block_nhwc.1} parent=39 // pred_check
        %p228 = pneg %p33
      $region42: #{attn_basic_block_nhwc.1} parent=39 // pred_check_branch
        %230 = sbr.rel (%p228) target = $region44
      $region43: #{attn_basic_block_nhwc.1} parent=39 // pred_region
        %p231 = scmp.lt.s32.totalorder %s13, 1
        %s232 = scalar_select %p231, %s13, 1
        %s233 = smul.addr %s232, 32
        %s234 = smul.addr %s233, 8
        %s235 = scalar_lea.vmem %s0, %s234
      $region44: #{attn_basic_block_nhwc.1} parent=39 // pred_fallthru
        _
    $region40: #{attn_basic_block_nhwc.1} parent=5 // pred_fallthru
      _
    %p236 = scmp.le.s32.totalorder 1, %s13
    %p237 = scmp.lt.s32.totalorder %s13, 3
    %p238 = pnand %p236, %p237
    %p239 = pneg %p238
    // Predicated region
    $region45: #{attn_basic_block_nhwc.1} parent=5 // pred_check
      _
    $region46: #{attn_basic_block_nhwc.1} parent=5 // pred_check_branch
      %241 = sbr.rel (%p238) target = $region48
    $region47: #{attn_basic_block_nhwc.1} parent=5 // pred_region
      %s242 = ssub.s32 %s13, 1
      %p243 = scmp.lt.s32.totalorder %s18, 1
      %s244 = scalar_select %p243, %s18, 1
      %s245 = smul.addr %s244, 32
      %s246 = smul.addr %s245, 8
      %s247 = scalar_lea.vmem %s0, %s246
      %p248 = pneg %p39
      %p249 = pneg %p36
      %p250 = pneg %p60
      %p251 = pneg %p57
      %p252 = pneg %p81
      %p253 = pneg %p78
      %p254 = pneg %p102
      %p255 = pneg %p99
      %p256 = pneg %p123
      %p257 = pneg %p120
      %p258 = pneg %p144
      %p259 = pneg %p141
      %p260 = pneg %p165
      %p261 = pneg %p162
      %p262 = pneg %p191
      %p263 = pneg %p188
      %p264 = scmp.lt.s32.totalorder %s18, 1
      %s265 = scalar_select %p264, %s18, 1
      %s266 = smul.addr %s265, 32
      %s267 = smul.addr %s266, 8
      %s268 = scalar_lea.vmem %s7, %s267
      %p269 = scmp.lt.s32.totalorder %s18, 1
      %s270 = scalar_select %p269, %s18, 1
      %s271 = smul.addr %s270, 32
      %s272 = smul.addr %s271, 8
      %s273 = scalar_lea.vmem %s0, %s272
      %p274 = scmp.lt.s32.totalorder %s18, 1
      %s275 = scalar_select %p274, %s18, 1
      %s276 = smul.addr %s275, 32
      %s277 = smul.addr %s276, 8
      %s278 = scalar_lea.vmem %s7, %s277
      %vm280 = vcmask 31744
      %281 = vst.msk [vmem:[#allocation2] sm:$0xff] %vm280, 0
      %282 = vst.msk [vmem:[#allocation2 + $0x8] sm:$0xff] %vm280, 0
      %s283 = scalar_lea.vmem [#allocation2], 272
      %284 = vst.msk [vmem:[%s283] sm:$0xff] %vm280, 0
      %285 = vst.msk [vmem:[%s283 + $0x8] sm:$0xff] %vm280, 0
      %vm286 = vcmask 24576
      %vm287 = vsmask.f32 256
      %vm288 = vmand %vm286, %vm287
      %v289 = vld [vmem:[#allocation2] sm:$0x1]
      %v290 = vsel %vm288, 0, %v289
      %291 = vst [vmem:[#allocation2] sm:$0x1] %v290
      %v292 = vld [vmem:[#allocation2 + $0x10] sm:$0x1]
      %v293 = vsel %vm288, 0, %v292
      %294 = vst [vmem:[#allocation2 + $0x10] sm:$0x1] %v293
      %v295 = vld [vmem:[#allocation2 + $0x20] sm:$0x1]
      %v296 = vsel %vm288, 0, %v295
      %297 = vst [vmem:[#allocation2 + $0x20] sm:$0x1] %v296
      %v298 = vld [vmem:[#allocation2 + $0x30] sm:$0x1]
      %v299 = vsel %vm288, 0, %v298
      %300 = vst [vmem:[#allocation2 + $0x30] sm:$0x1] %v299
      %v301 = vld [vmem:[#allocation2 + $0x40] sm:$0x1]
      %v302 = vsel %vm288, 0, %v301
      %303 = vst [vmem:[#allocation2 + $0x40] sm:$0x1] %v302
      %v304 = vld [vmem:[#allocation2 + $0x50] sm:$0x1]
      %v305 = vsel %vm288, 0, %v304
      %306 = vst [vmem:[#allocation2 + $0x50] sm:$0x1] %v305
      %v307 = vld [vmem:[#allocation2 + $0x60] sm:$0x1]
      %v308 = vsel %vm288, 0, %v307
      %309 = vst [vmem:[#allocation2 + $0x60] sm:$0x1] %v308
      %v310 = vld [vmem:[#allocation2 + $0x70] sm:$0x1]
      %v311 = vsel %vm288, 0, %v310
      %312 = vst [vmem:[#allocation2 + $0x70] sm:$0x1] %v311
      %v313 = vld [vmem:[#allocation2 + $0x80] sm:$0x1]
      %v314 = vsel %vm288, 0, %v313
      %315 = vst [vmem:[#allocation2 + $0x80] sm:$0x1] %v314
      %v316 = vld [vmem:[#allocation2 + $0x90] sm:$0x1]
      %v317 = vsel %vm288, 0, %v316
      %318 = vst [vmem:[#allocation2 + $0x90] sm:$0x1] %v317
      %v319 = vld [vmem:[#allocation2 + $0xa0] sm:$0x1]
      %v320 = vsel %vm288, 0, %v319
      %321 = vst [vmem:[#allocation2 + $0xa0] sm:$0x1] %v320
      %v322 = vld [vmem:[#allocation2 + $0xb0] sm:$0x1]
      %v323 = vsel %vm288, 0, %v322
      %324 = vst [vmem:[#allocation2 + $0xb0] sm:$0x1] %v323
      %v325 = vld [vmem:[#allocation2 + $0xc0] sm:$0x1]
      %v326 = vsel %vm288, 0, %v325
      %327 = vst [vmem:[#allocation2 + $0xc0] sm:$0x1] %v326
      %v328 = vld [vmem:[#allocation2 + $0xd0] sm:$0x1]
      %v329 = vsel %vm288, 0, %v328
      %330 = vst [vmem:[#allocation2 + $0xd0] sm:$0x1] %v329
      %v331 = vld [vmem:[#allocation2 + $0xe0] sm:$0x1]
      %v332 = vsel %vm288, 0, %v331
      %333 = vst [vmem:[#allocation2 + $0xe0] sm:$0x1] %v332
      %v334 = vld [vmem:[#allocation2 + $0xf0] sm:$0x1]
      %v335 = vsel %vm288, 0, %v334
      %336 = vst [vmem:[#allocation2 + $0xf0] sm:$0x1] %v335
      %v337 = vld [vmem:[#allocation2 + $0x100] sm:$0x1]
      %v338 = vsel %vm288, 0, %v337
      %339 = vst [vmem:[#allocation2 + $0x100] sm:$0x1] %v338
      %v340 = vld [vmem:[#allocation2 + $0x110] sm:$0x1]
      %v341 = vsel %vm288, 0, %v340
      %342 = vst [vmem:[#allocation2 + $0x110] sm:$0x1] %v341
      %vm343 = vcmask 31744
      %vm344 = vsmask.f32 7938
      %vm345 = vmand %vm343, %vm344
      %v346 = vld [vmem:[#allocation2 + $0x8] sm:$0xff]
      %v347 = vsel %vm345, 0, %v346
      %348 = vst [vmem:[#allocation2 + $0x8] sm:$0xff] %v347
      %v349 = vld [vmem:[#allocation2 + $0x18] sm:$0xff]
      %v350 = vsel %vm345, 0, %v349
      %351 = vst [vmem:[#allocation2 + $0x18] sm:$0xff] %v350
      %v352 = vld [vmem:[#allocation2 + $0x28] sm:$0xff]
      %v353 = vsel %vm345, 0, %v352
      %354 = vst [vmem:[#allocation2 + $0x28] sm:$0xff] %v353
      %v355 = vld [vmem:[#allocation2 + $0x38] sm:$0xff]
      %v356 = vsel %vm345, 0, %v355
      %357 = vst [vmem:[#allocation2 + $0x38] sm:$0xff] %v356
      %v358 = vld [vmem:[#allocation2 + $0x48] sm:$0xff]
      %v359 = vsel %vm345, 0, %v358
      %360 = vst [vmem:[#allocation2 + $0x48] sm:$0xff] %v359
      %v361 = vld [vmem:[#allocation2 + $0x58] sm:$0xff]
      %v362 = vsel %vm345, 0, %v361
      %363 = vst [vmem:[#allocation2 + $0x58] sm:$0xff] %v362
      %v364 = vld [vmem:[#allocation2 + $0x68] sm:$0xff]
      %v365 = vsel %vm345, 0, %v364
      %366 = vst [vmem:[#allocation2 + $0x68] sm:$0xff] %v365
      %v367 = vld [vmem:[#allocation2 + $0x78] sm:$0xff]
      %v368 = vsel %vm345, 0, %v367
      %369 = vst [vmem:[#allocation2 + $0x78] sm:$0xff] %v368
      %v370 = vld [vmem:[#allocation2 + $0x88] sm:$0xff]
      %v371 = vsel %vm345, 0, %v370
      %372 = vst [vmem:[#allocation2 + $0x88] sm:$0xff] %v371
      %v373 = vld [vmem:[#allocation2 + $0x98] sm:$0xff]
      %v374 = vsel %vm345, 0, %v373
      %375 = vst [vmem:[#allocation2 + $0x98] sm:$0xff] %v374
      %v376 = vld [vmem:[#allocation2 + $0xa8] sm:$0xff]
      %v377 = vsel %vm345, 0, %v376
      %378 = vst [vmem:[#allocation2 + $0xa8] sm:$0xff] %v377
      %v379 = vld [vmem:[#allocation2 + $0xb8] sm:$0xff]
      %v380 = vsel %vm345, 0, %v379
      %381 = vst [vmem:[#allocation2 + $0xb8] sm:$0xff] %v380
      %v382 = vld [vmem:[#allocation2 + $0xc8] sm:$0xff]
      %v383 = vsel %vm345, 0, %v382
      %384 = vst [vmem:[#allocation2 + $0xc8] sm:$0xff] %v383
      %v385 = vld [vmem:[#allocation2 + $0xd8] sm:$0xff]
      %v386 = vsel %vm345, 0, %v385
      %387 = vst [vmem:[#allocation2 + $0xd8] sm:$0xff] %v386
      %v388 = vld [vmem:[#allocation2 + $0xe8] sm:$0xff]
      %v389 = vsel %vm345, 0, %v388
      %390 = vst [vmem:[#allocation2 + $0xe8] sm:$0xff] %v389
      %v391 = vld [vmem:[#allocation2 + $0xf8] sm:$0xff]
      %v392 = vsel %vm345, 0, %v391
      %393 = vst [vmem:[#allocation2 + $0xf8] sm:$0xff] %v392
      %v394 = vld [vmem:[#allocation2 + $0x108] sm:$0xff]
      %v395 = vsel %vm345, 0, %v394
      %396 = vst [vmem:[#allocation2 + $0x108] sm:$0xff] %v395
      %v397 = vld [vmem:[#allocation2 + $0x118] sm:$0xff]
      %v398 = vsel %vm345, 0, %v397
      %399 = vst [vmem:[#allocation2 + $0x118] sm:$0xff] %v398
      %400 = vst.msk [vmem:[#allocation3] sm:$0xff] %vm280, 0
      %401 = vst.msk [vmem:[#allocation3 + $0x8] sm:$0xff] %vm280, 0
      %s402 = scalar_lea.vmem [#allocation3], 272
      %403 = vst.msk [vmem:[%s402] sm:$0xff] %vm280, 0
      %404 = vst.msk [vmem:[%s402 + $0x8] sm:$0xff] %vm280, 0
      %v405 = vld [vmem:[#allocation3] sm:$0x1]
      %v406 = vsel %vm288, 0, %v405
      %407 = vst [vmem:[#allocation3] sm:$0x1] %v406
      %v408 = vld [vmem:[#allocation3 + $0x10] sm:$0x1]
      %v409 = vsel %vm288, 0, %v408
      %410 = vst [vmem:[#allocation3 + $0x10] sm:$0x1] %v409
      %v411 = vld [vmem:[#allocation3 + $0x20] sm:$0x1]
      %v412 = vsel %vm288, 0, %v411
      %413 = vst [vmem:[#allocation3 + $0x20] sm:$0x1] %v412
      %v414 = vld [vmem:[#allocation3 + $0x30] sm:$0x1]
      %v415 = vsel %vm288, 0, %v414
      %416 = vst [vmem:[#allocation3 + $0x30] sm:$0x1] %v415
      %v417 = vld [vmem:[#allocation3 + $0x40] sm:$0x1]
      %v418 = vsel %vm288, 0, %v417
      %419 = vst [vmem:[#allocation3 + $0x40] sm:$0x1] %v418
      %v420 = vld [vmem:[#allocation3 + $0x50] sm:$0x1]
      %v421 = vsel %vm288, 0, %v420
      %422 = vst [vmem:[#allocation3 + $0x50] sm:$0x1] %v421
      %v423 = vld [vmem:[#allocation3 + $0x60] sm:$0x1]
      %v424 = vsel %vm288, 0, %v423
      %425 = vst [vmem:[#allocation3 + $0x60] sm:$0x1] %v424
      %v426 = vld [vmem:[#allocation3 + $0x70] sm:$0x1]
      %v427 = vsel %vm288, 0, %v426
      %428 = vst [vmem:[#allocation3 + $0x70] sm:$0x1] %v427
      %v429 = vld [vmem:[#allocation3 + $0x80] sm:$0x1]
      %v430 = vsel %vm288, 0, %v429
      %431 = vst [vmem:[#allocation3 + $0x80] sm:$0x1] %v430
      %v432 = vld [vmem:[#allocation3 + $0x90] sm:$0x1]
      %v433 = vsel %vm288, 0, %v432
      %434 = vst [vmem:[#allocation3 + $0x90] sm:$0x1] %v433
      %v435 = vld [vmem:[#allocation3 + $0xa0] sm:$0x1]
      %v436 = vsel %vm288, 0, %v435
      %437 = vst [vmem:[#allocation3 + $0xa0] sm:$0x1] %v436
      %v438 = vld [vmem:[#allocation3 + $0xb0] sm:$0x1]
      %v439 = vsel %vm288, 0, %v438
      %440 = vst [vmem:[#allocation3 + $0xb0] sm:$0x1] %v439
      %v441 = vld [vmem:[#allocation3 + $0xc0] sm:$0x1]
      %v442 = vsel %vm288, 0, %v441
      %443 = vst [vmem:[#allocation3 + $0xc0] sm:$0x1] %v442
      %v444 = vld [vmem:[#allocation3 + $0xd0] sm:$0x1]
      %v445 = vsel %vm288, 0, %v444
      %446 = vst [vmem:[#allocation3 + $0xd0] sm:$0x1] %v445
      %v447 = vld [vmem:[#allocation3 + $0xe0] sm:$0x1]
      %v448 = vsel %vm288, 0, %v447
      %449 = vst [vmem:[#allocation3 + $0xe0] sm:$0x1] %v448
      %v450 = vld [vmem:[#allocation3 + $0xf0] sm:$0x1]
      %v451 = vsel %vm288, 0, %v450
      %452 = vst [vmem:[#allocation3 + $0xf0] sm:$0x1] %v451
      %v453 = vld [vmem:[#allocation3 + $0x100] sm:$0x1]
      %v454 = vsel %vm288, 0, %v453
      %455 = vst [vmem:[#allocation3 + $0x100] sm:$0x1] %v454
      %v456 = vld [vmem:[#allocation3 + $0x110] sm:$0x1]
      %v457 = vsel %vm288, 0, %v456
      %458 = vst [vmem:[#allocation3 + $0x110] sm:$0x1] %v457
      %v459 = vld [vmem:[#allocation3 + $0x8] sm:$0xff]
      %v460 = vsel %vm345, 0, %v459
      %461 = vst [vmem:[#allocation3 + $0x8] sm:$0xff] %v460
      %v462 = vld [vmem:[#allocation3 + $0x18] sm:$0xff]
      %v463 = vsel %vm345, 0, %v462
      %464 = vst [vmem:[#allocation3 + $0x18] sm:$0xff] %v463
      %v465 = vld [vmem:[#allocation3 + $0x28] sm:$0xff]
      %v466 = vsel %vm345, 0, %v465
      %467 = vst [vmem:[#allocation3 + $0x28] sm:$0xff] %v466
      %v468 = vld [vmem:[#allocation3 + $0x38] sm:$0xff]
      %v469 = vsel %vm345, 0, %v468
      %470 = vst [vmem:[#allocation3 + $0x38] sm:$0xff] %v469
      %v471 = vld [vmem:[#allocation3 + $0x48] sm:$0xff]
      %v472 = vsel %vm345, 0, %v471
      %473 = vst [vmem:[#allocation3 + $0x48] sm:$0xff] %v472
      %v474 = vld [vmem:[#allocation3 + $0x58] sm:$0xff]
      %v475 = vsel %vm345, 0, %v474
      %476 = vst [vmem:[#allocation3 + $0x58] sm:$0xff] %v475
      %v477 = vld [vmem:[#allocation3 + $0x68] sm:$0xff]
      %v478 = vsel %vm345, 0, %v477
      %479 = vst [vmem:[#allocation3 + $0x68] sm:$0xff] %v478
      %v480 = vld [vmem:[#allocation3 + $0x78] sm:$0xff]
      %v481 = vsel %vm345, 0, %v480
      %482 = vst [vmem:[#allocation3 + $0x78] sm:$0xff] %v481
      %v483 = vld [vmem:[#allocation3 + $0x88] sm:$0xff]
      %v484 = vsel %vm345, 0, %v483
      %485 = vst [vmem:[#allocation3 + $0x88] sm:$0xff] %v484
      %v486 = vld [vmem:[#allocation3 + $0x98] sm:$0xff]
      %v487 = vsel %vm345, 0, %v486
      %488 = vst [vmem:[#allocation3 + $0x98] sm:$0xff] %v487
      %v489 = vld [vmem:[#allocation3 + $0xa8] sm:$0xff]
      %v490 = vsel %vm345, 0, %v489
      %491 = vst [vmem:[#allocation3 + $0xa8] sm:$0xff] %v490
      %v492 = vld [vmem:[#allocation3 + $0xb8] sm:$0xff]
      %v493 = vsel %vm345, 0, %v492
      %494 = vst [vmem:[#allocation3 + $0xb8] sm:$0xff] %v493
      %v495 = vld [vmem:[#allocation3 + $0xc8] sm:$0xff]
      %v496 = vsel %vm345, 0, %v495
      %497 = vst [vmem:[#allocation3 + $0xc8] sm:$0xff] %v496
      %v498 = vld [vmem:[#allocation3 + $0xd8] sm:$0xff]
      %v499 = vsel %vm345, 0, %v498
      %500 = vst [vmem:[#allocation3 + $0xd8] sm:$0xff] %v499
      %v501 = vld [vmem:[#allocation3 + $0xe8] sm:$0xff]
      %v502 = vsel %vm345, 0, %v501
      %503 = vst [vmem:[#allocation3 + $0xe8] sm:$0xff] %v502
      %v504 = vld [vmem:[#allocation3 + $0xf8] sm:$0xff]
      %v505 = vsel %vm345, 0, %v504
      %506 = vst [vmem:[#allocation3 + $0xf8] sm:$0xff] %v505
      %v507 = vld [vmem:[#allocation3 + $0x108] sm:$0xff]
      %v508 = vsel %vm345, 0, %v507
      %509 = vst [vmem:[#allocation3 + $0x108] sm:$0xff] %v508
      %v510 = vld [vmem:[#allocation3 + $0x118] sm:$0xff]
      %v511 = vsel %vm345, 0, %v510
      %512 = vst [vmem:[#allocation3 + $0x118] sm:$0xff] %v511
      %v513 = vld [vmem:[%s2] sm:$0x1]
      %v514 = vld [vmem:[%s3] sm:$0x1]
      %v515 = vld [vmem:[%s5] sm:$0x1]
      %v516 = vld [vmem:[%s6] sm:$0x1]
      %v517 = vld [vmem:[%s273] sm:$0xff]
      %v518 = vld [vmem:[%s273 + $0x8] sm:$0xff]
      %v519 = vld [vmem:[%s273 + $0x10] sm:$0xff]
      %v520 = vld [vmem:[%s273 + $0x18] sm:$0xff]
      %v521 = vld [vmem:[%s273 + $0x20] sm:$0xff]
      %v522 = vld [vmem:[%s273 + $0x28] sm:$0xff]
      %v523 = vld [vmem:[%s273 + $0x30] sm:$0xff]
      %v524 = vld [vmem:[%s273 + $0x38] sm:$0xff]
      %v525 = vld [vmem:[%s273 + $0x40] sm:$0xff]
      %v526 = vld [vmem:[%s273 + $0x48] sm:$0xff]
      %v527 = vld [vmem:[%s273 + $0x50] sm:$0xff]
      %v528 = vld [vmem:[%s273 + $0x58] sm:$0xff]
      %v529 = vld [vmem:[%s273 + $0x60] sm:$0xff]
      %v530 = vld [vmem:[%s273 + $0x68] sm:$0xff]
      %v531 = vld [vmem:[%s273 + $0x70] sm:$0xff]
      %v532 = vld [vmem:[%s273 + $0x78] sm:$0xff]
      %v533 = vld [vmem:[%s273 + $0x80] sm:$0xff]
      %v534 = vld [vmem:[%s273 + $0x88] sm:$0xff]
      %v535 = vld [vmem:[%s273 + $0x90] sm:$0xff]
      %v536 = vld [vmem:[%s273 + $0x98] sm:$0xff]
      %v537 = vld [vmem:[%s273 + $0xa0] sm:$0xff]
      %v538 = vld [vmem:[%s273 + $0xa8] sm:$0xff]
      %v539 = vld [vmem:[%s273 + $0xb0] sm:$0xff]
      %v540 = vld [vmem:[%s273 + $0xb8] sm:$0xff]
      %v541 = vld [vmem:[%s273 + $0xc0] sm:$0xff]
      %v542 = vld [vmem:[%s273 + $0xc8] sm:$0xff]
      %v543 = vld [vmem:[%s273 + $0xd0] sm:$0xff]
      %v544 = vld [vmem:[%s273 + $0xd8] sm:$0xff]
      %v545 = vld [vmem:[%s273 + $0xe0] sm:$0xff]
      %v546 = vld [vmem:[%s273 + $0xe8] sm:$0xff]
      %v547 = vld [vmem:[%s273 + $0xf0] sm:$0xff]
      %v548 = vld [vmem:[%s273 + $0xf8] sm:$0xff]
      %v549 = vpack.c.bf16 %v518, %v517
      %v550 = vpack.c.bf16 %v520, %v519
      %v551 = vpack.c.bf16 %v522, %v521
      %v552 = vpack.c.bf16 %v524, %v523
      %v553 = vpack.c.bf16 %v526, %v525
      %v554 = vpack.c.bf16 %v528, %v527
      %v555 = vpack.c.bf16 %v530, %v529
      %v556 = vpack.c.bf16 %v532, %v531
      %v557 = vpack.c.bf16 %v534, %v533
      %v558 = vpack.c.bf16 %v536, %v535
      %v559 = vpack.c.bf16 %v538, %v537
      %v560 = vpack.c.bf16 %v540, %v539
      %v561 = vpack.c.bf16 %v542, %v541
      %v562 = vpack.c.bf16 %v544, %v543
      %v563 = vpack.c.bf16 %v546, %v545
      %v564 = vpack.c.bf16 %v548, %v547
      %v566 = vshrl.u32 %v549, 16
      %v568 = vrot.slane %v566, 7
      %v569 = vshll.u32 %v549, 16
      %v571 = vor.u32 %v568, %v569
      %v573 = vshrl.u32 %v550, 16
      %v575 = vrot.slane %v573, 7
      %v576 = vshll.u32 %v550, 16
      %v578 = vor.u32 %v575, %v576
      %v580 = vshrl.u32 %v551, 16
      %v582 = vrot.slane %v580, 7
      %v583 = vshll.u32 %v551, 16
      %v585 = vor.u32 %v582, %v583
      %v587 = vshrl.u32 %v552, 16
      %v589 = vrot.slane %v587, 7
      %v590 = vshll.u32 %v552, 16
      %v592 = vor.u32 %v589, %v590
      %v594 = vshrl.u32 %v553, 16
      %v596 = vrot.slane %v594, 7
      %v597 = vshll.u32 %v553, 16
      %v599 = vor.u32 %v596, %v597
      %v601 = vshrl.u32 %v554, 16
      %v603 = vrot.slane %v601, 7
      %v604 = vshll.u32 %v554, 16
      %v606 = vor.u32 %v603, %v604
      %v608 = vshrl.u32 %v555, 16
      %v610 = vrot.slane %v608, 7
      %v611 = vshll.u32 %v555, 16
      %v613 = vor.u32 %v610, %v611
      %v615 = vshrl.u32 %v556, 16
      %v617 = vrot.slane %v615, 7
      %v618 = vshll.u32 %v556, 16
      %v620 = vor.u32 %v617, %v618
      %v622 = vshrl.u32 %v557, 16
      %v624 = vrot.slane %v622, 7
      %v625 = vshll.u32 %v557, 16
      %v627 = vor.u32 %v624, %v625
      %v629 = vshrl.u32 %v558, 16
      %v631 = vrot.slane %v629, 7
      %v632 = vshll.u32 %v558, 16
      %v634 = vor.u32 %v631, %v632
      %v636 = vshrl.u32 %v559, 16
      %v638 = vrot.slane %v636, 7
      %v639 = vshll.u32 %v559, 16
      %v641 = vor.u32 %v638, %v639
      %v643 = vshrl.u32 %v560, 16
      %v645 = vrot.slane %v643, 7
      %v646 = vshll.u32 %v560, 16
      %v648 = vor.u32 %v645, %v646
      %v650 = vshrl.u32 %v561, 16
      %v652 = vrot.slane %v650, 7
      %v653 = vshll.u32 %v561, 16
      %v655 = vor.u32 %v652, %v653
      %v657 = vshrl.u32 %v562, 16
      %v659 = vrot.slane %v657, 7
      %v660 = vshll.u32 %v562, 16
      %v662 = vor.u32 %v659, %v660
      %v664 = vshrl.u32 %v563, 16
      %v666 = vrot.slane %v664, 7
      %v667 = vshll.u32 %v563, 16
      %v669 = vor.u32 %v666, %v667
      %v671 = vshrl.u32 %v564, 16
      %v673 = vrot.slane %v671, 7
      %v674 = vshll.u32 %v564, 16
      %v676 = vor.u32 %v673, %v674
      %s709 = scalar_lea.vmem [#allocation2], 16
      %v710 = vld [vmem:[%s709] sm:$0xff]
      %v711 = vsel %vm345, %v571, %v710
      %712 = vst [vmem:[%s709] sm:$0xff] %v711
      %v713 = vld [vmem:[%s709 + $0x8] sm:$0x1]
      %v714 = vsel %vm288, %v568, %v713
      %715 = vst [vmem:[%s709 + $0x8] sm:$0x1] %v714
      %v716 = vld [vmem:[%s709 + $0x10] sm:$0xff]
      %v717 = vsel %vm345, %v578, %v716
      %718 = vst [vmem:[%s709 + $0x10] sm:$0xff] %v717
      %v719 = vld [vmem:[%s709 + $0x18] sm:$0x1]
      %v720 = vsel %vm288, %v575, %v719
      %721 = vst [vmem:[%s709 + $0x18] sm:$0x1] %v720
      %v722 = vld [vmem:[%s709 + $0x20] sm:$0xff]
      %v723 = vsel %vm345, %v585, %v722
      %724 = vst [vmem:[%s709 + $0x20] sm:$0xff] %v723
      %v725 = vld [vmem:[%s709 + $0x28] sm:$0x1]
      %v726 = vsel %vm288, %v582, %v725
      %727 = vst [vmem:[%s709 + $0x28] sm:$0x1] %v726
      %v728 = vld [vmem:[%s709 + $0x30] sm:$0xff]
      %v729 = vsel %vm345, %v592, %v728
      %730 = vst [vmem:[%s709 + $0x30] sm:$0xff] %v729
      %v731 = vld [vmem:[%s709 + $0x38] sm:$0x1]
      %v732 = vsel %vm288, %v589, %v731
      %733 = vst [vmem:[%s709 + $0x38] sm:$0x1] %v732
      %v734 = vld [vmem:[%s709 + $0x40] sm:$0xff]
      %v735 = vsel %vm345, %v599, %v734
      %736 = vst [vmem:[%s709 + $0x40] sm:$0xff] %v735
      %v737 = vld [vmem:[%s709 + $0x48] sm:$0x1]
      %v738 = vsel %vm288, %v596, %v737
      %739 = vst [vmem:[%s709 + $0x48] sm:$0x1] %v738
      %v740 = vld [vmem:[%s709 + $0x50] sm:$0xff]
      %v741 = vsel %vm345, %v606, %v740
      %742 = vst [vmem:[%s709 + $0x50] sm:$0xff] %v741
      %v743 = vld [vmem:[%s709 + $0x58] sm:$0x1]
      %v744 = vsel %vm288, %v603, %v743
      %745 = vst [vmem:[%s709 + $0x58] sm:$0x1] %v744
      %v746 = vld [vmem:[%s709 + $0x60] sm:$0xff]
      %v747 = vsel %vm345, %v613, %v746
      %748 = vst [vmem:[%s709 + $0x60] sm:$0xff] %v747
      %v749 = vld [vmem:[%s709 + $0x68] sm:$0x1]
      %v750 = vsel %vm288, %v610, %v749
      %751 = vst [vmem:[%s709 + $0x68] sm:$0x1] %v750
      %v752 = vld [vmem:[%s709 + $0x70] sm:$0xff]
      %v753 = vsel %vm345, %v620, %v752
      %754 = vst [vmem:[%s709 + $0x70] sm:$0xff] %v753
      %v755 = vld [vmem:[%s709 + $0x78] sm:$0x1]
      %v756 = vsel %vm288, %v617, %v755
      %757 = vst [vmem:[%s709 + $0x78] sm:$0x1] %v756
      %v758 = vld [vmem:[%s709 + $0x80] sm:$0xff]
      %v759 = vsel %vm345, %v627, %v758
      %760 = vst [vmem:[%s709 + $0x80] sm:$0xff] %v759
      %v761 = vld [vmem:[%s709 + $0x88] sm:$0x1]
      %v762 = vsel %vm288, %v624, %v761
      %763 = vst [vmem:[%s709 + $0x88] sm:$0x1] %v762
      %v764 = vld [vmem:[%s709 + $0x90] sm:$0xff]
      %v765 = vsel %vm345, %v634, %v764
      %766 = vst [vmem:[%s709 + $0x90] sm:$0xff] %v765
      %v767 = vld [vmem:[%s709 + $0x98] sm:$0x1]
      %v768 = vsel %vm288, %v631, %v767
      %769 = vst [vmem:[%s709 + $0x98] sm:$0x1] %v768
      %v770 = vld [vmem:[%s709 + $0xa0] sm:$0xff]
      %v771 = vsel %vm345, %v641, %v770
      %772 = vst [vmem:[%s709 + $0xa0] sm:$0xff] %v771
      %v773 = vld [vmem:[%s709 + $0xa8] sm:$0x1]
      %v774 = vsel %vm288, %v638, %v773
      %775 = vst [vmem:[%s709 + $0xa8] sm:$0x1] %v774
      %v776 = vld [vmem:[%s709 + $0xb0] sm:$0xff]
      %v777 = vsel %vm345, %v648, %v776
      %778 = vst [vmem:[%s709 + $0xb0] sm:$0xff] %v777
      %v779 = vld [vmem:[%s709 + $0xb8] sm:$0x1]
      %v780 = vsel %vm288, %v645, %v779
      %781 = vst [vmem:[%s709 + $0xb8] sm:$0x1] %v780
      %v782 = vld [vmem:[%s709 + $0xc0] sm:$0xff]
      %v783 = vsel %vm345, %v655, %v782
      %784 = vst [vmem:[%s709 + $0xc0] sm:$0xff] %v783
      %v785 = vld [vmem:[%s709 + $0xc8] sm:$0x1]
      %v786 = vsel %vm288, %v652, %v785
      %787 = vst [vmem:[%s709 + $0xc8] sm:$0x1] %v786
      %v788 = vld [vmem:[%s709 + $0xd0] sm:$0xff]
      %v789 = vsel %vm345, %v662, %v788
      %790 = vst [vmem:[%s709 + $0xd0] sm:$0xff] %v789
      %v791 = vld [vmem:[%s709 + $0xd8] sm:$0x1]
      %v792 = vsel %vm288, %v659, %v791
      %793 = vst [vmem:[%s709 + $0xd8] sm:$0x1] %v792
      %v794 = vld [vmem:[%s709 + $0xe0] sm:$0xff]
      %v795 = vsel %vm345, %v669, %v794
      %796 = vst [vmem:[%s709 + $0xe0] sm:$0xff] %v795
      %v797 = vld [vmem:[%s709 + $0xe8] sm:$0x1]
      %v798 = vsel %vm288, %v666, %v797
      %799 = vst [vmem:[%s709 + $0xe8] sm:$0x1] %v798
      %v800 = vld [vmem:[%s709 + $0xf0] sm:$0xff]
      %v801 = vsel %vm345, %v676, %v800
      %802 = vst [vmem:[%s709 + $0xf0] sm:$0xff] %v801
      %v803 = vld [vmem:[%s709 + $0xf8] sm:$0x1]
      %v804 = vsel %vm288, %v673, %v803
      %805 = vst [vmem:[%s709 + $0xf8] sm:$0x1] %v804
      %v806 = vld [vmem:[#allocation2] sm:$0xff]
      %v807 = vld [vmem:[#allocation2 + $0x8] sm:$0xff]
      %v808 = vld [vmem:[#allocation2 + $0x10] sm:$0xff]
      %v809 = vld [vmem:[#allocation2 + $0x18] sm:$0xff]
      %v810 = vld [vmem:[#allocation2 + $0x20] sm:$0xff]
      %v811 = vld [vmem:[#allocation2 + $0x28] sm:$0xff]
      %v812 = vld [vmem:[#allocation2 + $0x30] sm:$0xff]
      %v813 = vld [vmem:[#allocation2 + $0x38] sm:$0xff]
      %v814 = vld [vmem:[#allocation2 + $0x40] sm:$0xff]
      %v815 = vld [vmem:[#allocation2 + $0x48] sm:$0xff]
      %v816 = vld [vmem:[#allocation2 + $0x50] sm:$0xff]
      %v817 = vld [vmem:[#allocation2 + $0x58] sm:$0xff]
      %v818 = vld [vmem:[#allocation2 + $0x60] sm:$0xff]
      %v819 = vld [vmem:[#allocation2 + $0x68] sm:$0xff]
      %v820 = vld [vmem:[#allocation2 + $0x70] sm:$0xff]
      %v821 = vld [vmem:[#allocation2 + $0x78] sm:$0xff]
      %v822 = vld [vmem:[#allocation2 + $0x80] sm:$0xff]
      %v823 = vld [vmem:[#allocation2 + $0x88] sm:$0xff]
      %v824 = vld [vmem:[#allocation2 + $0x90] sm:$0xff]
      %v825 = vld [vmem:[#allocation2 + $0x98] sm:$0xff]
      %v826 = vld [vmem:[#allocation2 + $0xa0] sm:$0xff]
      %v827 = vld [vmem:[#allocation2 + $0xa8] sm:$0xff]
      %v828 = vld [vmem:[#allocation2 + $0xb0] sm:$0xff]
      %v829 = vld [vmem:[#allocation2 + $0xb8] sm:$0xff]
      %v830 = vld [vmem:[#allocation2 + $0xc0] sm:$0xff]
      %v831 = vld [vmem:[#allocation2 + $0xc8] sm:$0xff]
      %v832 = vld [vmem:[#allocation2 + $0xd0] sm:$0xff]
      %v833 = vld [vmem:[#allocation2 + $0xd8] sm:$0xff]
      %v834 = vld [vmem:[#allocation2 + $0xe0] sm:$0xff]
      %v835 = vld [vmem:[#allocation2 + $0xe8] sm:$0xff]
      %v836 = vld [vmem:[#allocation2 + $0xf0] sm:$0xff]
      %v837 = vld [vmem:[#allocation2 + $0xf8] sm:$0xff]
      %v838 = vld [vmem:[#allocation2 + $0x100] sm:$0xff]
      %v839 = vld [vmem:[#allocation2 + $0x108] sm:$0xff]
      %v840 = vld [vmem:[#allocation2 + $0x110] sm:$0xff]
      %v841 = vld [vmem:[#allocation2 + $0x118] sm:$0xff]
      %874 = vrot.lane.b32.xlu0 %v808, 4
      %v875 = vpop.permute.xlu0 %874
      %876 = vrot.lane.b32.xlu0 %v809, 4
      %v877 = vpop.permute.xlu0 %876
      %878 = vrot.lane.b32.xlu0 %v810, 4
      %v879 = vpop.permute.xlu0 %878
      %880 = vrot.lane.b32.xlu0 %v811, 4
      %v881 = vpop.permute.xlu0 %880
      %882 = vrot.lane.b32.xlu0 %v812, 4
      %v883 = vpop.permute.xlu0 %882
      %884 = vrot.lane.b32.xlu0 %v813, 4
      %v885 = vpop.permute.xlu0 %884
      %886 = vrot.lane.b32.xlu0 %v814, 4
      %v887 = vpop.permute.xlu0 %886
      %888 = vrot.lane.b32.xlu0 %v815, 4
      %v889 = vpop.permute.xlu0 %888
      %890 = vrot.lane.b32.xlu0 %v816, 4
      %v891 = vpop.permute.xlu0 %890
      %892 = vrot.lane.b32.xlu0 %v817, 4
      %v893 = vpop.permute.xlu0 %892
      %894 = vrot.lane.b32.xlu0 %v818, 4
      %v895 = vpop.permute.xlu0 %894
      %896 = vrot.lane.b32.xlu0 %v819, 4
      %v897 = vpop.permute.xlu0 %896
      %898 = vrot.lane.b32.xlu0 %v820, 4
      %v899 = vpop.permute.xlu0 %898
      %900 = vrot.lane.b32.xlu0 %v821, 4
      %v901 = vpop.permute.xlu0 %900
      %902 = vrot.lane.b32.xlu0 %v822, 4
      %v903 = vpop.permute.xlu0 %902
      %904 = vrot.lane.b32.xlu0 %v823, 4
      %v905 = vpop.permute.xlu0 %904
      %906 = vrot.lane.b32.xlu0 %v824, 4
      %v907 = vpop.permute.xlu0 %906
      %908 = vrot.lane.b32.xlu0 %v825, 4
      %v909 = vpop.permute.xlu0 %908
      %910 = vrot.lane.b32.xlu0 %v826, 4
      %v911 = vpop.permute.xlu0 %910
      %912 = vrot.lane.b32.xlu0 %v827, 4
      %v913 = vpop.permute.xlu0 %912
      %914 = vrot.lane.b32.xlu0 %v828, 4
      %v915 = vpop.permute.xlu0 %914
      %916 = vrot.lane.b32.xlu0 %v829, 4
      %v917 = vpop.permute.xlu0 %916
      %918 = vrot.lane.b32.xlu0 %v830, 4
      %v919 = vpop.permute.xlu0 %918
      %920 = vrot.lane.b32.xlu0 %v831, 4
      %v921 = vpop.permute.xlu0 %920
      %922 = vrot.lane.b32.xlu0 %v832, 4
      %v923 = vpop.permute.xlu0 %922
      %924 = vrot.lane.b32.xlu0 %v833, 4
      %v925 = vpop.permute.xlu0 %924
      %926 = vrot.lane.b32.xlu0 %v834, 4
      %v927 = vpop.permute.xlu0 %926
      %928 = vrot.lane.b32.xlu0 %v835, 4
      %v929 = vpop.permute.xlu0 %928
      %930 = vrot.lane.b32.xlu0 %v836, 4
      %v931 = vpop.permute.xlu0 %930
      %932 = vrot.lane.b32.xlu0 %v837, 4
      %v933 = vpop.permute.xlu0 %932
      %934 = vrot.lane.b32.xlu0 %v838, 4
      %v935 = vpop.permute.xlu0 %934
      %936 = vrot.lane.b32.xlu0 %v839, 4
      %v937 = vpop.permute.xlu0 %936
      %940 = vrot.lane.b32.xlu0 %v810, 8
      %v941 = vpop.permute.xlu0 %940
      %942 = vrot.lane.b32.xlu0 %v811, 8
      %v943 = vpop.permute.xlu0 %942
      %944 = vrot.lane.b32.xlu0 %v812, 8
      %v945 = vpop.permute.xlu0 %944
      %946 = vrot.lane.b32.xlu0 %v813, 8
      %v947 = vpop.permute.xlu0 %946
      %948 = vrot.lane.b32.xlu0 %v814, 8
      %v949 = vpop.permute.xlu0 %948
      %950 = vrot.lane.b32.xlu0 %v815, 8
      %v951 = vpop.permute.xlu0 %950
      %952 = vrot.lane.b32.xlu0 %v816, 8
      %v953 = vpop.permute.xlu0 %952
      %954 = vrot.lane.b32.xlu0 %v817, 8
      %v955 = vpop.permute.xlu0 %954
      %956 = vrot.lane.b32.xlu0 %v818, 8
      %v957 = vpop.permute.xlu0 %956
      %958 = vrot.lane.b32.xlu0 %v819, 8
      %v959 = vpop.permute.xlu0 %958
      %960 = vrot.lane.b32.xlu0 %v820, 8
      %v961 = vpop.permute.xlu0 %960
      %962 = vrot.lane.b32.xlu0 %v821, 8
      %v963 = vpop.permute.xlu0 %962
      %964 = vrot.lane.b32.xlu0 %v822, 8
      %v965 = vpop.permute.xlu0 %964
      %966 = vrot.lane.b32.xlu0 %v823, 8
      %v967 = vpop.permute.xlu0 %966
      %968 = vrot.lane.b32.xlu0 %v824, 8
      %v969 = vpop.permute.xlu0 %968
      %970 = vrot.lane.b32.xlu0 %v825, 8
      %v971 = vpop.permute.xlu0 %970
      %972 = vrot.lane.b32.xlu0 %v826, 8
      %v973 = vpop.permute.xlu0 %972
      %974 = vrot.lane.b32.xlu0 %v827, 8
      %v975 = vpop.permute.xlu0 %974
      %976 = vrot.lane.b32.xlu0 %v828, 8
      %v977 = vpop.permute.xlu0 %976
      %978 = vrot.lane.b32.xlu0 %v829, 8
      %v979 = vpop.permute.xlu0 %978
      %980 = vrot.lane.b32.xlu0 %v830, 8
      %v981 = vpop.permute.xlu0 %980
      %982 = vrot.lane.b32.xlu0 %v831, 8
      %v983 = vpop.permute.xlu0 %982
      %984 = vrot.lane.b32.xlu0 %v832, 8
      %v985 = vpop.permute.xlu0 %984
      %986 = vrot.lane.b32.xlu0 %v833, 8
      %v987 = vpop.permute.xlu0 %986
      %988 = vrot.lane.b32.xlu0 %v834, 8
      %v989 = vpop.permute.xlu0 %988
      %990 = vrot.lane.b32.xlu0 %v835, 8
      %v991 = vpop.permute.xlu0 %990
      %992 = vrot.lane.b32.xlu0 %v836, 8
      %v993 = vpop.permute.xlu0 %992
      %994 = vrot.lane.b32.xlu0 %v837, 8
      %v995 = vpop.permute.xlu0 %994
      %996 = vrot.lane.b32.xlu0 %v838, 8
      %v997 = vpop.permute.xlu0 %996
      %998 = vrot.lane.b32.xlu0 %v839, 8
      %v999 = vpop.permute.xlu0 %998
      %1000 = vrot.lane.b32.xlu0 %v840, 8
      %v1001 = vpop.permute.xlu0 %1000
      %1002 = vrot.lane.b32.xlu0 %v841, 8
      %v1003 = vpop.permute.xlu0 %1002
      %v1006 = vsel %vm280, %v806, %v875
      %v1009 = vsel %vm280, %v807, %v877
      %v1012 = vsel %vm280, %v808, %v879
      %v1015 = vsel %vm280, %v809, %v881
      %v1018 = vsel %vm280, %v810, %v883
      %v1021 = vsel %vm280, %v811, %v885
      %v1024 = vsel %vm280, %v812, %v887
      %v1027 = vsel %vm280, %v813, %v889
      %v1030 = vsel %vm280, %v814, %v891
      %v1033 = vsel %vm280, %v815, %v893
      %v1036 = vsel %vm280, %v816, %v895
      %v1039 = vsel %vm280, %v817, %v897
      %v1042 = vsel %vm280, %v818, %v899
      %v1045 = vsel %vm280, %v819, %v901
      %v1048 = vsel %vm280, %v820, %v903
      %v1051 = vsel %vm280, %v821, %v905
      %v1054 = vsel %vm280, %v822, %v907
      %v1057 = vsel %vm280, %v823, %v909
      %v1060 = vsel %vm280, %v824, %v911
      %v1063 = vsel %vm280, %v825, %v913
      %v1066 = vsel %vm280, %v826, %v915
      %v1069 = vsel %vm280, %v827, %v917
      %v1072 = vsel %vm280, %v828, %v919
      %v1075 = vsel %vm280, %v829, %v921
      %v1078 = vsel %vm280, %v830, %v923
      %v1081 = vsel %vm280, %v831, %v925
      %v1084 = vsel %vm280, %v832, %v927
      %v1087 = vsel %vm280, %v833, %v929
      %v1090 = vsel %vm280, %v834, %v931
      %v1093 = vsel %vm280, %v835, %v933
      %v1096 = vsel %vm280, %v836, %v935
      %v1099 = vsel %vm280, %v837, %v937
      %vm1100 = vcmask 64512
      %v1102 = vsel %vm1100, %v1006, %v941
      %v1104 = vsel %vm1100, %v1009, %v943
      %v1106 = vsel %vm1100, %v1012, %v945
      %v1108 = vsel %vm1100, %v1015, %v947
      %v1110 = vsel %vm1100, %v1018, %v949
      %v1112 = vsel %vm1100, %v1021, %v951
      %v1114 = vsel %vm1100, %v1024, %v953
      %v1116 = vsel %vm1100, %v1027, %v955
      %v1118 = vsel %vm1100, %v1030, %v957
      %v1120 = vsel %vm1100, %v1033, %v959
      %v1122 = vsel %vm1100, %v1036, %v961
      %v1124 = vsel %vm1100, %v1039, %v963
      %v1126 = vsel %vm1100, %v1042, %v965
      %v1128 = vsel %vm1100, %v1045, %v967
      %v1130 = vsel %vm1100, %v1048, %v969
      %v1132 = vsel %vm1100, %v1051, %v971
      %v1134 = vsel %vm1100, %v1054, %v973
      %v1136 = vsel %vm1100, %v1057, %v975
      %v1138 = vsel %vm1100, %v1060, %v977
      %v1140 = vsel %vm1100, %v1063, %v979
      %v1142 = vsel %vm1100, %v1066, %v981
      %v1144 = vsel %vm1100, %v1069, %v983
      %v1146 = vsel %vm1100, %v1072, %v985
      %v1148 = vsel %vm1100, %v1075, %v987
      %v1150 = vsel %vm1100, %v1078, %v989
      %v1152 = vsel %vm1100, %v1081, %v991
      %v1154 = vsel %vm1100, %v1084, %v993
      %v1156 = vsel %vm1100, %v1087, %v995
      %v1158 = vsel %vm1100, %v1090, %v997
      %v1160 = vsel %vm1100, %v1093, %v999
      %v1162 = vsel %vm1100, %v1096, %v1001
      %v1164 = vsel %vm1100, %v1099, %v1003
      %v1165 = vld [vmem:[%s1] sm:$0xf]
      %v1166 = vld [vmem:[%s1 + $0x4] sm:$0x3]
      %v1169 = vunpack.c.l.b16 %v1165
      %v1170 = vunpack.c.l.b16 %v1166
      %v1171 = vpack.c.b16 %v1170, %v1169
      %vm1172 = vcmask 97280
      %v1173 = vsel %vm1172, %v1102, 0
      %v1175 = vsel %vm1172, %v1104, 0
      %v1177 = vsel %vm1172, %v1106, 0
      %v1179 = vsel %vm1172, %v1108, 0
      %v1181 = vsel %vm1172, %v1110, 0
      %v1183 = vsel %vm1172, %v1112, 0
      %v1185 = vsel %vm1172, %v1114, 0
      %v1187 = vsel %vm1172, %v1116, 0
      %v1189 = vsel %vm1172, %v1118, 0
      %v1191 = vsel %vm1172, %v1120, 0
      %v1193 = vsel %vm1172, %v1122, 0
      %v1195 = vsel %vm1172, %v1124, 0
      %v1197 = vsel %vm1172, %v1126, 0
      %v1199 = vsel %vm1172, %v1128, 0
      %v1201 = vsel %vm1172, %v1130, 0
      %v1203 = vsel %vm1172, %v1132, 0
      %v1205 = vsel %vm1172, %v1134, 0
      %v1207 = vsel %vm1172, %v1136, 0
      %v1209 = vsel %vm1172, %v1138, 0
      %v1211 = vsel %vm1172, %v1140, 0
      %v1213 = vsel %vm1172, %v1142, 0
      %v1215 = vsel %vm1172, %v1144, 0
      %v1217 = vsel %vm1172, %v1146, 0
      %v1219 = vsel %vm1172, %v1148, 0
      %v1221 = vsel %vm1172, %v1150, 0
      %v1223 = vsel %vm1172, %v1152, 0
      %v1225 = vsel %vm1172, %v1154, 0
      %v1227 = vsel %vm1172, %v1156, 0
      %v1229 = vsel %vm1172, %v1158, 0
      %v1231 = vsel %vm1172, %v1160, 0
      %v1233 = vsel %vm1172, %v1162, 0
      %v1235 = vsel %vm1172, %v1164, 0
      %vm1237 = vcmask 1045504
      %v1239 = vsel %vm1237, %v1171, 0
      %1241 = vmatprep.subr.bf16.mxu0 0
      %1242 = vmatpush1.bf16.msra.mxu0 %v1239
      %1243 = vmatprep.subr.bf16.mxu0 0
      %1244 = vmatpush1.bf16.msra.mxu0 0
      %1245 = vmatprep.subr.bf16.mxu0 0
      %1246 = vmatpush1.bf16.msra.mxu0 0
      %1247 = vmatprep.subr.bf16.mxu0 0
      %1248 = vmatpush1.bf16.msra.mxu0 0
      %1249 = vmatprep.subr.bf16.mxu0 0
      %1250 = vmatpush1.bf16.msra.mxu0 0
      %1251 = vmatprep.subr.bf16.mxu0 0
      %1252 = vmatpush1.bf16.msra.mxu0 0
      %1253 = vmatprep.subr.bf16.mxu0 0
      %1254 = vmatpush1.bf16.msra.mxu0 0
      %1255 = vmatprep.subr.bf16.mxu0 0
      %1256 = vmatpush1.bf16.msra.mxu0 0
      %1257 = vmatprep.subr.bf16.mxu0 0
      %1258 = vmatpush1.bf16.msra.mxu0 0
      %1259 = vmatprep.subr.bf16.mxu0 0
      %1260 = vmatpush1.bf16.msra.mxu0 0
      %1261 = vmatprep.subr.bf16.mxu0 0
      %1262 = vmatpush1.bf16.msra.mxu0 0
      %1263 = vmatprep.subr.bf16.mxu0 0
      %1264 = vmatpush1.bf16.msra.mxu0 0
      %1265 = vmatprep.subr.bf16.mxu0 0
      %1266 = vmatpush1.bf16.msra.mxu0 0
      %1267 = vmatprep.subr.bf16.mxu0 0
      %1268 = vmatpush1.bf16.msra.mxu0 0
      %1269 = vmatprep.subr.bf16.mxu0 0
      %1270 = vmatpush1.bf16.msra.mxu0 0
      %1271 = vmatprep.subr.bf16.mxu0 0
      %1272 = vmatpush1.bf16.msra.mxu0 0
      %1273 = vmatprep.mubr.bf16.mxu0 0
      %1274 = vmatmul.mubr.bf16.gmra.mrb[0].mxu0 %v1173
      %v1275 = vpop.f32.mrb[0].mxu0
      %v1276 = vadd.f32 0.0, %v1275
      %v1277 = vpop.f32.mrb[0].mxu0
      %v1278 = vpop.f32.mrb[0].mxu0
      %v1279 = vadd.f32 0.0, %v1278
      %v1280 = vpop.f32.mrb[0].mxu0
      %1281 = vmatprep.mubr.bf16.mxu0 0
      %1282 = vmatmul.mubr.bf16.gmra.mrb[0].mxu0 %v1175
      %v1283 = vpop.f32.mrb[0].mxu0
      %v1284 = vpop.f32.mrb[0].mxu0
      %v1285 = vpop.f32.mrb[0].mxu0
      %v1286 = vpop.f32.mrb[0].mxu0
      %1287 = vmatprep.mubr.bf16.mxu0 0
      %1288 = vmatmul.mubr.bf16.gmra.mrb[0].mxu0 %v1177
      %v1289 = vpop.f32.mrb[0].mxu0
      %v1290 = vadd.f32 0.0, %v1289
      %v1291 = vpop.f32.mrb[0].mxu0
      %v1292 = vpop.f32.mrb[0].mxu0
      %v1293 = vadd.f32 0.0, %v1292
      %v1294 = vpop.f32.mrb[0].mxu0
      %1295 = vmatprep.mubr.bf16.mxu0 0
      %1296 = vmatmul.mubr.bf16.gmra.mrb[0].mxu0 %v1179
      %v1297 = vpop.f32.mrb[0].mxu0
      %v1298 = vpop.f32.mrb[0].mxu0
      %v1299 = vpop.f32.mrb[0].mxu0
      %v1300 = vpop.f32.mrb[0].mxu0
      %1301 = vmatprep.mubr.bf16.mxu0 0
      %1302 = vmatmul.mubr.bf16.gmra.mrb[0].mxu0 %v1181
      %v1303 = vpop.f32.mrb[0].mxu0
      %v1304 = vadd.f32 0.0, %v1303
      %v1305 = vpop.f32.mrb[0].mxu0
      %v1306 = vpop.f32.mrb[0].mxu0
      %v1307 = vadd.f32 0.0, %v1306
      %v1308 = vpop.f32.mrb[0].mxu0
      %1309 = vmatprep.mubr.bf16.mxu0 0
      %1310 = vmatmul.mubr.bf16.gmra.mrb[0].mxu0 %v1183
      %v1311 = vpop.f32.mrb[0].mxu0
      %v1312 = vpop.f32.mrb[0].mxu0
      %v1313 = vpop.f32.mrb[0].mxu0
      %v1314 = vpop.f32.mrb[0].mxu0
      %1315 = vmatprep.mubr.bf16.mxu0 0
      %1316 = vmatmul.mubr.bf16.gmra.mrb[0].mxu0 %v1185
      %v1317 = vpop.f32.mrb[0].mxu0
      %v1318 = vadd.f32 0.0, %v1317
      %v1319 = vpop.f32.mrb[0].mxu0
      %v1320 = vpop.f32.mrb[0].mxu0
      %v1321 = vadd.f32 0.0, %v1320
      %v1322 = vpop.f32.mrb[0].mxu0
      %1323 = vmatprep.mubr.bf16.mxu0 0
      %1324 = vmatmul.mubr.bf16.gmra.mrb[0].mxu0 %v1187
      %v1325 = vpop.f32.mrb[0].mxu0
      %v1326 = vpop.f32.mrb[0].mxu0
      %v1327 = vpop.f32.mrb[0].mxu0
      %v1328 = vpop.f32.mrb[0].mxu0
      %1329 = vmatprep.mubr.bf16.mxu0 0
      %1330 = vmatmul.mubr.bf16.gmra.mrb[0].mxu0 %v1189
      %v1331 = vpop.f32.mrb[0].mxu0
      %v1332 = vadd.f32 0.0, %v1331
      %v1333 = vpop.f32.mrb[0].mxu0
      %v1334 = vpop.f32.mrb[0].mxu0
      %v1335 = vadd.f32 0.0, %v1334
      %v1336 = vpop.f32.mrb[0].mxu0
      %1337 = vmatprep.mubr.bf16.mxu0 0
      %1338 = vmatmul.mubr.bf16.gmra.mrb[0].mxu0 %v1191
      %v1339 = vpop.f32.mrb[0].mxu0
      %v1340 = vpop.f32.mrb[0].mxu0
      %v1341 = vpop.f32.mrb[0].mxu0
      %v1342 = vpop.f32.mrb[0].mxu0
      %1343 = vmatprep.mubr.bf16.mxu0 0
      %1344 = vmatmul.mubr.bf16.gmra.mrb[0].mxu0 %v1193
      %v1345 = vpop.f32.mrb[0].mxu0
      %v1346 = vadd.f32 0.0, %v1345
      %v1347 = vpop.f32.mrb[0].mxu0
      %v1348 = vpop.f32.mrb[0].mxu0
      %v1349 = vadd.f32 0.0, %v1348
      %v1350 = vpop.f32.mrb[0].mxu0
      %1351 = vmatprep.mubr.bf16.mxu0 0
      %1352 = vmatmul.mubr.bf16.gmra.mrb[0].mxu0 %v1195
      %v1353 = vpop.f32.mrb[0].mxu0
      %v1354 = vpop.f32.mrb[0].mxu0
      %v1355 = vpop.f32.mrb[0].mxu0
      %v1356 = vpop.f32.mrb[0].mxu0
      %1357 = vmatprep.mubr.bf16.mxu0 0
      %1358 = vmatmul.mubr.bf16.gmra.mrb[0].mxu0 %v1197
      %v1359 = vpop.f32.mrb[0].mxu0
      %v1360 = vadd.f32 0.0, %v1359
      %v1361 = vpop.f32.mrb[0].mxu0
      %v1362 = vpop.f32.mrb[0].mxu0
      %v1363 = vadd.f32 0.0, %v1362
      %v1364 = vpop.f32.mrb[0].mxu0
      %1365 = vmatprep.mubr.bf16.mxu0 0
      %1366 = vmatmul.mubr.bf16.gmra.mrb[0].mxu0 %v1199
      %v1367 = vpop.f32.mrb[0].mxu0
      %v1368 = vpop.f32.mrb[0].mxu0
      %v1369 = vpop.f32.mrb[0].mxu0
      %v1370 = vpop.f32.mrb[0].mxu0
      %1371 = vmatprep.mubr.bf16.mxu0 0
      %1372 = vmatmul.mubr.bf16.gmra.mrb[0].mxu0 %v1201
      %v1373 = vpop.f32.mrb[0].mxu0
      %v1374 = vadd.f32 0.0, %v1373
      %v1375 = vpop.f32.mrb[0].mxu0
      %v1376 = vpop.f32.mrb[0].mxu0
      %v1377 = vadd.f32 0.0, %v1376
      %v1378 = vpop.f32.mrb[0].mxu0
      %1379 = vmatprep.mubr.bf16.mxu0 0
      %1380 = vmatmul.mubr.bf16.gmra.mrb[0].mxu0 %v1203
      %v1381 = vpop.f32.mrb[0].mxu0
      %v1382 = vpop.f32.mrb[0].mxu0
      %v1383 = vpop.f32.mrb[0].mxu0
      %v1384 = vpop.f32.mrb[0].mxu0
      %1385 = vmatprep.mubr.bf16.mxu0 0
      %1386 = vmatmul.mubr.bf16.gmra.mrb[0].mxu0 %v1205
      %v1387 = vpop.f32.mrb[0].mxu0
      %v1388 = vadd.f32 0.0, %v1387
      %v1389 = vpop.f32.mrb[0].mxu0
      %v1390 = vpop.f32.mrb[0].mxu0
      %v1391 = vadd.f32 0.0, %v1390
      %v1392 = vpop.f32.mrb[0].mxu0
      %1393 = vmatprep.mubr.bf16.mxu0 0
      %1394 = vmatmul.mubr.bf16.gmra.mrb[0].mxu0 %v1207
      %v1395 = vpop.f32.mrb[0].mxu0
      %v1396 = vpop.f32.mrb[0].mxu0
      %v1397 = vpop.f32.mrb[0].mxu0
      %v1398 = vpop.f32.mrb[0].mxu0
      %1399 = vmatprep.mubr.bf16.mxu0 0
      %1400 = vmatmul.mubr.bf16.gmra.mrb[0].mxu0 %v1209
      %v1401 = vpop.f32.mrb[0].mxu0
      %v1402 = vadd.f32 0.0, %v1401
      %v1403 = vpop.f32.mrb[0].mxu0
      %v1404 = vpop.f32.mrb[0].mxu0
      %v1405 = vadd.f32 0.0, %v1404
      %v1406 = vpop.f32.mrb[0].mxu0
      %1407 = vmatprep.mubr.bf16.mxu0 0
      %1408 = vmatmul.mubr.bf16.gmra.mrb[0].mxu0 %v1211
      %v1409 = vpop.f32.mrb[0].mxu0
      %v1410 = vpop.f32.mrb[0].mxu0
      %v1411 = vpop.f32.mrb[0].mxu0
      %v1412 = vpop.f32.mrb[0].mxu0
      %1413 = vmatprep.mubr.bf16.mxu0 0
      %1414 = vmatmul.mubr.bf16.gmra.mrb[0].mxu0 %v1213
      %v1415 = vpop.f32.mrb[0].mxu0
      %v1416 = vadd.f32 0.0, %v1415
      %v1417 = vpop.f32.mrb[0].mxu0
      %v1418 = vpop.f32.mrb[0].mxu0
      %v1419 = vadd.f32 0.0, %v1418
      %v1420 = vpop.f32.mrb[0].mxu0
      %1421 = vmatprep.mubr.bf16.mxu0 0
      %1422 = vmatmul.mubr.bf16.gmra.mrb[0].mxu0 %v1215
      %v1423 = vpop.f32.mrb[0].mxu0
      %v1424 = vpop.f32.mrb[0].mxu0
      %v1425 = vpop.f32.mrb[0].mxu0
      %v1426 = vpop.f32.mrb[0].mxu0
      %1427 = vmatprep.mubr.bf16.mxu0 0
      %1428 = vmatmul.mubr.bf16.gmra.mrb[0].mxu0 %v1217
      %v1429 = vpop.f32.mrb[0].mxu0
      %v1430 = vadd.f32 0.0, %v1429
      %v1431 = vpop.f32.mrb[0].mxu0
      %v1432 = vpop.f32.mrb[0].mxu0
      %v1433 = vadd.f32 0.0, %v1432
      %v1434 = vpop.f32.mrb[0].mxu0
      %1435 = vmatprep.mubr.bf16.mxu0 0
      %1436 = vmatmul.mubr.bf16.gmra.mrb[0].mxu0 %v1219
      %v1437 = vpop.f32.mrb[0].mxu0
      %v1438 = vpop.f32.mrb[0].mxu0
      %v1439 = vpop.f32.mrb[0].mxu0
      %v1440 = vpop.f32.mrb[0].mxu0
      %1441 = vmatprep.mubr.bf16.mxu0 0
      %1442 = vmatmul.mubr.bf16.gmra.mrb[0].mxu0 %v1221
      %v1443 = vpop.f32.mrb[0].mxu0
      %v1444 = vadd.f32 0.0, %v1443
      %v1445 = vpop.f32.mrb[0].mxu0
      %v1446 = vpop.f32.mrb[0].mxu0
      %v1447 = vadd.f32 0.0, %v1446
      %v1448 = vpop.f32.mrb[0].mxu0
      %1449 = vmatprep.mubr.bf16.mxu0 0
      %1450 = vmatmul.mubr.bf16.gmra.mrb[0].mxu0 %v1223
      %v1451 = vpop.f32.mrb[0].mxu0
      %v1452 = vpop.f32.mrb[0].mxu0
      %v1453 = vpop.f32.mrb[0].mxu0
      %v1454 = vpop.f32.mrb[0].mxu0
      %1455 = vmatprep.mubr.bf16.mxu0 0
      %1456 = vmatmul.mubr.bf16.gmra.mrb[0].mxu0 %v1225
      %v1457 = vpop.f32.mrb[0].mxu0
      %v1458 = vadd.f32 0.0, %v1457
      %v1459 = vpop.f32.mrb[0].mxu0
      %v1460 = vpop.f32.mrb[0].mxu0
      %v1461 = vadd.f32 0.0, %v1460
      %v1462 = vpop.f32.mrb[0].mxu0
      %1463 = vmatprep.mubr.bf16.mxu0 0
      %1464 = vmatmul.mubr.bf16.gmra.mrb[0].mxu0 %v1227
      %v1465 = vpop.f32.mrb[0].mxu0
      %v1466 = vpop.f32.mrb[0].mxu0
      %v1467 = vpop.f32.mrb[0].mxu0
      %v1468 = vpop.f32.mrb[0].mxu0
      %1469 = vmatprep.mubr.bf16.mxu0 0
      %1470 = vmatmul.mubr.bf16.gmra.mrb[0].mxu0 %v1229
      %v1471 = vpop.f32.mrb[0].mxu0
      %v1472 = vadd.f32 0.0, %v1471
      %v1473 = vpop.f32.mrb[0].mxu0
      %v1474 = vpop.f32.mrb[0].mxu0
      %v1475 = vadd.f32 0.0, %v1474
      %v1476 = vpop.f32.mrb[0].mxu0
      %1477 = vmatprep.mubr.bf16.mxu0 0
      %1478 = vmatmul.mubr.bf16.gmra.mrb[0].mxu0 %v1231
      %v1479 = vpop.f32.mrb[0].mxu0
      %v1480 = vpop.f32.mrb[0].mxu0
      %v1481 = vpop.f32.mrb[0].mxu0
      %v1482 = vpop.f32.mrb[0].mxu0
      %1483 = vmatprep.mubr.bf16.mxu0 0
      %1484 = vmatmul.mubr.bf16.gmra.mrb[0].mxu0 %v1233
      %v1485 = vpop.f32.mrb[0].mxu0
      %v1486 = vadd.f32 0.0, %v1485
      %v1487 = vpop.f32.mrb[0].mxu0
      %v1488 = vpop.f32.mrb[0].mxu0
      %v1489 = vadd.f32 0.0, %v1488
      %v1490 = vpop.f32.mrb[0].mxu0
      %1491 = vmatprep.mubr.bf16.mxu0 0
      %1492 = vmatmul.mubr.bf16.gmra.mrb[0].mxu0 %v1235
      %v1493 = vpop.f32.mrb[0].mxu0
      %v1494 = vpop.f32.mrb[0].mxu0
      %v1495 = vpop.f32.mrb[0].mxu0
      %v1496 = vpop.f32.mrb[0].mxu0
      %1497 = vdwg.mxu0
      %s1498 = scalar_lea.vmem %s1, 8
      %v1499 = vld [vmem:[%s1498] sm:$0xf]
      %v1500 = vld [vmem:[%s1498 + $0x4] sm:$0x3]
      %v1503 = vunpack.c.l.b16 %v1499
      %v1504 = vunpack.c.l.b16 %v1500
      %v1505 = vpack.c.b16 %v1504, %v1503
      %v1507 = vsel %vm1237, %v1505, 0
      %1509 = vmatprep.subr.bf16.mxu0 0
      %1510 = vmatpush1.bf16.msra.mxu0 %v1507
      %1511 = vmatprep.subr.bf16.mxu0 0
      %1512 = vmatpush1.bf16.msra.mxu0 0
      %1513 = vmatprep.subr.bf16.mxu0 0
      %1514 = vmatpush1.bf16.msra.mxu0 0
      %1515 = vmatprep.subr.bf16.mxu0 0
      %1516 = vmatpush1.bf16.msra.mxu0 0
      %1517 = vmatprep.subr.bf16.mxu0 0
      %1518 = vmatpush1.bf16.msra.mxu0 0
      %1519 = vmatprep.subr.bf16.mxu0 0
      %1520 = vmatpush1.bf16.msra.mxu0 0
      %1521 = vmatprep.subr.bf16.mxu0 0
      %1522 = vmatpush1.bf16.msra.mxu0 0
      %1523 = vmatprep.subr.bf16.mxu0 0
      %1524 = vmatpush1.bf16.msra.mxu0 0
      %1525 = vmatprep.subr.bf16.mxu0 0
      %1526 = vmatpush1.bf16.msra.mxu0 0
      %1527 = vmatprep.subr.bf16.mxu0 0
      %1528 = vmatpush1.bf16.msra.mxu0 0
      %1529 = vmatprep.subr.bf16.mxu0 0
      %1530 = vmatpush1.bf16.msra.mxu0 0
      %1531 = vmatprep.subr.bf16.mxu0 0
      %1532 = vmatpush1.bf16.msra.mxu0 0
      %1533 = vmatprep.subr.bf16.mxu0 0
      %1534 = vmatpush1.bf16.msra.mxu0 0
      %1535 = vmatprep.subr.bf16.mxu0 0
      %1536 = vmatpush1.bf16.msra.mxu0 0
      %1537 = vmatprep.subr.bf16.mxu0 0
      %1538 = vmatpush1.bf16.msra.mxu0 0
      %1539 = vmatprep.subr.bf16.mxu0 0
      %1540 = vmatpush1.bf16.msra.mxu0 0
      %1541 = vmatprep.mubr.bf16.mxu0 0
      %1542 = vmatmul.mubr.bf16.gmra.mrb[0].mxu0 %v1173
      %v1543 = vpop.f32.mrb[0].mxu0
      %v1544 = vadd.f32 0.0, %v1543
      %v1545 = vpop.f32.mrb[0].mxu0
      %v1546 = vpop.f32.mrb[0].mxu0
      %v1547 = vadd.f32 0.0, %v1546
      %v1548 = vpop.f32.mrb[0].mxu0
      %1549 = vmatprep.mubr.bf16.mxu0 0
      %1550 = vmatmul.mubr.bf16.gmra.mrb[0].mxu0 %v1175
      %v1551 = vpop.f32.mrb[0].mxu0
      %v1552 = vadd.f32 0.0, %v1551
      %v1553 = vpop.f32.mrb[0].mxu0
      %v1554 = vpop.f32.mrb[0].mxu0
      %v1555 = vpop.f32.mrb[0].mxu0
      %1556 = vmatprep.mubr.bf16.mxu0 0
      %1557 = vmatmul.mubr.bf16.gmra.mrb[0].mxu0 %v1177
      %v1558 = vpop.f32.mrb[0].mxu0
      %v1559 = vadd.f32 0.0, %v1558
      %v1560 = vpop.f32.mrb[0].mxu0
      %v1561 = vpop.f32.mrb[0].mxu0
      %v1562 = vadd.f32 0.0, %v1561
      %v1563 = vpop.f32.mrb[0].mxu0
      %1564 = vmatprep.mubr.bf16.mxu0 0
      %1565 = vmatmul.mubr.bf16.gmra.mrb[0].mxu0 %v1179
      %v1566 = vpop.f32.mrb[0].mxu0
      %v1567 = vadd.f32 0.0, %v1566
      %v1568 = vpop.f32.mrb[0].mxu0
      %v1569 = vpop.f32.mrb[0].mxu0
      %v1570 = vpop.f32.mrb[0].mxu0
      %1571 = vmatprep.mubr.bf16.mxu0 0
      %1572 = vmatmul.mubr.bf16.gmra.mrb[0].mxu0 %v1181
      %v1573 = vpop.f32.mrb[0].mxu0
      %v1574 = vadd.f32 0.0, %v1573
      %v1575 = vpop.f32.mrb[0].mxu0
      %v1576 = vpop.f32.mrb[0].mxu0
      %v1577 = vadd.f32 0.0, %v1576
      %v1578 = vpop.f32.mrb[0].mxu0
      %1579 = vmatprep.mubr.bf16.mxu0 0
      %1580 = vmatmul.mubr.bf16.gmra.mrb[0].mxu0 %v1183
      %v1581 = vpop.f32.mrb[0].mxu0
      %v1582 = vadd.f32 0.0, %v1581
      %v1583 = vpop.f32.mrb[0].mxu0
      %v1584 = vpop.f32.mrb[0].mxu0
      %v1585 = vpop.f32.mrb[0].mxu0
      %1586 = vmatprep.mubr.bf16.mxu0 0
      %1587 = vmatmul.mubr.bf16.gmra.mrb[0].mxu0 %v1185
      %v1588 = vpop.f32.mrb[0].mxu0
      %v1589 = vadd.f32 0.0, %v1588
      %v1590 = vpop.f32.mrb[0].mxu0
      %v1591 = vpop.f32.mrb[0].mxu0
      %v1592 = vadd.f32 0.0, %v1591
      %v1593 = vpop.f32.mrb[0].mxu0
      %1594 = vmatprep.mubr.bf16.mxu0 0
      %1595 = vmatmul.mubr.bf16.gmra.mrb[0].mxu0 %v1187
      %v1596 = vpop.f32.mrb[0].mxu0
      %v1597 = vadd.f32 0.0, %v1596
      %v1598 = vpop.f32.mrb[0].mxu0
      %v1599 = vpop.f32.mrb[0].mxu0
      %v1600 = vpop.f32.mrb[0].mxu0
      %1601 = vmatprep.mubr.bf16.mxu0 0
      %1602 = vmatmul.mubr.bf16.gmra.mrb[0].mxu0 %v1189
      %v1603 = vpop.f32.mrb[0].mxu0
      %v1604 = vadd.f32 0.0, %v1603
      %v1605 = vpop.f32.mrb[0].mxu0
      %v1606 = vpop.f32.mrb[0].mxu0
      %v1607 = vadd.f32 0.0, %v1606
      %v1608 = vpop.f32.mrb[0].mxu0
      %1609 = vmatprep.mubr.bf16.mxu0 0
      %1610 = vmatmul.mubr.bf16.gmra.mrb[0].mxu0 %v1191
      %v1611 = vpop.f32.mrb[0].mxu0
      %v1612 = vadd.f32 0.0, %v1611
      %v1613 = vpop.f32.mrb[0].mxu0
      %v1614 = vpop.f32.mrb[0].mxu0
      %v1615 = vpop.f32.mrb[0].mxu0
      %1616 = vmatprep.mubr.bf16.mxu0 0
      %1617 = vmatmul.mubr.bf16.gmra.mrb[0].mxu0 %v1193
      %v1618 = vpop.f32.mrb[0].mxu0
      %v1619 = vadd.f32 0.0, %v1618
      %v1620 = vpop.f32.mrb[0].mxu0
      %v1621 = vpop.f32.mrb[0].mxu0
      %v1622 = vadd.f32 0.0, %v1621
      %v1623 = vpop.f32.mrb[0].mxu0
      %1624 = vmatprep.mubr.bf16.mxu0 0
      %1625 = vmatmul.mubr.bf16.gmra.mrb[0].mxu0 %v1195
      %v1626 = vpop.f32.mrb[0].mxu0
      %v1627 = vadd.f32 0.0, %v1626
      %v1628 = vpop.f32.mrb[0].mxu0
      %v1629 = vpop.f32.mrb[0].mxu0
      %v1630 = vpop.f32.mrb[0].mxu0
      %1631 = vmatprep.mubr.bf16.mxu0 0
      %1632 = vmatmul.mubr.bf16.gmra.mrb[0].mxu0 %v1197
      %v1633 = vpop.f32.mrb[0].mxu0
      %v1634 = vadd.f32 0.0, %v1633
      %v1635 = vpop.f32.mrb[0].mxu0
      %v1636 = vpop.f32.mrb[0].mxu0
      %v1637 = vadd.f32 0.0, %v1636
      %v1638 = vpop.f32.mrb[0].mxu0
      %1639 = vmatprep.mubr.bf16.mxu0 0
      %1640 = vmatmul.mubr.bf16.gmra.mrb[0].mxu0 %v1199
      %v1641 = vpop.f32.mrb[0].mxu0
      %v1642 = vadd.f32 0.0, %v1641
      %v1643 = vpop.f32.mrb[0].mxu0
      %v1644 = vpop.f32.mrb[0].mxu0
      %v1645 = vpop.f32.mrb[0].mxu0
      %1646 = vmatprep.mubr.bf16.mxu0 0
      %1647 = vmatmul.mubr.bf16.gmra.mrb[0].mxu0 %v1201
      %v1648 = vpop.f32.mrb[0].mxu0
      %v1649 = vadd.f32 0.0, %v1648
      %v1650 = vpop.f32.mrb[0].mxu0
      %v1651 = vpop.f32.mrb[0].mxu0
      %v1652 = vadd.f32 0.0, %v1651
      %v1653 = vpop.f32.mrb[0].mxu0
      %1654 = vmatprep.mubr.bf16.mxu0 0
      %1655 = vmatmul.mubr.bf16.gmra.mrb[0].mxu0 %v1203
      %v1656 = vpop.f32.mrb[0].mxu0
      %v1657 = vadd.f32 0.0, %v1656
      %v1658 = vpop.f32.mrb[0].mxu0
      %v1659 = vpop.f32.mrb[0].mxu0
      %v1660 = vpop.f32.mrb[0].mxu0
      %1661 = vmatprep.mubr.bf16.mxu0 0
      %1662 = vmatmul.mubr.bf16.gmra.mrb[0].mxu0 %v1205
      %v1663 = vpop.f32.mrb[0].mxu0
      %v1664 = vadd.f32 0.0, %v1663
      %v1665 = vpop.f32.mrb[0].mxu0
      %v1666 = vpop.f32.mrb[0].mxu0
      %v1667 = vadd.f32 0.0, %v1666
      %v1668 = vpop.f32.mrb[0].mxu0
      %1669 = vmatprep.mubr.bf16.mxu0 0
      %1670 = vmatmul.mubr.bf16.gmra.mrb[0].mxu0 %v1207
      %v1671 = vpop.f32.mrb[0].mxu0
      %v1672 = vadd.f32 0.0, %v1671
      %v1673 = vpop.f32.mrb[0].mxu0
      %v1674 = vpop.f32.mrb[0].mxu0
      %v1675 = vpop.f32.mrb[0].mxu0
      %1676 = vmatprep.mubr.bf16.mxu0 0
      %1677 = vmatmul.mubr.bf16.gmra.mrb[0].mxu0 %v1209
      %v1678 = vpop.f32.mrb[0].mxu0
      %v1679 = vadd.f32 0.0, %v1678
      %v1680 = vpop.f32.mrb[0].mxu0
      %v1681 = vpop.f32.mrb[0].mxu0
      %v1682 = vadd.f32 0.0, %v1681
      %v1683 = vpop.f32.mrb[0].mxu0
      %1684 = vmatprep.mubr.bf16.mxu0 0
      %1685 = vmatmul.mubr.bf16.gmra.mrb[0].mxu0 %v1211
      %v1686 = vpop.f32.mrb[0].mxu0
      %v1687 = vadd.f32 0.0, %v1686
      %v1688 = vpop.f32.mrb[0].mxu0
      %v1689 = vpop.f32.mrb[0].mxu0
      %v1690 = vpop.f32.mrb[0].mxu0
      %1691 = vmatprep.mubr.bf16.mxu0 0
      %1692 = vmatmul.mubr.bf16.gmra.mrb[0].mxu0 %v1213
      %v1693 = vpop.f32.mrb[0].mxu0
      %v1694 = vadd.f32 0.0, %v1693
      %v1695 = vpop.f32.mrb[0].mxu0
      %v1696 = vpop.f32.mrb[0].mxu0
      %v1697 = vadd.f32 0.0, %v1696
      %v1698 = vpop.f32.mrb[0].mxu0
      %1699 = vmatprep.mubr.bf16.mxu0 0
      %1700 = vmatmul.mubr.bf16.gmra.mrb[0].mxu0 %v1215
      %v1701 = vpop.f32.mrb[0].mxu0
      %v1702 = vadd.f32 0.0, %v1701
      %v1703 = vpop.f32.mrb[0].mxu0
      %v1704 = vpop.f32.mrb[0].mxu0
      %v1705 = vpop.f32.mrb[0].mxu0
      %1706 = vmatprep.mubr.bf16.mxu0 0
      %1707 = vmatmul.mubr.bf16.gmra.mrb[0].mxu0 %v1217
      %v1708 = vpop.f32.mrb[0].mxu0
      %v1709 = vadd.f32 0.0, %v1708
      %v1710 = vpop.f32.mrb[0].mxu0
      %v1711 = vpop.f32.mrb[0].mxu0
      %v1712 = vadd.f32 0.0, %v1711
      %v1713 = vpop.f32.mrb[0].mxu0
      %1714 = vmatprep.mubr.bf16.mxu0 0
      %1715 = vmatmul.mubr.bf16.gmra.mrb[0].mxu0 %v1219
      %v1716 = vpop.f32.mrb[0].mxu0
      %v1717 = vadd.f32 0.0, %v1716
      %v1718 = vpop.f32.mrb[0].mxu0
      %v1719 = vpop.f32.mrb[0].mxu0
      %v1720 = vpop.f32.mrb[0].mxu0
      %1721 = vmatprep.mubr.bf16.mxu0 0
      %1722 = vmatmul.mubr.bf16.gmra.mrb[0].mxu0 %v1221
      %v1723 = vpop.f32.mrb[0].mxu0
      %v1724 = vadd.f32 0.0, %v1723
      %v1725 = vpop.f32.mrb[0].mxu0
      %v1726 = vpop.f32.mrb[0].mxu0
      %v1727 = vadd.f32 0.0, %v1726
      %v1728 = vpop.f32.mrb[0].mxu0
      %1729 = vmatprep.mubr.bf16.mxu0 0
      %1730 = vmatmul.mubr.bf16.gmra.mrb[0].mxu0 %v1223
      %v1731 = vpop.f32.mrb[0].mxu0
      %v1732 = vadd.f32 0.0, %v1731
      %v1733 = vpop.f32.mrb[0].mxu0
      %v1734 = vpop.f32.mrb[0].mxu0
      %v1735 = vpop.f32.mrb[0].mxu0
      %1736 = vmatprep.mubr.bf16.mxu0 0
      %1737 = vmatmul.mubr.bf16.gmra.mrb[0].mxu0 %v1225
      %v1738 = vpop.f32.mrb[0].mxu0
      %v1739 = vadd.f32 0.0, %v1738
      %v1740 = vpop.f32.mrb[0].mxu0
      %v1741 = vpop.f32.mrb[0].mxu0
      %v1742 = vadd.f32 0.0, %v1741
      %v1743 = vpop.f32.mrb[0].mxu0
      %1744 = vmatprep.mubr.bf16.mxu0 0
      %1745 = vmatmul.mubr.bf16.gmra.mrb[0].mxu0 %v1227
      %v1746 = vpop.f32.mrb[0].mxu0
      %v1747 = vadd.f32 0.0, %v1746
      %v1748 = vpop.f32.mrb[0].mxu0
      %v1749 = vpop.f32.mrb[0].mxu0
      %v1750 = vpop.f32.mrb[0].mxu0
      %1751 = vmatprep.mubr.bf16.mxu0 0
      %1752 = vmatmul.mubr.bf16.gmra.mrb[0].mxu0 %v1229
      %v1753 = vpop.f32.mrb[0].mxu0
      %v1754 = vadd.f32 0.0, %v1753
      %v1755 = vpop.f32.mrb[0].mxu0
      %v1756 = vpop.f32.mrb[0].mxu0
      %v1757 = vadd.f32 0.0, %v1756
      %v1758 = vpop.f32.mrb[0].mxu0
      %1759 = vmatprep.mubr.bf16.mxu0 0
      %1760 = vmatmul.mubr.bf16.gmra.mrb[0].mxu0 %v1231
      %v1761 = vpop.f32.mrb[0].mxu0
      %v1762 = vadd.f32 0.0, %v1761
      %v1763 = vpop.f32.mrb[0].mxu0
      %v1764 = vpop.f32.mrb[0].mxu0
      %v1765 = vpop.f32.mrb[0].mxu0
      %1766 = vmatprep.mubr.bf16.mxu0 0
      %1767 = vmatmul.mubr.bf16.gmra.mrb[0].mxu0 %v1233
      %v1768 = vpop.f32.mrb[0].mxu0
      %v1769 = vadd.f32 0.0, %v1768
      %v1770 = vpop.f32.mrb[0].mxu0
      %v1771 = vpop.f32.mrb[0].mxu0
      %v1772 = vadd.f32 0.0, %v1771
      %v1773 = vpop.f32.mrb[0].mxu0
      %1774 = vmatprep.mubr.bf16.mxu0 0
      %1775 = vmatmul.mubr.bf16.gmra.mrb[0].mxu0 %v1235
      %v1776 = vpop.f32.mrb[0].mxu0
      %v1777 = vadd.f32 0.0, %v1776
      %v1778 = vpop.f32.mrb[0].mxu0
      %v1779 = vpop.f32.mrb[0].mxu0
      %v1780 = vpop.f32.mrb[0].mxu0
      %1781 = vdwg.mxu0
      %vm1830 = vcmask 1046528
      %v1831 = vrot.slane %v1544, 1
      %v1832 = vrot.slane %v1547, 1
      %v1833 = vsel %vm1830, %v1831, %v1832
      %v1834 = vrot.slane %v1552, 1
      %v1835 = vsel %vm1830, %v1832, %v1834
      %v1836 = vrot.slane %v1559, 1
      %v1837 = vrot.slane %v1562, 1
      %v1838 = vsel %vm1830, %v1836, %v1837
      %v1839 = vrot.slane %v1567, 1
      %v1840 = vsel %vm1830, %v1837, %v1839
      %v1841 = vrot.slane %v1574, 1
      %v1842 = vrot.slane %v1577, 1
      %v1843 = vsel %vm1830, %v1841, %v1842
      %v1844 = vrot.slane %v1582, 1
      %v1845 = vsel %vm1830, %v1842, %v1844
      %v1846 = vrot.slane %v1589, 1
      %v1847 = vrot.slane %v1592, 1
      %v1848 = vsel %vm1830, %v1846, %v1847
      %v1849 = vrot.slane %v1597, 1
      %v1850 = vsel %vm1830, %v1847, %v1849
      %v1851 = vrot.slane %v1604, 1
      %v1852 = vrot.slane %v1607, 1
      %v1853 = vsel %vm1830, %v1851, %v1852
      %v1854 = vrot.slane %v1612, 1
      %v1855 = vsel %vm1830, %v1852, %v1854
      %v1856 = vrot.slane %v1619, 1
      %v1857 = vrot.slane %v1622, 1
      %v1858 = vsel %vm1830, %v1856, %v1857
      %v1859 = vrot.slane %v1627, 1
      %v1860 = vsel %vm1830, %v1857, %v1859
      %v1861 = vrot.slane %v1634, 1
      %v1862 = vrot.slane %v1637, 1
      %v1863 = vsel %vm1830, %v1861, %v1862
      %v1864 = vrot.slane %v1642, 1
      %v1865 = vsel %vm1830, %v1862, %v1864
      %v1866 = vrot.slane %v1649, 1
      %v1867 = vrot.slane %v1652, 1
      %v1868 = vsel %vm1830, %v1866, %v1867
      %v1869 = vrot.slane %v1657, 1
      %v1870 = vsel %vm1830, %v1867, %v1869
      %v1871 = vrot.slane %v1664, 1
      %v1872 = vrot.slane %v1667, 1
      %v1873 = vsel %vm1830, %v1871, %v1872
      %v1874 = vrot.slane %v1672, 1
      %v1875 = vsel %vm1830, %v1872, %v1874
      %v1876 = vrot.slane %v1679, 1
      %v1877 = vrot.slane %v1682, 1
      %v1878 = vsel %vm1830, %v1876, %v1877
      %v1879 = vrot.slane %v1687, 1
      %v1880 = vsel %vm1830, %v1877, %v1879
      %v1881 = vrot.slane %v1694, 1
      %v1882 = vrot.slane %v1697, 1
      %v1883 = vsel %vm1830, %v1881, %v1882
      %v1884 = vrot.slane %v1702, 1
      %v1885 = vsel %vm1830, %v1882, %v1884
      %v1886 = vrot.slane %v1709, 1
      %v1887 = vrot.slane %v1712, 1
      %v1888 = vsel %vm1830, %v1886, %v1887
      %v1889 = vrot.slane %v1717, 1
      %v1890 = vsel %vm1830, %v1887, %v1889
      %v1891 = vrot.slane %v1724, 1
      %v1892 = vrot.slane %v1727, 1
      %v1893 = vsel %vm1830, %v1891, %v1892
      %v1894 = vrot.slane %v1732, 1
      %v1895 = vsel %vm1830, %v1892, %v1894
      %v1896 = vrot.slane %v1739, 1
      %v1897 = vrot.slane %v1742, 1
      %v1898 = vsel %vm1830, %v1896, %v1897
      %v1899 = vrot.slane %v1747, 1
      %v1900 = vsel %vm1830, %v1897, %v1899
      %v1901 = vrot.slane %v1754, 1
      %v1902 = vrot.slane %v1757, 1
      %v1903 = vsel %vm1830, %v1901, %v1902
      %v1904 = vrot.slane %v1762, 1
      %v1905 = vsel %vm1830, %v1902, %v1904
      %v1906 = vrot.slane %v1769, 1
      %v1907 = vrot.slane %v1772, 1
      %v1908 = vsel %vm1830, %v1906, %v1907
      %v1909 = vrot.slane %v1777, 1
      %v1910 = vsel %vm1830, %v1907, %v1909
      %v1943 = vadd.f32 %v1276, %v1833
      %v1944 = vadd.f32 %v1279, %v1835
      %v1945 = vadd.f32 %v1290, %v1838
      %v1946 = vadd.f32 %v1293, %v1840
      %v1947 = vadd.f32 %v1304, %v1843
      %v1948 = vadd.f32 %v1307, %v1845
      %v1949 = vadd.f32 %v1318, %v1848
      %v1950 = vadd.f32 %v1321, %v1850
      %v1951 = vadd.f32 %v1332, %v1853
      %v1952 = vadd.f32 %v1335, %v1855
      %v1953 = vadd.f32 %v1346, %v1858
      %v1954 = vadd.f32 %v1349, %v1860
      %v1955 = vadd.f32 %v1360, %v1863
      %v1956 = vadd.f32 %v1363, %v1865
      %v1957 = vadd.f32 %v1374, %v1868
      %v1958 = vadd.f32 %v1377, %v1870
      %v1959 = vadd.f32 %v1388, %v1873
      %v1960 = vadd.f32 %v1391, %v1875
      %v1961 = vadd.f32 %v1402, %v1878
      %v1962 = vadd.f32 %v1405, %v1880
      %v1963 = vadd.f32 %v1416, %v1883
      %v1964 = vadd.f32 %v1419, %v1885
      %v1965 = vadd.f32 %v1430, %v1888
      %v1966 = vadd.f32 %v1433, %v1890
      %v1967 = vadd.f32 %v1444, %v1893
      %v1968 = vadd.f32 %v1447, %v1895
      %v1969 = vadd.f32 %v1458, %v1898
      %v1970 = vadd.f32 %v1461, %v1900
      %v1971 = vadd.f32 %v1472, %v1903
      %v1972 = vadd.f32 %v1475, %v1905
      %v1973 = vadd.f32 %v1486, %v1908
      %v1974 = vadd.f32 %v1489, %v1910
      %s1975 = scalar_lea.vmem %s1, 16
      %v1976 = vld [vmem:[%s1975] sm:$0xf]
      %v1977 = vld [vmem:[%s1975 + $0x4] sm:$0x3]
      %v1980 = vunpack.c.l.b16 %v1976
      %v1981 = vunpack.c.l.b16 %v1977
      %v1982 = vpack.c.b16 %v1981, %v1980
      %v1984 = vsel %vm1237, %v1982, 0
      %1986 = vmatprep.subr.bf16.mxu0 0
      %1987 = vmatpush1.bf16.msra.mxu0 %v1984
      %1988 = vmatprep.subr.bf16.mxu0 0
      %1989 = vmatpush1.bf16.msra.mxu0 0
      %1990 = vmatprep.subr.bf16.mxu0 0
      %1991 = vmatpush1.bf16.msra.mxu0 0
      %1992 = vmatprep.subr.bf16.mxu0 0
      %1993 = vmatpush1.bf16.msra.mxu0 0
      %1994 = vmatprep.subr.bf16.mxu0 0
      %1995 = vmatpush1.bf16.msra.mxu0 0
      %1996 = vmatprep.subr.bf16.mxu0 0
      %1997 = vmatpush1.bf16.msra.mxu0 0
      %1998 = vmatprep.subr.bf16.mxu0 0
      %1999 = vmatpush1.bf16.msra.mxu0 0
      %2000 = vmatprep.subr.bf16.mxu0 0
      %2001 = vmatpush1.bf16.msra.mxu0 0
      %2002 = vmatprep.subr.bf16.mxu0 0
      %2003 = vmatpush1.bf16.msra.mxu0 0
      %2004 = vmatprep.subr.bf16.mxu0 0
      %2005 = vmatpush1.bf16.msra.mxu0 0
      %2006 = vmatprep.subr.bf16.mxu0 0
      %2007 = vmatpush1.bf16.msra.mxu0 0
      %2008 = vmatprep.subr.bf16.mxu0 0
      %2009 = vmatpush1.bf16.msra.mxu0 0
      %2010 = vmatprep.subr.bf16.mxu0 0
      %2011 = vmatpush1.bf16.msra.mxu0 0
      %2012 = vmatprep.subr.bf16.mxu0 0
      %2013 = vmatpush1.bf16.msra.mxu0 0
      %2014 = vmatprep.subr.bf16.mxu0 0
      %2015 = vmatpush1.bf16.msra.mxu0 0
      %2016 = vmatprep.subr.bf16.mxu0 0
      %2017 = vmatpush1.bf16.msra.mxu0 0
      %2018 = vmatprep.mubr.bf16.mxu0 0
      %2019 = vmatmul.mubr.bf16.gmra.mrb[0].mxu0 %v1173
      %v2020 = vpop.f32.mrb[0].mxu0
      %v2021 = vadd.f32 0.0, %v2020
      %v2022 = vpop.f32.mrb[0].mxu0
      %v2023 = vpop.f32.mrb[0].mxu0
      %v2024 = vadd.f32 0.0, %v2023
      %v2025 = vpop.f32.mrb[0].mxu0
      %2026 = vmatprep.mubr.bf16.mxu0 0
      %2027 = vmatmul.mubr.bf16.gmra.mrb[0].mxu0 %v1175
      %v2028 = vpop.f32.mrb[0].mxu0
      %v2029 = vadd.f32 0.0, %v2028
      %v2030 = vpop.f32.mrb[0].mxu0
      %v2031 = vpop.f32.mrb[0].mxu0
      %v2032 = vpop.f32.mrb[0].mxu0
      %2033 = vmatprep.mubr.bf16.mxu0 0
      %2034 = vmatmul.mubr.bf16.gmra.mrb[0].mxu0 %v1177
      %v2035 = vpop.f32.mrb[0].mxu0
      %v2036 = vadd.f32 0.0, %v2035
      %v2037 = vpop.f32.mrb[0].mxu0
      %v2038 = vpop.f32.mrb[0].mxu0
      %v2039 = vadd.f32 0.0, %v2038
      %v2040 = vpop.f32.mrb[0].mxu0
      %2041 = vmatprep.mubr.bf16.mxu0 0
      %2042 = vmatmul.mubr.bf16.gmra.mrb[0].mxu0 %v1179
      %v2043 = vpop.f32.mrb[0].mxu0
      %v2044 = vadd.f32 0.0, %v2043
      %v2045 = vpop.f32.mrb[0].mxu0
      %v2046 = vpop.f32.mrb[0].mxu0
      %v2047 = vpop.f32.mrb[0].mxu0
      %2048 = vmatprep.mubr.bf16.mxu0 0
      %2049 = vmatmul.mubr.bf16.gmra.mrb[0].mxu0 %v1181
      %v2050 = vpop.f32.mrb[0].mxu0
      %v2051 = vadd.f32 0.0, %v2050
      %v2052 = vpop.f32.mrb[0].mxu0
      %v2053 = vpop.f32.mrb[0].mxu0
      %v2054 = vadd.f32 0.0, %v2053
      %v2055 = vpop.f32.mrb[0].mxu0
      %2056 = vmatprep.mubr.bf16.mxu0 0
      %2057 = vmatmul.mubr.bf16.gmra.mrb[0].mxu0 %v1183
      %v2058 = vpop.f32.mrb[0].mxu0
      %v2059 = vadd.f32 0.0, %v2058
      %v2060 = vpop.f32.mrb[0].mxu0
      %v2061 = vpop.f32.mrb[0].mxu0
      %v2062 = vpop.f32.mrb[0].mxu0
      %2063 = vmatprep.mubr.bf16.mxu0 0
      %2064 = vmatmul.mubr.bf16.gmra.mrb[0].mxu0 %v1185
      %v2065 = vpop.f32.mrb[0].mxu0
      %v2066 = vadd.f32 0.0, %v2065
      %v2067 = vpop.f32.mrb[0].mxu0
      %v2068 = vpop.f32.mrb[0].mxu0
      %v2069 = vadd.f32 0.0, %v2068
      %v2070 = vpop.f32.mrb[0].mxu0
      %2071 = vmatprep.mubr.bf16.mxu0 0
      %2072 = vmatmul.mubr.bf16.gmra.mrb[0].mxu0 %v1187
      %v2073 = vpop.f32.mrb[0].mxu0
      %v2074 = vadd.f32 0.0, %v2073
      %v2075 = vpop.f32.mrb[0].mxu0
      %v2076 = vpop.f32.mrb[0].mxu0
      %v2077 = vpop.f32.mrb[0].mxu0
      %2078 = vmatprep.mubr.bf16.mxu0 0
      %2079 = vmatmul.mubr.bf16.gmra.mrb[0].mxu0 %v1189
      %v2080 = vpop.f32.mrb[0].mxu0
      %v2081 = vadd.f32 0.0, %v2080
      %v2082 = vpop.f32.mrb[0].mxu0
      %v2083 = vpop.f32.mrb[0].mxu0
      %v2084 = vadd.f32 0.0, %v2083
      %v2085 = vpop.f32.mrb[0].mxu0
      %2086 = vmatprep.mubr.bf16.mxu0 0
      %2087 = vmatmul.mubr.bf16.gmra.mrb[0].mxu0 %v1191
      %v2088 = vpop.f32.mrb[0].mxu0
      %v2089 = vadd.f32 0.0, %v2088
      %v2090 = vpop.f32.mrb[0].mxu0
      %v2091 = vpop.f32.mrb[0].mxu0
      %v2092 = vpop.f32.mrb[0].mxu0
      %2093 = vmatprep.mubr.bf16.mxu0 0
      %2094 = vmatmul.mubr.bf16.gmra.mrb[0].mxu0 %v1193
      %v2095 = vpop.f32.mrb[0].mxu0
      %v2096 = vadd.f32 0.0, %v2095
      %v2097 = vpop.f32.mrb[0].mxu0
      %v2098 = vpop.f32.mrb[0].mxu0
      %v2099 = vadd.f32 0.0, %v2098
      %v2100 = vpop.f32.mrb[0].mxu0
      %2101 = vmatprep.mubr.bf16.mxu0 0
      %2102 = vmatmul.mubr.bf16.gmra.mrb[0].mxu0 %v1195
      %v2103 = vpop.f32.mrb[0].mxu0
      %v2104 = vadd.f32 0.0, %v2103
      %v2105 = vpop.f32.mrb[0].mxu0
      %v2106 = vpop.f32.mrb[0].mxu0
      %v2107 = vpop.f32.mrb[0].mxu0
      %2108 = vmatprep.mubr.bf16.mxu0 0
      %2109 = vmatmul.mubr.bf16.gmra.mrb[0].mxu0 %v1197
      %v2110 = vpop.f32.mrb[0].mxu0
      %v2111 = vadd.f32 0.0, %v2110
      %v2112 = vpop.f32.mrb[0].mxu0
      %v2113 = vpop.f32.mrb[0].mxu0
      %v2114 = vadd.f32 0.0, %v2113
      %v2115 = vpop.f32.mrb[0].mxu0
      %2116 = vmatprep.mubr.bf16.mxu0 0
      %2117 = vmatmul.mubr.bf16.gmra.mrb[0].mxu0 %v1199
      %v2118 = vpop.f32.mrb[0].mxu0
      %v2119 = vadd.f32 0.0, %v2118
      %v2120 = vpop.f32.mrb[0].mxu0
      %v2121 = vpop.f32.mrb[0].mxu0
      %v2122 = vpop.f32.mrb[0].mxu0
      %2123 = vmatprep.mubr.bf16.mxu0 0
      %2124 = vmatmul.mubr.bf16.gmra.mrb[0].mxu0 %v1201
      %v2125 = vpop.f32.mrb[0].mxu0
      %v2126 = vadd.f32 0.0, %v2125
      %v2127 = vpop.f32.mrb[0].mxu0
      %v2128 = vpop.f32.mrb[0].mxu0
      %v2129 = vadd.f32 0.0, %v2128
      %v2130 = vpop.f32.mrb[0].mxu0
      %2131 = vmatprep.mubr.bf16.mxu0 0
      %2132 = vmatmul.mubr.bf16.gmra.mrb[0].mxu0 %v1203
      %v2133 = vpop.f32.mrb[0].mxu0
      %v2134 = vadd.f32 0.0, %v2133
      %v2135 = vpop.f32.mrb[0].mxu0
      %v2136 = vpop.f32.mrb[0].mxu0
      %v2137 = vpop.f32.mrb[0].mxu0
      %2138 = vmatprep.mubr.bf16.mxu0 0
      %2139 = vmatmul.mubr.bf16.gmra.mrb[0].mxu0 %v1205
      %v2140 = vpop.f32.mrb[0].mxu0
      %v2141 = vadd.f32 0.0, %v2140
      %v2142 = vpop.f32.mrb[0].mxu0
      %v2143 = vpop.f32.mrb[0].mxu0
      %v2144 = vadd.f32 0.0, %v2143
      %v2145 = vpop.f32.mrb[0].mxu0
      %2146 = vmatprep.mubr.bf16.mxu0 0
      %2147 = vmatmul.mubr.bf16.gmra.mrb[0].mxu0 %v1207
      %v2148 = vpop.f32.mrb[0].mxu0
      %v2149 = vadd.f32 0.0, %v2148
      %v2150 = vpop.f32.mrb[0].mxu0
      %v2151 = vpop.f32.mrb[0].mxu0
      %v2152 = vpop.f32.mrb[0].mxu0
      %2153 = vmatprep.mubr.bf16.mxu0 0
      %2154 = vmatmul.mubr.bf16.gmra.mrb[0].mxu0 %v1209
      %v2155 = vpop.f32.mrb[0].mxu0
      %v2156 = vadd.f32 0.0, %v2155
      %v2157 = vpop.f32.mrb[0].mxu0
      %v2158 = vpop.f32.mrb[0].mxu0
      %v2159 = vadd.f32 0.0, %v2158
      %v2160 = vpop.f32.mrb[0].mxu0
      %2161 = vmatprep.mubr.bf16.mxu0 0
      %2162 = vmatmul.mubr.bf16.gmra.mrb[0].mxu0 %v1211
      %v2163 = vpop.f32.mrb[0].mxu0
      %v2164 = vadd.f32 0.0, %v2163
      %v2165 = vpop.f32.mrb[0].mxu0
      %v2166 = vpop.f32.mrb[0].mxu0
      %v2167 = vpop.f32.mrb[0].mxu0
      %2168 = vmatprep.mubr.bf16.mxu0 0
      %2169 = vmatmul.mubr.bf16.gmra.mrb[0].mxu0 %v1213
      %v2170 = vpop.f32.mrb[0].mxu0
      %v2171 = vadd.f32 0.0, %v2170
      %v2172 = vpop.f32.mrb[0].mxu0
      %v2173 = vpop.f32.mrb[0].mxu0
      %v2174 = vadd.f32 0.0, %v2173
      %v2175 = vpop.f32.mrb[0].mxu0
      %2176 = vmatprep.mubr.bf16.mxu0 0
      %2177 = vmatmul.mubr.bf16.gmra.mrb[0].mxu0 %v1215
      %v2178 = vpop.f32.mrb[0].mxu0
      %v2179 = vadd.f32 0.0, %v2178
      %v2180 = vpop.f32.mrb[0].mxu0
      %v2181 = vpop.f32.mrb[0].mxu0
      %v2182 = vpop.f32.mrb[0].mxu0
      %2183 = vmatprep.mubr.bf16.mxu0 0
      %2184 = vmatmul.mubr.bf16.gmra.mrb[0].mxu0 %v1217
      %v2185 = vpop.f32.mrb[0].mxu0
      %v2186 = vadd.f32 0.0, %v2185
      %v2187 = vpop.f32.mrb[0].mxu0
      %v2188 = vpop.f32.mrb[0].mxu0
      %v2189 = vadd.f32 0.0, %v2188
      %v2190 = vpop.f32.mrb[0].mxu0
      %2191 = vmatprep.mubr.bf16.mxu0 0
      %2192 = vmatmul.mubr.bf16.gmra.mrb[0].mxu0 %v1219
      %v2193 = vpop.f32.mrb[0].mxu0
      %v2194 = vadd.f32 0.0, %v2193
      %v2195 = vpop.f32.mrb[0].mxu0
      %v2196 = vpop.f32.mrb[0].mxu0
      %v2197 = vpop.f32.mrb[0].mxu0
      %2198 = vmatprep.mubr.bf16.mxu0 0
      %2199 = vmatmul.mubr.bf16.gmra.mrb[0].mxu0 %v1221
      %v2200 = vpop.f32.mrb[0].mxu0
      %v2201 = vadd.f32 0.0, %v2200
      %v2202 = vpop.f32.mrb[0].mxu0
      %v2203 = vpop.f32.mrb[0].mxu0
      %v2204 = vadd.f32 0.0, %v2203
      %v2205 = vpop.f32.mrb[0].mxu0
      %2206 = vmatprep.mubr.bf16.mxu0 0
      %2207 = vmatmul.mubr.bf16.gmra.mrb[0].mxu0 %v1223
      %v2208 = vpop.f32.mrb[0].mxu0
      %v2209 = vadd.f32 0.0, %v2208
      %v2210 = vpop.f32.mrb[0].mxu0
      %v2211 = vpop.f32.mrb[0].mxu0
      %v2212 = vpop.f32.mrb[0].mxu0
      %2213 = vmatprep.mubr.bf16.mxu0 0
      %2214 = vmatmul.mubr.bf16.gmra.mrb[0].mxu0 %v1225
      %v2215 = vpop.f32.mrb[0].mxu0
      %v2216 = vadd.f32 0.0, %v2215
      %v2217 = vpop.f32.mrb[0].mxu0
      %v2218 = vpop.f32.mrb[0].mxu0
      %v2219 = vadd.f32 0.0, %v2218
      %v2220 = vpop.f32.mrb[0].mxu0
      %2221 = vmatprep.mubr.bf16.mxu0 0
      %2222 = vmatmul.mubr.bf16.gmra.mrb[0].mxu0 %v1227
      %v2223 = vpop.f32.mrb[0].mxu0
      %v2224 = vadd.f32 0.0, %v2223
      %v2225 = vpop.f32.mrb[0].mxu0
      %v2226 = vpop.f32.mrb[0].mxu0
      %v2227 = vpop.f32.mrb[0].mxu0
      %2228 = vmatprep.mubr.bf16.mxu0 0
      %2229 = vmatmul.mubr.bf16.gmra.mrb[0].mxu0 %v1229
      %v2230 = vpop.f32.mrb[0].mxu0
      %v2231 = vadd.f32 0.0, %v2230
      %v2232 = vpop.f32.mrb[0].mxu0
      %v2233 = vpop.f32.mrb[0].mxu0
      %v2234 = vadd.f32 0.0, %v2233
      %v2235 = vpop.f32.mrb[0].mxu0
      %2236 = vmatprep.mubr.bf16.mxu0 0
      %2237 = vmatmul.mubr.bf16.gmra.mrb[0].mxu0 %v1231
      %v2238 = vpop.f32.mrb[0].mxu0
      %v2239 = vadd.f32 0.0, %v2238
      %v2240 = vpop.f32.mrb[0].mxu0
      %v2241 = vpop.f32.mrb[0].mxu0
      %v2242 = vpop.f32.mrb[0].mxu0
      %2243 = vmatprep.mubr.bf16.mxu0 0
      %2244 = vmatmul.mubr.bf16.gmra.mrb[0].mxu0 %v1233
      %v2245 = vpop.f32.mrb[0].mxu0
      %v2246 = vadd.f32 0.0, %v2245
      %v2247 = vpop.f32.mrb[0].mxu0
      %v2248 = vpop.f32.mrb[0].mxu0
      %v2249 = vadd.f32 0.0, %v2248
      %v2250 = vpop.f32.mrb[0].mxu0
      %2251 = vmatprep.mubr.bf16.mxu0 0
      %2252 = vmatmul.mubr.bf16.gmra.mrb[0].mxu0 %v1235
      %v2253 = vpop.f32.mrb[0].mxu0
      %v2254 = vadd.f32 0.0, %v2253
      %v2255 = vpop.f32.mrb[0].mxu0
      %v2256 = vpop.f32.mrb[0].mxu0
      %v2257 = vpop.f32.mrb[0].mxu0
      %2258 = vdwg.mxu0
      %v2307 = vrot.slane %v2021, 2
      %v2308 = vrot.slane %v2024, 2
      %v2309 = vsel %vm1237, %v2307, %v2308
      %v2310 = vrot.slane %v2029, 2
      %v2311 = vsel %vm1237, %v2308, %v2310
      %v2312 = vrot.slane %v2036, 2
      %v2313 = vrot.slane %v2039, 2
      %v2314 = vsel %vm1237, %v2312, %v2313
      %v2315 = vrot.slane %v2044, 2
      %v2316 = vsel %vm1237, %v2313, %v2315
      %v2317 = vrot.slane %v2051, 2
      %v2318 = vrot.slane %v2054, 2
      %v2319 = vsel %vm1237, %v2317, %v2318
      %v2320 = vrot.slane %v2059, 2
      %v2321 = vsel %vm1237, %v2318, %v2320
      %v2322 = vrot.slane %v2066, 2
      %v2323 = vrot.slane %v2069, 2
      %v2324 = vsel %vm1237, %v2322, %v2323
      %v2325 = vrot.slane %v2074, 2
      %v2326 = vsel %vm1237, %v2323, %v2325
      %v2327 = vrot.slane %v2081, 2
      %v2328 = vrot.slane %v2084, 2
      %v2329 = vsel %vm1237, %v2327, %v2328
      %v2330 = vrot.slane %v2089, 2
      %v2331 = vsel %vm1237, %v2328, %v2330
      %v2332 = vrot.slane %v2096, 2
      %v2333 = vrot.slane %v2099, 2
      %v2334 = vsel %vm1237, %v2332, %v2333
      %v2335 = vrot.slane %v2104, 2
      %v2336 = vsel %vm1237, %v2333, %v2335
      %v2337 = vrot.slane %v2111, 2
      %v2338 = vrot.slane %v2114, 2
      %v2339 = vsel %vm1237, %v2337, %v2338
      %v2340 = vrot.slane %v2119, 2
      %v2341 = vsel %vm1237, %v2338, %v2340
      %v2342 = vrot.slane %v2126, 2
      %v2343 = vrot.slane %v2129, 2
      %v2344 = vsel %vm1237, %v2342, %v2343
      %v2345 = vrot.slane %v2134, 2
      %v2346 = vsel %vm1237, %v2343, %v2345
      %v2347 = vrot.slane %v2141, 2
      %v2348 = vrot.slane %v2144, 2
      %v2349 = vsel %vm1237, %v2347, %v2348
      %v2350 = vrot.slane %v2149, 2
      %v2351 = vsel %vm1237, %v2348, %v2350
      %v2352 = vrot.slane %v2156, 2
      %v2353 = vrot.slane %v2159, 2
      %v2354 = vsel %vm1237, %v2352, %v2353
      %v2355 = vrot.slane %v2164, 2
      %v2356 = vsel %vm1237, %v2353, %v2355
      %v2357 = vrot.slane %v2171, 2
      %v2358 = vrot.slane %v2174, 2
      %v2359 = vsel %vm1237, %v2357, %v2358
      %v2360 = vrot.slane %v2179, 2
      %v2361 = vsel %vm1237, %v2358, %v2360
      %v2362 = vrot.slane %v2186, 2
      %v2363 = vrot.slane %v2189, 2
      %v2364 = vsel %vm1237, %v2362, %v2363
      %v2365 = vrot.slane %v2194, 2
      %v2366 = vsel %vm1237, %v2363, %v2365
      %v2367 = vrot.slane %v2201, 2
      %v2368 = vrot.slane %v2204, 2
      %v2369 = vsel %vm1237, %v2367, %v2368
      %v2370 = vrot.slane %v2209, 2
      %v2371 = vsel %vm1237, %v2368, %v2370
      %v2372 = vrot.slane %v2216, 2
      %v2373 = vrot.slane %v2219, 2
      %v2374 = vsel %vm1237, %v2372, %v2373
      %v2375 = vrot.slane %v2224, 2
      %v2376 = vsel %vm1237, %v2373, %v2375
      %v2377 = vrot.slane %v2231, 2
      %v2378 = vrot.slane %v2234, 2
      %v2379 = vsel %vm1237, %v2377, %v2378
      %v2380 = vrot.slane %v2239, 2
      %v2381 = vsel %vm1237, %v2378, %v2380
      %v2382 = vrot.slane %v2246, 2
      %v2383 = vrot.slane %v2249, 2
      %v2384 = vsel %vm1237, %v2382, %v2383
      %v2385 = vrot.slane %v2254, 2
      %v2386 = vsel %vm1237, %v2383, %v2385
      %v2419 = vadd.f32 %v1943, %v2309
      %v2420 = vadd.f32 %v1944, %v2311
      %v2421 = vadd.f32 %v1945, %v2314
      %v2422 = vadd.f32 %v1946, %v2316
      %v2423 = vadd.f32 %v1947, %v2319
      %v2424 = vadd.f32 %v1948, %v2321
      %v2425 = vadd.f32 %v1949, %v2324
      %v2426 = vadd.f32 %v1950, %v2326
      %v2427 = vadd.f32 %v1951, %v2329
      %v2428 = vadd.f32 %v1952, %v2331
      %v2429 = vadd.f32 %v1953, %v2334
      %v2430 = vadd.f32 %v1954, %v2336
      %v2431 = vadd.f32 %v1955, %v2339
      %v2432 = vadd.f32 %v1956, %v2341
      %v2433 = vadd.f32 %v1957, %v2344
      %v2434 = vadd.f32 %v1958, %v2346
      %v2435 = vadd.f32 %v1959, %v2349
      %v2436 = vadd.f32 %v1960, %v2351
      %v2437 = vadd.f32 %v1961, %v2354
      %v2438 = vadd.f32 %v1962, %v2356
      %v2439 = vadd.f32 %v1963, %v2359
      %v2440 = vadd.f32 %v1964, %v2361
      %v2441 = vadd.f32 %v1965, %v2364
      %v2442 = vadd.f32 %v1966, %v2366
      %v2443 = vadd.f32 %v1967, %v2369
      %v2444 = vadd.f32 %v1968, %v2371
      %v2445 = vadd.f32 %v1969, %v2374
      %v2446 = vadd.f32 %v1970, %v2376
      %v2447 = vadd.f32 %v1971, %v2379
      %v2448 = vadd.f32 %v1972, %v2381
      %v2449 = vadd.f32 %v1973, %v2384
      %v2450 = vadd.f32 %v1974, %v2386
      %v2452 = vlaneseq
      %v2453 = vshrl.u32 %v2452, 7
      %v2454 = vsub.s32 0, %v2453
      %v2455 = vrot.slane %v513, %v2454
      %v2457 = vmul.f32 %v2419, %v2455
      %v2458 = vmul.f32 %v2420, %v2455
      %v2459 = vmul.f32 %v2421, %v2455
      %v2460 = vmul.f32 %v2422, %v2455
      %v2461 = vmul.f32 %v2423, %v2455
      %v2462 = vmul.f32 %v2424, %v2455
      %v2463 = vmul.f32 %v2425, %v2455
      %v2464 = vmul.f32 %v2426, %v2455
      %v2465 = vmul.f32 %v2427, %v2455
      %v2466 = vmul.f32 %v2428, %v2455
      %v2467 = vmul.f32 %v2429, %v2455
      %v2468 = vmul.f32 %v2430, %v2455
      %v2469 = vmul.f32 %v2431, %v2455
      %v2470 = vmul.f32 %v2432, %v2455
      %v2471 = vmul.f32 %v2433, %v2455
      %v2472 = vmul.f32 %v2434, %v2455
      %v2473 = vmul.f32 %v2435, %v2455
      %v2474 = vmul.f32 %v2436, %v2455
      %v2475 = vmul.f32 %v2437, %v2455
      %v2476 = vmul.f32 %v2438, %v2455
      %v2477 = vmul.f32 %v2439, %v2455
      %v2478 = vmul.f32 %v2440, %v2455
      %v2479 = vmul.f32 %v2441, %v2455
      %v2480 = vmul.f32 %v2442, %v2455
      %v2481 = vmul.f32 %v2443, %v2455
      %v2482 = vmul.f32 %v2444, %v2455
      %v2483 = vmul.f32 %v2445, %v2455
      %v2484 = vmul.f32 %v2446, %v2455
      %v2485 = vmul.f32 %v2447, %v2455
      %v2486 = vmul.f32 %v2448, %v2455
      %v2487 = vmul.f32 %v2449, %v2455
      %v2488 = vmul.f32 %v2450, %v2455
      %v2490 = vlaneseq
      %v2491 = vshrl.u32 %v2490, 7
      %v2492 = vsub.s32 0, %v2491
      %v2493 = vrot.slane %v514, %v2492
      %v2495 = vadd.f32 %v2457, %v2493
      %v2496 = vadd.f32 %v2458, %v2493
      %v2497 = vadd.f32 %v2459, %v2493
      %v2498 = vadd.f32 %v2460, %v2493
      %v2499 = vadd.f32 %v2461, %v2493
      %v2500 = vadd.f32 %v2462, %v2493
      %v2501 = vadd.f32 %v2463, %v2493
      %v2502 = vadd.f32 %v2464, %v2493
      %v2503 = vadd.f32 %v2465, %v2493
      %v2504 = vadd.f32 %v2466, %v2493
      %v2505 = vadd.f32 %v2467, %v2493
      %v2506 = vadd.f32 %v2468, %v2493
      %v2507 = vadd.f32 %v2469, %v2493
      %v2508 = vadd.f32 %v2470, %v2493
      %v2509 = vadd.f32 %v2471, %v2493
      %v2510 = vadd.f32 %v2472, %v2493
      %v2511 = vadd.f32 %v2473, %v2493
      %v2512 = vadd.f32 %v2474, %v2493
      %v2513 = vadd.f32 %v2475, %v2493
      %v2514 = vadd.f32 %v2476, %v2493
      %v2515 = vadd.f32 %v2477, %v2493
      %v2516 = vadd.f32 %v2478, %v2493
      %v2517 = vadd.f32 %v2479, %v2493
      %v2518 = vadd.f32 %v2480, %v2493
      %v2519 = vadd.f32 %v2481, %v2493
      %v2520 = vadd.f32 %v2482, %v2493
      %v2521 = vadd.f32 %v2483, %v2493
      %v2522 = vadd.f32 %v2484, %v2493
      %v2523 = vadd.f32 %v2485, %v2493
      %v2524 = vadd.f32 %v2486, %v2493
      %v2525 = vadd.f32 %v2487, %v2493
      %v2526 = vadd.f32 %v2488, %v2493
      %v2527 = vmax.f32 %v2495, 0.0
      %v2528 = vmax.f32 %v2496, 0.0
      %v2529 = vmax.f32 %v2497, 0.0
      %v2530 = vmax.f32 %v2498, 0.0
      %v2531 = vmax.f32 %v2499, 0.0
      %v2532 = vmax.f32 %v2500, 0.0
      %v2533 = vmax.f32 %v2501, 0.0
      %v2534 = vmax.f32 %v2502, 0.0
      %v2535 = vmax.f32 %v2503, 0.0
      %v2536 = vmax.f32 %v2504, 0.0
      %v2537 = vmax.f32 %v2505, 0.0
      %v2538 = vmax.f32 %v2506, 0.0
      %v2539 = vmax.f32 %v2507, 0.0
      %v2540 = vmax.f32 %v2508, 0.0
      %v2541 = vmax.f32 %v2509, 0.0
      %v2542 = vmax.f32 %v2510, 0.0
      %v2543 = vmax.f32 %v2511, 0.0
      %v2544 = vmax.f32 %v2512, 0.0
      %v2545 = vmax.f32 %v2513, 0.0
      %v2546 = vmax.f32 %v2514, 0.0
      %v2547 = vmax.f32 %v2515, 0.0
      %v2548 = vmax.f32 %v2516, 0.0
      %v2549 = vmax.f32 %v2517, 0.0
      %v2550 = vmax.f32 %v2518, 0.0
      %v2551 = vmax.f32 %v2519, 0.0
      %v2552 = vmax.f32 %v2520, 0.0
      %v2553 = vmax.f32 %v2521, 0.0
      %v2554 = vmax.f32 %v2522, 0.0
      %v2555 = vmax.f32 %v2523, 0.0
      %v2556 = vmax.f32 %v2524, 0.0
      %v2557 = vmax.f32 %v2525, 0.0
      %v2558 = vmax.f32 %v2526, 0.0
      %v2559 = vpack.c.bf16 %v2528, %v2527
      %v2560 = vpack.c.bf16 %v2530, %v2529
      %v2561 = vpack.c.bf16 %v2532, %v2531
      %v2562 = vpack.c.bf16 %v2534, %v2533
      %v2563 = vpack.c.bf16 %v2536, %v2535
      %v2564 = vpack.c.bf16 %v2538, %v2537
      %v2565 = vpack.c.bf16 %v2540, %v2539
      %v2566 = vpack.c.bf16 %v2542, %v2541
      %v2567 = vpack.c.bf16 %v2544, %v2543
      %v2568 = vpack.c.bf16 %v2546, %v2545
      %v2569 = vpack.c.bf16 %v2548, %v2547
      %v2570 = vpack.c.bf16 %v2550, %v2549
      %v2571 = vpack.c.bf16 %v2552, %v2551
      %v2572 = vpack.c.bf16 %v2554, %v2553
      %v2573 = vpack.c.bf16 %v2556, %v2555
      %v2574 = vpack.c.bf16 %v2558, %v2557
      %v2576 = vshrl.u32 %v2559, 16
      %v2578 = vrot.slane %v2576, 7
      %v2579 = vshll.u32 %v2559, 16
      %v2581 = vor.u32 %v2578, %v2579
      %v2583 = vshrl.u32 %v2560, 16
      %v2585 = vrot.slane %v2583, 7
      %v2586 = vshll.u32 %v2560, 16
      %v2588 = vor.u32 %v2585, %v2586
      %v2590 = vshrl.u32 %v2561, 16
      %v2592 = vrot.slane %v2590, 7
      %v2593 = vshll.u32 %v2561, 16
      %v2595 = vor.u32 %v2592, %v2593
      %v2597 = vshrl.u32 %v2562, 16
      %v2599 = vrot.slane %v2597, 7
      %v2600 = vshll.u32 %v2562, 16
      %v2602 = vor.u32 %v2599, %v2600
      %v2604 = vshrl.u32 %v2563, 16
      %v2606 = vrot.slane %v2604, 7
      %v2607 = vshll.u32 %v2563, 16
      %v2609 = vor.u32 %v2606, %v2607
      %v2611 = vshrl.u32 %v2564, 16
      %v2613 = vrot.slane %v2611, 7
      %v2614 = vshll.u32 %v2564, 16
      %v2616 = vor.u32 %v2613, %v2614
      %v2618 = vshrl.u32 %v2565, 16
      %v2620 = vrot.slane %v2618, 7
      %v2621 = vshll.u32 %v2565, 16
      %v2623 = vor.u32 %v2620, %v2621
      %v2625 = vshrl.u32 %v2566, 16
      %v2627 = vrot.slane %v2625, 7
      %v2628 = vshll.u32 %v2566, 16
      %v2630 = vor.u32 %v2627, %v2628
      %v2632 = vshrl.u32 %v2567, 16
      %v2634 = vrot.slane %v2632, 7
      %v2635 = vshll.u32 %v2567, 16
      %v2637 = vor.u32 %v2634, %v2635
      %v2639 = vshrl.u32 %v2568, 16
      %v2641 = vrot.slane %v2639, 7
      %v2642 = vshll.u32 %v2568, 16
      %v2644 = vor.u32 %v2641, %v2642
      %v2646 = vshrl.u32 %v2569, 16
      %v2648 = vrot.slane %v2646, 7
      %v2649 = vshll.u32 %v2569, 16
      %v2651 = vor.u32 %v2648, %v2649
      %v2653 = vshrl.u32 %v2570, 16
      %v2655 = vrot.slane %v2653, 7
      %v2656 = vshll.u32 %v2570, 16
      %v2658 = vor.u32 %v2655, %v2656
      %v2660 = vshrl.u32 %v2571, 16
      %v2662 = vrot.slane %v2660, 7
      %v2663 = vshll.u32 %v2571, 16
      %v2665 = vor.u32 %v2662, %v2663
      %v2667 = vshrl.u32 %v2572, 16
      %v2669 = vrot.slane %v2667, 7
      %v2670 = vshll.u32 %v2572, 16
      %v2672 = vor.u32 %v2669, %v2670
      %v2674 = vshrl.u32 %v2573, 16
      %v2676 = vrot.slane %v2674, 7
      %v2677 = vshll.u32 %v2573, 16
      %v2679 = vor.u32 %v2676, %v2677
      %v2681 = vshrl.u32 %v2574, 16
      %v2683 = vrot.slane %v2681, 7
      %v2684 = vshll.u32 %v2574, 16
      %v2686 = vor.u32 %v2683, %v2684
      %s2719 = scalar_lea.vmem [#allocation3], 16
      %v2720 = vld [vmem:[%s2719] sm:$0xff]
      %v2721 = vsel %vm345, %v2581, %v2720
      %2722 = vst [vmem:[%s2719] sm:$0xff] %v2721
      %v2723 = vld [vmem:[%s2719 + $0x8] sm:$0x1]
      %v2724 = vsel %vm288, %v2578, %v2723
      %2725 = vst [vmem:[%s2719 + $0x8] sm:$0x1] %v2724
      %v2726 = vld [vmem:[%s2719 + $0x10] sm:$0xff]
      %v2727 = vsel %vm345, %v2588, %v2726
      %2728 = vst [vmem:[%s2719 + $0x10] sm:$0xff] %v2727
      %v2729 = vld [vmem:[%s2719 + $0x18] sm:$0x1]
      %v2730 = vsel %vm288, %v2585, %v2729
      %2731 = vst [vmem:[%s2719 + $0x18] sm:$0x1] %v2730
      %v2732 = vld [vmem:[%s2719 + $0x20] sm:$0xff]
      %v2733 = vsel %vm345, %v2595, %v2732
      %2734 = vst [vmem:[%s2719 + $0x20] sm:$0xff] %v2733
      %v2735 = vld [vmem:[%s2719 + $0x28] sm:$0x1]
      %v2736 = vsel %vm288, %v2592, %v2735
      %2737 = vst [vmem:[%s2719 + $0x28] sm:$0x1] %v2736
      %v2738 = vld [vmem:[%s2719 + $0x30] sm:$0xff]
      %v2739 = vsel %vm345, %v2602, %v2738
      %2740 = vst [vmem:[%s2719 + $0x30] sm:$0xff] %v2739
      %v2741 = vld [vmem:[%s2719 + $0x38] sm:$0x1]
      %v2742 = vsel %vm288, %v2599, %v2741
      %2743 = vst [vmem:[%s2719 + $0x38] sm:$0x1] %v2742
      %v2744 = vld [vmem:[%s2719 + $0x40] sm:$0xff]
      %v2745 = vsel %vm345, %v2609, %v2744
      %2746 = vst [vmem:[%s2719 + $0x40] sm:$0xff] %v2745
      %v2747 = vld [vmem:[%s2719 + $0x48] sm:$0x1]
      %v2748 = vsel %vm288, %v2606, %v2747
      %2749 = vst [vmem:[%s2719 + $0x48] sm:$0x1] %v2748
      %v2750 = vld [vmem:[%s2719 + $0x50] sm:$0xff]
      %v2751 = vsel %vm345, %v2616, %v2750
      %2752 = vst [vmem:[%s2719 + $0x50] sm:$0xff] %v2751
      %v2753 = vld [vmem:[%s2719 + $0x58] sm:$0x1]
      %v2754 = vsel %vm288, %v2613, %v2753
      %2755 = vst [vmem:[%s2719 + $0x58] sm:$0x1] %v2754
      %v2756 = vld [vmem:[%s2719 + $0x60] sm:$0xff]
      %v2757 = vsel %vm345, %v2623, %v2756
      %2758 = vst [vmem:[%s2719 + $0x60] sm:$0xff] %v2757
      %v2759 = vld [vmem:[%s2719 + $0x68] sm:$0x1]
      %v2760 = vsel %vm288, %v2620, %v2759
      %2761 = vst [vmem:[%s2719 + $0x68] sm:$0x1] %v2760
      %v2762 = vld [vmem:[%s2719 + $0x70] sm:$0xff]
      %v2763 = vsel %vm345, %v2630, %v2762
      %2764 = vst [vmem:[%s2719 + $0x70] sm:$0xff] %v2763
      %v2765 = vld [vmem:[%s2719 + $0x78] sm:$0x1]
      %v2766 = vsel %vm288, %v2627, %v2765
      %2767 = vst [vmem:[%s2719 + $0x78] sm:$0x1] %v2766
      %v2768 = vld [vmem:[%s2719 + $0x80] sm:$0xff]
      %v2769 = vsel %vm345, %v2637, %v2768
      %2770 = vst [vmem:[%s2719 + $0x80] sm:$0xff] %v2769
      %v2771 = vld [vmem:[%s2719 + $0x88] sm:$0x1]
      %v2772 = vsel %vm288, %v2634, %v2771
      %2773 = vst [vmem:[%s2719 + $0x88] sm:$0x1] %v2772
      %v2774 = vld [vmem:[%s2719 + $0x90] sm:$0xff]
      %v2775 = vsel %vm345, %v2644, %v2774
      %2776 = vst [vmem:[%s2719 + $0x90] sm:$0xff] %v2775
      %v2777 = vld [vmem:[%s2719 + $0x98] sm:$0x1]
      %v2778 = vsel %vm288, %v2641, %v2777
      %2779 = vst [vmem:[%s2719 + $0x98] sm:$0x1] %v2778
      %v2780 = vld [vmem:[%s2719 + $0xa0] sm:$0xff]
      %v2781 = vsel %vm345, %v2651, %v2780
      %2782 = vst [vmem:[%s2719 + $0xa0] sm:$0xff] %v2781
      %v2783 = vld [vmem:[%s2719 + $0xa8] sm:$0x1]
      %v2784 = vsel %vm288, %v2648, %v2783
      %2785 = vst [vmem:[%s2719 + $0xa8] sm:$0x1] %v2784
      %v2786 = vld [vmem:[%s2719 + $0xb0] sm:$0xff]
      %v2787 = vsel %vm345, %v2658, %v2786
      %2788 = vst [vmem:[%s2719 + $0xb0] sm:$0xff] %v2787
      %v2789 = vld [vmem:[%s2719 + $0xb8] sm:$0x1]
      %v2790 = vsel %vm288, %v2655, %v2789
      %2791 = vst [vmem:[%s2719 + $0xb8] sm:$0x1] %v2790
      %v2792 = vld [vmem:[%s2719 + $0xc0] sm:$0xff]
      %v2793 = vsel %vm345, %v2665, %v2792
      %2794 = vst [vmem:[%s2719 + $0xc0] sm:$0xff] %v2793
      %v2795 = vld [vmem:[%s2719 + $0xc8] sm:$0x1]
      %v2796 = vsel %vm288, %v2662, %v2795
      %2797 = vst [vmem:[%s2719 + $0xc8] sm:$0x1] %v2796
      %v2798 = vld [vmem:[%s2719 + $0xd0] sm:$0xff]
      %v2799 = vsel %vm345, %v2672, %v2798
      %2800 = vst [vmem:[%s2719 + $0xd0] sm:$0xff] %v2799
      %v2801 = vld [vmem:[%s2719 + $0xd8] sm:$0x1]
      %v2802 = vsel %vm288, %v2669, %v2801
      %2803 = vst [vmem:[%s2719 + $0xd8] sm:$0x1] %v2802
      %v2804 = vld [vmem:[%s2719 + $0xe0] sm:$0xff]
      %v2805 = vsel %vm345, %v2679, %v2804
      %2806 = vst [vmem:[%s2719 + $0xe0] sm:$0xff] %v2805
      %v2807 = vld [vmem:[%s2719 + $0xe8] sm:$0x1]
      %v2808 = vsel %vm288, %v2676, %v2807
      %2809 = vst [vmem:[%s2719 + $0xe8] sm:$0x1] %v2808
      %v2810 = vld [vmem:[%s2719 + $0xf0] sm:$0xff]
      %v2811 = vsel %vm345, %v2686, %v2810
      %2812 = vst [vmem:[%s2719 + $0xf0] sm:$0xff] %v2811
      %v2813 = vld [vmem:[%s2719 + $0xf8] sm:$0x1]
      %v2814 = vsel %vm288, %v2683, %v2813
      %2815 = vst [vmem:[%s2719 + $0xf8] sm:$0x1] %v2814
      %v2816 = vld [vmem:[#allocation3] sm:$0xff]
      %v2817 = vld [vmem:[#allocation3 + $0x8] sm:$0xff]
      %v2818 = vld [vmem:[#allocation3 + $0x10] sm:$0xff]
      %v2819 = vld [vmem:[#allocation3 + $0x18] sm:$0xff]
      %v2820 = vld [vmem:[#allocation3 + $0x20] sm:$0xff]
      %v2821 = vld [vmem:[#allocation3 + $0x28] sm:$0xff]
      %v2822 = vld [vmem:[#allocation3 + $0x30] sm:$0xff]
      %v2823 = vld [vmem:[#allocation3 + $0x38] sm:$0xff]
      %v2824 = vld [vmem:[#allocation3 + $0x40] sm:$0xff]
      %v2825 = vld [vmem:[#allocation3 + $0x48] sm:$0xff]
      %v2826 = vld [vmem:[#allocation3 + $0x50] sm:$0xff]
      %v2827 = vld [vmem:[#allocation3 + $0x58] sm:$0xff]
      %v2828 = vld [vmem:[#allocation3 + $0x60] sm:$0xff]
      %v2829 = vld [vmem:[#allocation3 + $0x68] sm:$0xff]
      %v2830 = vld [vmem:[#allocation3 + $0x70] sm:$0xff]
      %v2831 = vld [vmem:[#allocation3 + $0x78] sm:$0xff]
      %v2832 = vld [vmem:[#allocation3 + $0x80] sm:$0xff]
      %v2833 = vld [vmem:[#allocation3 + $0x88] sm:$0xff]
      %v2834 = vld [vmem:[#allocation3 + $0x90] sm:$0xff]
      %v2835 = vld [vmem:[#allocation3 + $0x98] sm:$0xff]
      %v2836 = vld [vmem:[#allocation3 + $0xa0] sm:$0xff]
      %v2837 = vld [vmem:[#allocation3 + $0xa8] sm:$0xff]
      %v2838 = vld [vmem:[#allocation3 + $0xb0] sm:$0xff]
      %v2839 = vld [vmem:[#allocation3 + $0xb8] sm:$0xff]
      %v2840 = vld [vmem:[#allocation3 + $0xc0] sm:$0xff]
      %v2841 = vld [vmem:[#allocation3 + $0xc8] sm:$0xff]
      %v2842 = vld [vmem:[#allocation3 + $0xd0] sm:$0xff]
      %v2843 = vld [vmem:[#allocation3 + $0xd8] sm:$0xff]
      %v2844 = vld [vmem:[#allocation3 + $0xe0] sm:$0xff]
      %v2845 = vld [vmem:[#allocation3 + $0xe8] sm:$0xff]
      %v2846 = vld [vmem:[#allocation3 + $0xf0] sm:$0xff]
      %v2847 = vld [vmem:[#allocation3 + $0xf8] sm:$0xff]
      %v2848 = vld [vmem:[#allocation3 + $0x100] sm:$0xff]
      %v2849 = vld [vmem:[#allocation3 + $0x108] sm:$0xff]
      %v2850 = vld [vmem:[#allocation3 + $0x110] sm:$0xff]
      %v2851 = vld [vmem:[#allocation3 + $0x118] sm:$0xff]
      %2884 = vrot.lane.b32.xlu0 %v2818, 4
      %v2885 = vpop.permute.xlu0 %2884
      %2886 = vrot.lane.b32.xlu0 %v2819, 4
      %v2887 = vpop.permute.xlu0 %2886
      %2888 = vrot.lane.b32.xlu0 %v2820, 4
      %v2889 = vpop.permute.xlu0 %2888
      %2890 = vrot.lane.b32.xlu0 %v2821, 4
      %v2891 = vpop.permute.xlu0 %2890
      %2892 = vrot.lane.b32.xlu0 %v2822, 4
      %v2893 = vpop.permute.xlu0 %2892
      %2894 = vrot.lane.b32.xlu0 %v2823, 4
      %v2895 = vpop.permute.xlu0 %2894
      %2896 = vrot.lane.b32.xlu0 %v2824, 4
      %v2897 = vpop.permute.xlu0 %2896
      %2898 = vrot.lane.b32.xlu0 %v2825, 4
      %v2899 = vpop.permute.xlu0 %2898
      %2900 = vrot.lane.b32.xlu0 %v2826, 4
      %v2901 = vpop.permute.xlu0 %2900
      %2902 = vrot.lane.b32.xlu0 %v2827, 4
      %v2903 = vpop.permute.xlu0 %2902
      %2904 = vrot.lane.b32.xlu0 %v2828, 4
      %v2905 = vpop.permute.xlu0 %2904
      %2906 = vrot.lane.b32.xlu0 %v2829, 4
      %v2907 = vpop.permute.xlu0 %2906
      %2908 = vrot.lane.b32.xlu0 %v2830, 4
      %v2909 = vpop.permute.xlu0 %2908
      %2910 = vrot.lane.b32.xlu0 %v2831, 4
      %v2911 = vpop.permute.xlu0 %2910
      %2912 = vrot.lane.b32.xlu0 %v2832, 4
      %v2913 = vpop.permute.xlu0 %2912
      %2914 = vrot.lane.b32.xlu0 %v2833, 4
      %v2915 = vpop.permute.xlu0 %2914
      %2916 = vrot.lane.b32.xlu0 %v2834, 4
      %v2917 = vpop.permute.xlu0 %2916
      %2918 = vrot.lane.b32.xlu0 %v2835, 4
      %v2919 = vpop.permute.xlu0 %2918
      %2920 = vrot.lane.b32.xlu0 %v2836, 4
      %v2921 = vpop.permute.xlu0 %2920
      %2922 = vrot.lane.b32.xlu0 %v2837, 4
      %v2923 = vpop.permute.xlu0 %2922
      %2924 = vrot.lane.b32.xlu0 %v2838, 4
      %v2925 = vpop.permute.xlu0 %2924
      %2926 = vrot.lane.b32.xlu0 %v2839, 4
      %v2927 = vpop.permute.xlu0 %2926
      %2928 = vrot.lane.b32.xlu0 %v2840, 4
      %v2929 = vpop.permute.xlu0 %2928
      %2930 = vrot.lane.b32.xlu0 %v2841, 4
      %v2931 = vpop.permute.xlu0 %2930
      %2932 = vrot.lane.b32.xlu0 %v2842, 4
      %v2933 = vpop.permute.xlu0 %2932
      %2934 = vrot.lane.b32.xlu0 %v2843, 4
      %v2935 = vpop.permute.xlu0 %2934
      %2936 = vrot.lane.b32.xlu0 %v2844, 4
      %v2937 = vpop.permute.xlu0 %2936
      %2938 = vrot.lane.b32.xlu0 %v2845, 4
      %v2939 = vpop.permute.xlu0 %2938
      %2940 = vrot.lane.b32.xlu0 %v2846, 4
      %v2941 = vpop.permute.xlu0 %2940
      %2942 = vrot.lane.b32.xlu0 %v2847, 4
      %v2943 = vpop.permute.xlu0 %2942
      %2944 = vrot.lane.b32.xlu0 %v2848, 4
      %v2945 = vpop.permute.xlu0 %2944
      %2946 = vrot.lane.b32.xlu0 %v2849, 4
      %v2947 = vpop.permute.xlu0 %2946
      %2950 = vrot.lane.b32.xlu0 %v2820, 8
      %v2951 = vpop.permute.xlu0 %2950
      %2952 = vrot.lane.b32.xlu0 %v2821, 8
      %v2953 = vpop.permute.xlu0 %2952
      %2954 = vrot.lane.b32.xlu0 %v2822, 8
      %v2955 = vpop.permute.xlu0 %2954
      %2956 = vrot.lane.b32.xlu0 %v2823, 8
      %v2957 = vpop.permute.xlu0 %2956
      %2958 = vrot.lane.b32.xlu0 %v2824, 8
      %v2959 = vpop.permute.xlu0 %2958
      %2960 = vrot.lane.b32.xlu0 %v2825, 8
      %v2961 = vpop.permute.xlu0 %2960
      %2962 = vrot.lane.b32.xlu0 %v2826, 8
      %v2963 = vpop.permute.xlu0 %2962
      %2964 = vrot.lane.b32.xlu0 %v2827, 8
      %v2965 = vpop.permute.xlu0 %2964
      %2966 = vrot.lane.b32.xlu0 %v2828, 8
      %v2967 = vpop.permute.xlu0 %2966
      %2968 = vrot.lane.b32.xlu0 %v2829, 8
      %v2969 = vpop.permute.xlu0 %2968
      %2970 = vrot.lane.b32.xlu0 %v2830, 8
      %v2971 = vpop.permute.xlu0 %2970
      %2972 = vrot.lane.b32.xlu0 %v2831, 8
      %v2973 = vpop.permute.xlu0 %2972
      %2974 = vrot.lane.b32.xlu0 %v2832, 8
      %v2975 = vpop.permute.xlu0 %2974
      %2976 = vrot.lane.b32.xlu0 %v2833, 8
      %v2977 = vpop.permute.xlu0 %2976
      %2978 = vrot.lane.b32.xlu0 %v2834, 8
      %v2979 = vpop.permute.xlu0 %2978
      %2980 = vrot.lane.b32.xlu0 %v2835, 8
      %v2981 = vpop.permute.xlu0 %2980
      %2982 = vrot.lane.b32.xlu0 %v2836, 8
      %v2983 = vpop.permute.xlu0 %2982
      %2984 = vrot.lane.b32.xlu0 %v2837, 8
      %v2985 = vpop.permute.xlu0 %2984
      %2986 = vrot.lane.b32.xlu0 %v2838, 8
      %v2987 = vpop.permute.xlu0 %2986
      %2988 = vrot.lane.b32.xlu0 %v2839, 8
      %v2989 = vpop.permute.xlu0 %2988
      %2990 = vrot.lane.b32.xlu0 %v2840, 8
      %v2991 = vpop.permute.xlu0 %2990
      %2992 = vrot.lane.b32.xlu0 %v2841, 8
      %v2993 = vpop.permute.xlu0 %2992
      %2994 = vrot.lane.b32.xlu0 %v2842, 8
      %v2995 = vpop.permute.xlu0 %2994
      %2996 = vrot.lane.b32.xlu0 %v2843, 8
      %v2997 = vpop.permute.xlu0 %2996
      %2998 = vrot.lane.b32.xlu0 %v2844, 8
      %v2999 = vpop.permute.xlu0 %2998
      %3000 = vrot.lane.b32.xlu0 %v2845, 8
      %v3001 = vpop.permute.xlu0 %3000
      %3002 = vrot.lane.b32.xlu0 %v2846, 8
      %v3003 = vpop.permute.xlu0 %3002
      %3004 = vrot.lane.b32.xlu0 %v2847, 8
      %v3005 = vpop.permute.xlu0 %3004
      %3006 = vrot.lane.b32.xlu0 %v2848, 8
      %v3007 = vpop.permute.xlu0 %3006
      %3008 = vrot.lane.b32.xlu0 %v2849, 8
      %v3009 = vpop.permute.xlu0 %3008
      %3010 = vrot.lane.b32.xlu0 %v2850, 8
      %v3011 = vpop.permute.xlu0 %3010
      %3012 = vrot.lane.b32.xlu0 %v2851, 8
      %v3013 = vpop.permute.xlu0 %3012
      %v3016 = vsel %vm280, %v2816, %v2885
      %v3019 = vsel %vm280, %v2817, %v2887
      %v3022 = vsel %vm280, %v2818, %v2889
      %v3025 = vsel %vm280, %v2819, %v2891
      %v3028 = vsel %vm280, %v2820, %v2893
      %v3031 = vsel %vm280, %v2821, %v2895
      %v3034 = vsel %vm280, %v2822, %v2897
      %v3037 = vsel %vm280, %v2823, %v2899
      %v3040 = vsel %vm280, %v2824, %v2901
      %v3043 = vsel %vm280, %v2825, %v2903
      %v3046 = vsel %vm280, %v2826, %v2905
      %v3049 = vsel %vm280, %v2827, %v2907
      %v3052 = vsel %vm280, %v2828, %v2909
      %v3055 = vsel %vm280, %v2829, %v2911
      %v3058 = vsel %vm280, %v2830, %v2913
      %v3061 = vsel %vm280, %v2831, %v2915
      %v3064 = vsel %vm280, %v2832, %v2917
      %v3067 = vsel %vm280, %v2833, %v2919
      %v3070 = vsel %vm280, %v2834, %v2921
      %v3073 = vsel %vm280, %v2835, %v2923
      %v3076 = vsel %vm280, %v2836, %v2925
      %v3079 = vsel %vm280, %v2837, %v2927
      %v3082 = vsel %vm280, %v2838, %v2929
      %v3085 = vsel %vm280, %v2839, %v2931
      %v3088 = vsel %vm280, %v2840, %v2933
      %v3091 = vsel %vm280, %v2841, %v2935
      %v3094 = vsel %vm280, %v2842, %v2937
      %v3097 = vsel %vm280, %v2843, %v2939
      %v3100 = vsel %vm280, %v2844, %v2941
      %v3103 = vsel %vm280, %v2845, %v2943
      %v3106 = vsel %vm280, %v2846, %v2945
      %v3109 = vsel %vm280, %v2847, %v2947
      %v3111 = vsel %vm1100, %v3016, %v2951
      %v3113 = vsel %vm1100, %v3019, %v2953
      %v3115 = vsel %vm1100, %v3022, %v2955
      %v3117 = vsel %vm1100, %v3025, %v2957
      %v3119 = vsel %vm1100, %v3028, %v2959
      %v3121 = vsel %vm1100, %v3031, %v2961
      %v3123 = vsel %vm1100, %v3034, %v2963
      %v3125 = vsel %vm1100, %v3037, %v2965
      %v3127 = vsel %vm1100, %v3040, %v2967
      %v3129 = vsel %vm1100, %v3043, %v2969
      %v3131 = vsel %vm1100, %v3046, %v2971
      %v3133 = vsel %vm1100, %v3049, %v2973
      %v3135 = vsel %vm1100, %v3052, %v2975
      %v3137 = vsel %vm1100, %v3055, %v2977
      %v3139 = vsel %vm1100, %v3058, %v2979
      %v3141 = vsel %vm1100, %v3061, %v2981
      %v3143 = vsel %vm1100, %v3064, %v2983
      %v3145 = vsel %vm1100, %v3067, %v2985
      %v3147 = vsel %vm1100, %v3070, %v2987
      %v3149 = vsel %vm1100, %v3073, %v2989
      %v3151 = vsel %vm1100, %v3076, %v2991
      %v3153 = vsel %vm1100, %v3079, %v2993
      %v3155 = vsel %vm1100, %v3082, %v2995
      %v3157 = vsel %vm1100, %v3085, %v2997
      %v3159 = vsel %vm1100, %v3088, %v2999
      %v3161 = vsel %vm1100, %v3091, %v3001
      %v3163 = vsel %vm1100, %v3094, %v3003
      %v3165 = vsel %vm1100, %v3097, %v3005
      %v3167 = vsel %vm1100, %v3100, %v3007
      %v3169 = vsel %vm1100, %v3103, %v3009
      %v3171 = vsel %vm1100, %v3106, %v3011
      %v3173 = vsel %vm1100, %v3109, %v3013
      %v3174 = vld [vmem:[%s4] sm:$0xf]
      %v3175 = vld [vmem:[%s4 + $0x4] sm:$0x3]
      %v3178 = vunpack.c.l.b16 %v3174
      %v3179 = vunpack.c.l.b16 %v3175
      %v3180 = vpack.c.b16 %v3179, %v3178
      %v3181 = vsel %vm1172, %v3111, 0
      %v3183 = vsel %vm1172, %v3113, 0
      %v3185 = vsel %vm1172, %v3115, 0
      %v3187 = vsel %vm1172, %v3117, 0
      %v3189 = vsel %vm1172, %v3119, 0
      %v3191 = vsel %vm1172, %v3121, 0
      %v3193 = vsel %vm1172, %v3123, 0
      %v3195 = vsel %vm1172, %v3125, 0
      %v3197 = vsel %vm1172, %v3127, 0
      %v3199 = vsel %vm1172, %v3129, 0
      %v3201 = vsel %vm1172, %v3131, 0
      %v3203 = vsel %vm1172, %v3133, 0
      %v3205 = vsel %vm1172, %v3135, 0
      %v3207 = vsel %vm1172, %v3137, 0
      %v3209 = vsel %vm1172, %v3139, 0
      %v3211 = vsel %vm1172, %v3141, 0
      %v3213 = vsel %vm1172, %v3143, 0
      %v3215 = vsel %vm1172, %v3145, 0
      %v3217 = vsel %vm1172, %v3147, 0
      %v3219 = vsel %vm1172, %v3149, 0
      %v3221 = vsel %vm1172, %v3151, 0
      %v3223 = vsel %vm1172, %v3153, 0
      %v3225 = vsel %vm1172, %v3155, 0
      %v3227 = vsel %vm1172, %v3157, 0
      %v3229 = vsel %vm1172, %v3159, 0
      %v3231 = vsel %vm1172, %v3161, 0
      %v3233 = vsel %vm1172, %v3163, 0
      %v3235 = vsel %vm1172, %v3165, 0
      %v3237 = vsel %vm1172, %v3167, 0
      %v3239 = vsel %vm1172, %v3169, 0
      %v3241 = vsel %vm1172, %v3171, 0
      %v3243 = vsel %vm1172, %v3173, 0
      %v3246 = vsel %vm1237, %v3180, 0
      %3248 = vmatprep.subr.bf16.mxu0 0
      %3249 = vmatpush1.bf16.msra.mxu0 %v3246
      %3250 = vmatprep.subr.bf16.mxu0 0
      %3251 = vmatpush1.bf16.msra.mxu0 0
      %3252 = vmatprep.subr.bf16.mxu0 0
      %3253 = vmatpush1.bf16.msra.mxu0 0
      %3254 = vmatprep.subr.bf16.mxu0 0
      %3255 = vmatpush1.bf16.msra.mxu0 0
      %3256 = vmatprep.subr.bf16.mxu0 0
      %3257 = vmatpush1.bf16.msra.mxu0 0
      %3258 = vmatprep.subr.bf16.mxu0 0
      %3259 = vmatpush1.bf16.msra.mxu0 0
      %3260 = vmatprep.subr.bf16.mxu0 0
      %3261 = vmatpush1.bf16.msra.mxu0 0
      %3262 = vmatprep.subr.bf16.mxu0 0
      %3263 = vmatpush1.bf16.msra.mxu0 0
      %3264 = vmatprep.subr.bf16.mxu0 0
      %3265 = vmatpush1.bf16.msra.mxu0 0
      %3266 = vmatprep.subr.bf16.mxu0 0
      %3267 = vmatpush1.bf16.msra.mxu0 0
      %3268 = vmatprep.subr.bf16.mxu0 0
      %3269 = vmatpush1.bf16.msra.mxu0 0
      %3270 = vmatprep.subr.bf16.mxu0 0
      %3271 = vmatpush1.bf16.msra.mxu0 0
      %3272 = vmatprep.subr.bf16.mxu0 0
      %3273 = vmatpush1.bf16.msra.mxu0 0
      %3274 = vmatprep.subr.bf16.mxu0 0
      %3275 = vmatpush1.bf16.msra.mxu0 0
      %3276 = vmatprep.subr.bf16.mxu0 0
      %3277 = vmatpush1.bf16.msra.mxu0 0
      %3278 = vmatprep.subr.bf16.mxu0 0
      %3279 = vmatpush1.bf16.msra.mxu0 0
      %3280 = vmatprep.mubr.bf16.mxu0 0
      %3281 = vmatmul.mubr.bf16.gmra.mrb[0].mxu0 %v3181
      %v3282 = vpop.f32.mrb[0].mxu0
      %v3283 = vadd.f32 0.0, %v3282
      %v3284 = vpop.f32.mrb[0].mxu0
      %v3285 = vpop.f32.mrb[0].mxu0
      %v3286 = vadd.f32 0.0, %v3285
      %v3287 = vpop.f32.mrb[0].mxu0
      %3288 = vmatprep.mubr.bf16.mxu0 0
      %3289 = vmatmul.mubr.bf16.gmra.mrb[0].mxu0 %v3183
      %v3290 = vpop.f32.mrb[0].mxu0
      %v3291 = vpop.f32.mrb[0].mxu0
      %v3292 = vpop.f32.mrb[0].mxu0
      %v3293 = vpop.f32.mrb[0].mxu0
      %3294 = vmatprep.mubr.bf16.mxu0 0
      %3295 = vmatmul.mubr.bf16.gmra.mrb[0].mxu0 %v3185
      %v3296 = vpop.f32.mrb[0].mxu0
      %v3297 = vadd.f32 0.0, %v3296
      %v3298 = vpop.f32.mrb[0].mxu0
      %v3299 = vpop.f32.mrb[0].mxu0
      %v3300 = vadd.f32 0.0, %v3299
      %v3301 = vpop.f32.mrb[0].mxu0
      %3302 = vmatprep.mubr.bf16.mxu0 0
      %3303 = vmatmul.mubr.bf16.gmra.mrb[0].mxu0 %v3187
      %v3304 = vpop.f32.mrb[0].mxu0
      %v3305 = vpop.f32.mrb[0].mxu0
      %v3306 = vpop.f32.mrb[0].mxu0
      %v3307 = vpop.f32.mrb[0].mxu0
      %3308 = vmatprep.mubr.bf16.mxu0 0
      %3309 = vmatmul.mubr.bf16.gmra.mrb[0].mxu0 %v3189
      %v3310 = vpop.f32.mrb[0].mxu0
      %v3311 = vadd.f32 0.0, %v3310
      %v3312 = vpop.f32.mrb[0].mxu0
      %v3313 = vpop.f32.mrb[0].mxu0
      %v3314 = vadd.f32 0.0, %v3313
      %v3315 = vpop.f32.mrb[0].mxu0
      %3316 = vmatprep.mubr.bf16.mxu0 0
      %3317 = vmatmul.mubr.bf16.gmra.mrb[0].mxu0 %v3191
      %v3318 = vpop.f32.mrb[0].mxu0
      %v3319 = vpop.f32.mrb[0].mxu0
      %v3320 = vpop.f32.mrb[0].mxu0
      %v3321 = vpop.f32.mrb[0].mxu0
      %3322 = vmatprep.mubr.bf16.mxu0 0
      %3323 = vmatmul.mubr.bf16.gmra.mrb[0].mxu0 %v3193
      %v3324 = vpop.f32.mrb[0].mxu0
      %v3325 = vadd.f32 0.0, %v3324
      %v3326 = vpop.f32.mrb[0].mxu0
      %v3327 = vpop.f32.mrb[0].mxu0
      %v3328 = vadd.f32 0.0, %v3327
      %v3329 = vpop.f32.mrb[0].mxu0
      %3330 = vmatprep.mubr.bf16.mxu0 0
      %3331 = vmatmul.mubr.bf16.gmra.mrb[0].mxu0 %v3195
      %v3332 = vpop.f32.mrb[0].mxu0
      %v3333 = vpop.f32.mrb[0].mxu0
      %v3334 = vpop.f32.mrb[0].mxu0
      %v3335 = vpop.f32.mrb[0].mxu0
      %3336 = vmatprep.mubr.bf16.mxu0 0
      %3337 = vmatmul.mubr.bf16.gmra.mrb[0].mxu0 %v3197
      %v3338 = vpop.f32.mrb[0].mxu0
      %v3339 = vadd.f32 0.0, %v3338
      %v3340 = vpop.f32.mrb[0].mxu0
      %v3341 = vpop.f32.mrb[0].mxu0
      %v3342 = vadd.f32 0.0, %v3341
      %v3343 = vpop.f32.mrb[0].mxu0
      %3344 = vmatprep.mubr.bf16.mxu0 0
      %3345 = vmatmul.mubr.bf16.gmra.mrb[0].mxu0 %v3199
      %v3346 = vpop.f32.mrb[0].mxu0
      %v3347 = vpop.f32.mrb[0].mxu0
      %v3348 = vpop.f32.mrb[0].mxu0
      %v3349 = vpop.f32.mrb[0].mxu0
      %3350 = vmatprep.mubr.bf16.mxu0 0
      %3351 = vmatmul.mubr.bf16.gmra.mrb[0].mxu0 %v3201
      %v3352 = vpop.f32.mrb[0].mxu0
      %v3353 = vadd.f32 0.0, %v3352
      %v3354 = vpop.f32.mrb[0].mxu0
      %v3355 = vpop.f32.mrb[0].mxu0
      %v3356 = vadd.f32 0.0, %v3355
      %v3357 = vpop.f32.mrb[0].mxu0
      %3358 = vmatprep.mubr.bf16.mxu0 0
      %3359 = vmatmul.mubr.bf16.gmra.mrb[0].mxu0 %v3203
      %v3360 = vpop.f32.mrb[0].mxu0
      %v3361 = vpop.f32.mrb[0].mxu0
      %v3362 = vpop.f32.mrb[0].mxu0
      %v3363 = vpop.f32.mrb[0].mxu0
      %3364 = vmatprep.mubr.bf16.mxu0 0
      %3365 = vmatmul.mubr.bf16.gmra.mrb[0].mxu0 %v3205
      %v3366 = vpop.f32.mrb[0].mxu0
      %v3367 = vadd.f32 0.0, %v3366
      %v3368 = vpop.f32.mrb[0].mxu0
      %v3369 = vpop.f32.mrb[0].mxu0
      %v3370 = vadd.f32 0.0, %v3369
      %v3371 = vpop.f32.mrb[0].mxu0
      %3372 = vmatprep.mubr.bf16.mxu0 0
      %3373 = vmatmul.mubr.bf16.gmra.mrb[0].mxu0 %v3207
      %v3374 = vpop.f32.mrb[0].mxu0
      %v3375 = vpop.f32.mrb[0].mxu0
      %v3376 = vpop.f32.mrb[0].mxu0
      %v3377 = vpop.f32.mrb[0].mxu0
      %3378 = vmatprep.mubr.bf16.mxu0 0
      %3379 = vmatmul.mubr.bf16.gmra.mrb[0].mxu0 %v3209
      %v3380 = vpop.f32.mrb[0].mxu0
      %v3381 = vadd.f32 0.0, %v3380
      %v3382 = vpop.f32.mrb[0].mxu0
      %v3383 = vpop.f32.mrb[0].mxu0
      %v3384 = vadd.f32 0.0, %v3383
      %v3385 = vpop.f32.mrb[0].mxu0
      %3386 = vmatprep.mubr.bf16.mxu0 0
      %3387 = vmatmul.mubr.bf16.gmra.mrb[0].mxu0 %v3211
      %v3388 = vpop.f32.mrb[0].mxu0
      %v3389 = vpop.f32.mrb[0].mxu0
      %v3390 = vpop.f32.mrb[0].mxu0
      %v3391 = vpop.f32.mrb[0].mxu0
      %3392 = vmatprep.mubr.bf16.mxu0 0
      %3393 = vmatmul.mubr.bf16.gmra.mrb[0].mxu0 %v3213
      %v3394 = vpop.f32.mrb[0].mxu0
      %v3395 = vadd.f32 0.0, %v3394
      %v3396 = vpop.f32.mrb[0].mxu0
      %v3397 = vpop.f32.mrb[0].mxu0
      %v3398 = vadd.f32 0.0, %v3397
      %v3399 = vpop.f32.mrb[0].mxu0
      %3400 = vmatprep.mubr.bf16.mxu0 0
      %3401 = vmatmul.mubr.bf16.gmra.mrb[0].mxu0 %v3215
      %v3402 = vpop.f32.mrb[0].mxu0
      %v3403 = vpop.f32.mrb[0].mxu0
      %v3404 = vpop.f32.mrb[0].mxu0
      %v3405 = vpop.f32.mrb[0].mxu0
      %3406 = vmatprep.mubr.bf16.mxu0 0
      %3407 = vmatmul.mubr.bf16.gmra.mrb[0].mxu0 %v3217
      %v3408 = vpop.f32.mrb[0].mxu0
      %v3409 = vadd.f32 0.0, %v3408
      %v3410 = vpop.f32.mrb[0].mxu0
      %v3411 = vpop.f32.mrb[0].mxu0
      %v3412 = vadd.f32 0.0, %v3411
      %v3413 = vpop.f32.mrb[0].mxu0
      %3414 = vmatprep.mubr.bf16.mxu0 0
      %3415 = vmatmul.mubr.bf16.gmra.mrb[0].mxu0 %v3219
      %v3416 = vpop.f32.mrb[0].mxu0
      %v3417 = vpop.f32.mrb[0].mxu0
      %v3418 = vpop.f32.mrb[0].mxu0
      %v3419 = vpop.f32.mrb[0].mxu0
      %3420 = vmatprep.mubr.bf16.mxu0 0
      %3421 = vmatmul.mubr.bf16.gmra.mrb[0].mxu0 %v3221
      %v3422 = vpop.f32.mrb[0].mxu0
      %v3423 = vadd.f32 0.0, %v3422
      %v3424 = vpop.f32.mrb[0].mxu0
      %v3425 = vpop.f32.mrb[0].mxu0
      %v3426 = vadd.f32 0.0, %v3425
      %v3427 = vpop.f32.mrb[0].mxu0
      %3428 = vmatprep.mubr.bf16.mxu0 0
      %3429 = vmatmul.mubr.bf16.gmra.mrb[0].mxu0 %v3223
      %v3430 = vpop.f32.mrb[0].mxu0
      %v3431 = vpop.f32.mrb[0].mxu0
      %v3432 = vpop.f32.mrb[0].mxu0
      %v3433 = vpop.f32.mrb[0].mxu0
      %3434 = vmatprep.mubr.bf16.mxu0 0
      %3435 = vmatmul.mubr.bf16.gmra.mrb[0].mxu0 %v3225
      %v3436 = vpop.f32.mrb[0].mxu0
      %v3437 = vadd.f32 0.0, %v3436
      %v3438 = vpop.f32.mrb[0].mxu0
      %v3439 = vpop.f32.mrb[0].mxu0
      %v3440 = vadd.f32 0.0, %v3439
      %v3441 = vpop.f32.mrb[0].mxu0
      %3442 = vmatprep.mubr.bf16.mxu0 0
      %3443 = vmatmul.mubr.bf16.gmra.mrb[0].mxu0 %v3227
      %v3444 = vpop.f32.mrb[0].mxu0
      %v3445 = vpop.f32.mrb[0].mxu0
      %v3446 = vpop.f32.mrb[0].mxu0
      %v3447 = vpop.f32.mrb[0].mxu0
      %3448 = vmatprep.mubr.bf16.mxu0 0
      %3449 = vmatmul.mubr.bf16.gmra.mrb[0].mxu0 %v3229
      %v3450 = vpop.f32.mrb[0].mxu0
      %v3451 = vadd.f32 0.0, %v3450
      %v3452 = vpop.f32.mrb[0].mxu0
      %v3453 = vpop.f32.mrb[0].mxu0
      %v3454 = vadd.f32 0.0, %v3453
      %v3455 = vpop.f32.mrb[0].mxu0
      %3456 = vmatprep.mubr.bf16.mxu0 0
      %3457 = vmatmul.mubr.bf16.gmra.mrb[0].mxu0 %v3231
      %v3458 = vpop.f32.mrb[0].mxu0
      %v3459 = vpop.f32.mrb[0].mxu0
      %v3460 = vpop.f32.mrb[0].mxu0
      %v3461 = vpop.f32.mrb[0].mxu0
      %3462 = vmatprep.mubr.bf16.mxu0 0
      %3463 = vmatmul.mubr.bf16.gmra.mrb[0].mxu0 %v3233
      %v3464 = vpop.f32.mrb[0].mxu0
      %v3465 = vadd.f32 0.0, %v3464
      %v3466 = vpop.f32.mrb[0].mxu0
      %v3467 = vpop.f32.mrb[0].mxu0
      %v3468 = vadd.f32 0.0, %v3467
      %v3469 = vpop.f32.mrb[0].mxu0
      %3470 = vmatprep.mubr.bf16.mxu0 0
      %3471 = vmatmul.mubr.bf16.gmra.mrb[0].mxu0 %v3235
      %v3472 = vpop.f32.mrb[0].mxu0
      %v3473 = vpop.f32.mrb[0].mxu0
      %v3474 = vpop.f32.mrb[0].mxu0
      %v3475 = vpop.f32.mrb[0].mxu0
      %3476 = vmatprep.mubr.bf16.mxu0 0
      %3477 = vmatmul.mubr.bf16.gmra.mrb[0].mxu0 %v3237
      %v3478 = vpop.f32.mrb[0].mxu0
      %v3479 = vadd.f32 0.0, %v3478
      %v3480 = vpop.f32.mrb[0].mxu0
      %v3481 = vpop.f32.mrb[0].mxu0
      %v3482 = vadd.f32 0.0, %v3481
      %v3483 = vpop.f32.mrb[0].mxu0
      %3484 = vmatprep.mubr.bf16.mxu0 0
      %3485 = vmatmul.mubr.bf16.gmra.mrb[0].mxu0 %v3239
      %v3486 = vpop.f32.mrb[0].mxu0
      %v3487 = vpop.f32.mrb[0].mxu0
      %v3488 = vpop.f32.mrb[0].mxu0
      %v3489 = vpop.f32.mrb[0].mxu0
      %3490 = vmatprep.mubr.bf16.mxu0 0
      %3491 = vmatmul.mubr.bf16.gmra.mrb[0].mxu0 %v3241
      %v3492 = vpop.f32.mrb[0].mxu0
      %v3493 = vadd.f32 0.0, %v3492
      %v3494 = vpop.f32.mrb[0].mxu0
      %v3495 = vpop.f32.mrb[0].mxu0
      %v3496 = vadd.f32 0.0, %v3495
      %v3497 = vpop.f32.mrb[0].mxu0
      %3498 = vmatprep.mubr.bf16.mxu0 0
      %3499 = vmatmul.mubr.bf16.gmra.mrb[0].mxu0 %v3243
      %v3500 = vpop.f32.mrb[0].mxu0
      %v3501 = vpop.f32.mrb[0].mxu0
      %v3502 = vpop.f32.mrb[0].mxu0
      %v3503 = vpop.f32.mrb[0].mxu0
      %3504 = vdwg.mxu0
      %s3505 = scalar_lea.vmem %s4, 8
      %v3506 = vld [vmem:[%s3505] sm:$0xf]
      %v3507 = vld [vmem:[%s3505 + $0x4] sm:$0x3]
      %v3510 = vunpack.c.l.b16 %v3506
      %v3511 = vunpack.c.l.b16 %v3507
      %v3512 = vpack.c.b16 %v3511, %v3510
      %v3514 = vsel %vm1237, %v3512, 0
      %3516 = vmatprep.subr.bf16.mxu0 0
      %3517 = vmatpush1.bf16.msra.mxu0 %v3514
      %3518 = vmatprep.subr.bf16.mxu0 0
      %3519 = vmatpush1.bf16.msra.mxu0 0
      %3520 = vmatprep.subr.bf16.mxu0 0
      %3521 = vmatpush1.bf16.msra.mxu0 0
      %3522 = vmatprep.subr.bf16.mxu0 0
      %3523 = vmatpush1.bf16.msra.mxu0 0
      %3524 = vmatprep.subr.bf16.mxu0 0
      %3525 = vmatpush1.bf16.msra.mxu0 0
      %3526 = vmatprep.subr.bf16.mxu0 0
      %3527 = vmatpush1.bf16.msra.mxu0 0
      %3528 = vmatprep.subr.bf16.mxu0 0
      %3529 = vmatpush1.bf16.msra.mxu0 0
      %3530 = vmatprep.subr.bf16.mxu0 0
      %3531 = vmatpush1.bf16.msra.mxu0 0
      %3532 = vmatprep.subr.bf16.mxu0 0
      %3533 = vmatpush1.bf16.msra.mxu0 0
      %3534 = vmatprep.subr.bf16.mxu0 0
      %3535 = vmatpush1.bf16.msra.mxu0 0
      %3536 = vmatprep.subr.bf16.mxu0 0
      %3537 = vmatpush1.bf16.msra.mxu0 0
      %3538 = vmatprep.subr.bf16.mxu0 0
      %3539 = vmatpush1.bf16.msra.mxu0 0
      %3540 = vmatprep.subr.bf16.mxu0 0
      %3541 = vmatpush1.bf16.msra.mxu0 0
      %3542 = vmatprep.subr.bf16.mxu0 0
      %3543 = vmatpush1.bf16.msra.mxu0 0
      %3544 = vmatprep.subr.bf16.mxu0 0
      %3545 = vmatpush1.bf16.msra.mxu0 0
      %3546 = vmatprep.subr.bf16.mxu0 0
      %3547 = vmatpush1.bf16.msra.mxu0 0
      %3548 = vmatprep.mubr.bf16.mxu0 0
      %3549 = vmatmul.mubr.bf16.gmra.mrb[0].mxu0 %v3181
      %v3550 = vpop.f32.mrb[0].mxu0
      %v3551 = vadd.f32 0.0, %v3550
      %v3552 = vpop.f32.mrb[0].mxu0
      %v3553 = vpop.f32.mrb[0].mxu0
      %v3554 = vadd.f32 0.0, %v3553
      %v3555 = vpop.f32.mrb[0].mxu0
      %3556 = vmatprep.mubr.bf16.mxu0 0
      %3557 = vmatmul.mubr.bf16.gmra.mrb[0].mxu0 %v3183
      %v3558 = vpop.f32.mrb[0].mxu0
      %v3559 = vadd.f32 0.0, %v3558
      %v3560 = vpop.f32.mrb[0].mxu0
      %v3561 = vpop.f32.mrb[0].mxu0
      %v3562 = vpop.f32.mrb[0].mxu0
      %3563 = vmatprep.mubr.bf16.mxu0 0
      %3564 = vmatmul.mubr.bf16.gmra.mrb[0].mxu0 %v3185
      %v3565 = vpop.f32.mrb[0].mxu0
      %v3566 = vadd.f32 0.0, %v3565
      %v3567 = vpop.f32.mrb[0].mxu0
      %v3568 = vpop.f32.mrb[0].mxu0
      %v3569 = vadd.f32 0.0, %v3568
      %v3570 = vpop.f32.mrb[0].mxu0
      %3571 = vmatprep.mubr.bf16.mxu0 0
      %3572 = vmatmul.mubr.bf16.gmra.mrb[0].mxu0 %v3187
      %v3573 = vpop.f32.mrb[0].mxu0
      %v3574 = vadd.f32 0.0, %v3573
      %v3575 = vpop.f32.mrb[0].mxu0
      %v3576 = vpop.f32.mrb[0].mxu0
      %v3577 = vpop.f32.mrb[0].mxu0
      %3578 = vmatprep.mubr.bf16.mxu0 0
      %3579 = vmatmul.mubr.bf16.gmra.mrb[0].mxu0 %v3189
      %v3580 = vpop.f32.mrb[0].mxu0
      %v3581 = vadd.f32 0.0, %v3580
      %v3582 = vpop.f32.mrb[0].mxu0
      %v3583 = vpop.f32.mrb[0].mxu0
      %v3584 = vadd.f32 0.0, %v3583
      %v3585 = vpop.f32.mrb[0].mxu0
      %3586 = vmatprep.mubr.bf16.mxu0 0
      %3587 = vmatmul.mubr.bf16.gmra.mrb[0].mxu0 %v3191
      %v3588 = vpop.f32.mrb[0].mxu0
      %v3589 = vadd.f32 0.0, %v3588
      %v3590 = vpop.f32.mrb[0].mxu0
      %v3591 = vpop.f32.mrb[0].mxu0
      %v3592 = vpop.f32.mrb[0].mxu0
      %3593 = vmatprep.mubr.bf16.mxu0 0
      %3594 = vmatmul.mubr.bf16.gmra.mrb[0].mxu0 %v3193
      %v3595 = vpop.f32.mrb[0].mxu0
      %v3596 = vadd.f32 0.0, %v3595
      %v3597 = vpop.f32.mrb[0].mxu0
      %v3598 = vpop.f32.mrb[0].mxu0
      %v3599 = vadd.f32 0.0, %v3598
      %v3600 = vpop.f32.mrb[0].mxu0
      %3601 = vmatprep.mubr.bf16.mxu0 0
      %3602 = vmatmul.mubr.bf16.gmra.mrb[0].mxu0 %v3195
      %v3603 = vpop.f32.mrb[0].mxu0
      %v3604 = vadd.f32 0.0, %v3603
      %v3605 = vpop.f32.mrb[0].mxu0
      %v3606 = vpop.f32.mrb[0].mxu0
      %v3607 = vpop.f32.mrb[0].mxu0
      %3608 = vmatprep.mubr.bf16.mxu0 0
      %3609 = vmatmul.mubr.bf16.gmra.mrb[0].mxu0 %v3197
      %v3610 = vpop.f32.mrb[0].mxu0
      %v3611 = vadd.f32 0.0, %v3610
      %v3612 = vpop.f32.mrb[0].mxu0
      %v3613 = vpop.f32.mrb[0].mxu0
      %v3614 = vadd.f32 0.0, %v3613
      %v3615 = vpop.f32.mrb[0].mxu0
      %3616 = vmatprep.mubr.bf16.mxu0 0
      %3617 = vmatmul.mubr.bf16.gmra.mrb[0].mxu0 %v3199
      %v3618 = vpop.f32.mrb[0].mxu0
      %v3619 = vadd.f32 0.0, %v3618
      %v3620 = vpop.f32.mrb[0].mxu0
      %v3621 = vpop.f32.mrb[0].mxu0
      %v3622 = vpop.f32.mrb[0].mxu0
      %3623 = vmatprep.mubr.bf16.mxu0 0
      %3624 = vmatmul.mubr.bf16.gmra.mrb[0].mxu0 %v3201
      %v3625 = vpop.f32.mrb[0].mxu0
      %v3626 = vadd.f32 0.0, %v3625
      %v3627 = vpop.f32.mrb[0].mxu0
      %v3628 = vpop.f32.mrb[0].mxu0
      %v3629 = vadd.f32 0.0, %v3628
      %v3630 = vpop.f32.mrb[0].mxu0
      %3631 = vmatprep.mubr.bf16.mxu0 0
      %3632 = vmatmul.mubr.bf16.gmra.mrb[0].mxu0 %v3203
      %v3633 = vpop.f32.mrb[0].mxu0
      %v3634 = vadd.f32 0.0, %v3633
      %v3635 = vpop.f32.mrb[0].mxu0
      %v3636 = vpop.f32.mrb[0].mxu0
      %v3637 = vpop.f32.mrb[0].mxu0
      %3638 = vmatprep.mubr.bf16.mxu0 0
      %3639 = vmatmul.mubr.bf16.gmra.mrb[0].mxu0 %v3205
      %v3640 = vpop.f32.mrb[0].mxu0
      %v3641 = vadd.f32 0.0, %v3640
      %v3642 = vpop.f32.mrb[0].mxu0
      %v3643 = vpop.f32.mrb[0].mxu0
      %v3644 = vadd.f32 0.0, %v3643
      %v3645 = vpop.f32.mrb[0].mxu0
      %3646 = vmatprep.mubr.bf16.mxu0 0
      %3647 = vmatmul.mubr.bf16.gmra.mrb[0].mxu0 %v3207
      %v3648 = vpop.f32.mrb[0].mxu0
      %v3649 = vadd.f32 0.0, %v3648
      %v3650 = vpop.f32.mrb[0].mxu0
      %v3651 = vpop.f32.mrb[0].mxu0
      %v3652 = vpop.f32.mrb[0].mxu0
      %3653 = vmatprep.mubr.bf16.mxu0 0
      %3654 = vmatmul.mubr.bf16.gmra.mrb[0].mxu0 %v3209
      %v3655 = vpop.f32.mrb[0].mxu0
      %v3656 = vadd.f32 0.0, %v3655
      %v3657 = vpop.f32.mrb[0].mxu0
      %v3658 = vpop.f32.mrb[0].mxu0
      %v3659 = vadd.f32 0.0, %v3658
      %v3660 = vpop.f32.mrb[0].mxu0
      %3661 = vmatprep.mubr.bf16.mxu0 0
      %3662 = vmatmul.mubr.bf16.gmra.mrb[0].mxu0 %v3211
      %v3663 = vpop.f32.mrb[0].mxu0
      %v3664 = vadd.f32 0.0, %v3663
      %v3665 = vpop.f32.mrb[0].mxu0
      %v3666 = vpop.f32.mrb[0].mxu0
      %v3667 = vpop.f32.mrb[0].mxu0
      %3668 = vmatprep.mubr.bf16.mxu0 0
      %3669 = vmatmul.mubr.bf16.gmra.mrb[0].mxu0 %v3213
      %v3670 = vpop.f32.mrb[0].mxu0
      %v3671 = vadd.f32 0.0, %v3670
      %v3672 = vpop.f32.mrb[0].mxu0
      %v3673 = vpop.f32.mrb[0].mxu0
      %v3674 = vadd.f32 0.0, %v3673
      %v3675 = vpop.f32.mrb[0].mxu0
      %3676 = vmatprep.mubr.bf16.mxu0 0
      %3677 = vmatmul.mubr.bf16.gmra.mrb[0].mxu0 %v3215
      %v3678 = vpop.f32.mrb[0].mxu0
      %v3679 = vadd.f32 0.0, %v3678
      %v3680 = vpop.f32.mrb[0].mxu0
      %v3681 = vpop.f32.mrb[0].mxu0
      %v3682 = vpop.f32.mrb[0].mxu0
      %3683 = vmatprep.mubr.bf16.mxu0 0
      %3684 = vmatmul.mubr.bf16.gmra.mrb[0].mxu0 %v3217
      %v3685 = vpop.f32.mrb[0].mxu0
      %v3686 = vadd.f32 0.0, %v3685
      %v3687 = vpop.f32.mrb[0].mxu0
      %v3688 = vpop.f32.mrb[0].mxu0
      %v3689 = vadd.f32 0.0, %v3688
      %v3690 = vpop.f32.mrb[0].mxu0
      %3691 = vmatprep.mubr.bf16.mxu0 0
      %3692 = vmatmul.mubr.bf16.gmra.mrb[0].mxu0 %v3219
      %v3693 = vpop.f32.mrb[0].mxu0
      %v3694 = vadd.f32 0.0, %v3693
      %v3695 = vpop.f32.mrb[0].mxu0
      %v3696 = vpop.f32.mrb[0].mxu0
      %v3697 = vpop.f32.mrb[0].mxu0
      %3698 = vmatprep.mubr.bf16.mxu0 0
      %3699 = vmatmul.mubr.bf16.gmra.mrb[0].mxu0 %v3221
      %v3700 = vpop.f32.mrb[0].mxu0
      %v3701 = vadd.f32 0.0, %v3700
      %v3702 = vpop.f32.mrb[0].mxu0
      %v3703 = vpop.f32.mrb[0].mxu0
      %v3704 = vadd.f32 0.0, %v3703
      %v3705 = vpop.f32.mrb[0].mxu0
      %3706 = vmatprep.mubr.bf16.mxu0 0
      %3707 = vmatmul.mubr.bf16.gmra.mrb[0].mxu0 %v3223
      %v3708 = vpop.f32.mrb[0].mxu0
      %v3709 = vadd.f32 0.0, %v3708
      %v3710 = vpop.f32.mrb[0].mxu0
      %v3711 = vpop.f32.mrb[0].mxu0
      %v3712 = vpop.f32.mrb[0].mxu0
      %3713 = vmatprep.mubr.bf16.mxu0 0
      %3714 = vmatmul.mubr.bf16.gmra.mrb[0].mxu0 %v3225
      %v3715 = vpop.f32.mrb[0].mxu0
      %v3716 = vadd.f32 0.0, %v3715
      %v3717 = vpop.f32.mrb[0].mxu0
      %v3718 = vpop.f32.mrb[0].mxu0
      %v3719 = vadd.f32 0.0, %v3718
      %v3720 = vpop.f32.mrb[0].mxu0
      %3721 = vmatprep.mubr.bf16.mxu0 0
      %3722 = vmatmul.mubr.bf16.gmra.mrb[0].mxu0 %v3227
      %v3723 = vpop.f32.mrb[0].mxu0
      %v3724 = vadd.f32 0.0, %v3723
      %v3725 = vpop.f32.mrb[0].mxu0
      %v3726 = vpop.f32.mrb[0].mxu0
      %v3727 = vpop.f32.mrb[0].mxu0
      %3728 = vmatprep.mubr.bf16.mxu0 0
      %3729 = vmatmul.mubr.bf16.gmra.mrb[0].mxu0 %v3229
      %v3730 = vpop.f32.mrb[0].mxu0
      %v3731 = vadd.f32 0.0, %v3730
      %v3732 = vpop.f32.mrb[0].mxu0
      %v3733 = vpop.f32.mrb[0].mxu0
      %v3734 = vadd.f32 0.0, %v3733
      %v3735 = vpop.f32.mrb[0].mxu0
      %3736 = vmatprep.mubr.bf16.mxu0 0
      %3737 = vmatmul.mubr.bf16.gmra.mrb[0].mxu0 %v3231
      %v3738 = vpop.f32.mrb[0].mxu0
      %v3739 = vadd.f32 0.0, %v3738
      %v3740 = vpop.f32.mrb[0].mxu0
      %v3741 = vpop.f32.mrb[0].mxu0
      %v3742 = vpop.f32.mrb[0].mxu0
      %3743 = vmatprep.mubr.bf16.mxu0 0
      %3744 = vmatmul.mubr.bf16.gmra.mrb[0].mxu0 %v3233
      %v3745 = vpop.f32.mrb[0].mxu0
      %v3746 = vadd.f32 0.0, %v3745
      %v3747 = vpop.f32.mrb[0].mxu0
      %v3748 = vpop.f32.mrb[0].mxu0
      %v3749 = vadd.f32 0.0, %v3748
      %v3750 = vpop.f32.mrb[0].mxu0
      %3751 = vmatprep.mubr.bf16.mxu0 0
      %3752 = vmatmul.mubr.bf16.gmra.mrb[0].mxu0 %v3235
      %v3753 = vpop.f32.mrb[0].mxu0
      %v3754 = vadd.f32 0.0, %v3753
      %v3755 = vpop.f32.mrb[0].mxu0
      %v3756 = vpop.f32.mrb[0].mxu0
      %v3757 = vpop.f32.mrb[0].mxu0
      %3758 = vmatprep.mubr.bf16.mxu0 0
      %3759 = vmatmul.mubr.bf16.gmra.mrb[0].mxu0 %v3237
      %v3760 = vpop.f32.mrb[0].mxu0
      %v3761 = vadd.f32 0.0, %v3760
      %v3762 = vpop.f32.mrb[0].mxu0
      %v3763 = vpop.f32.mrb[0].mxu0
      %v3764 = vadd.f32 0.0, %v3763
      %v3765 = vpop.f32.mrb[0].mxu0
      %3766 = vmatprep.mubr.bf16.mxu0 0
      %3767 = vmatmul.mubr.bf16.gmra.mrb[0].mxu0 %v3239
      %v3768 = vpop.f32.mrb[0].mxu0
      %v3769 = vadd.f32 0.0, %v3768
      %v3770 = vpop.f32.mrb[0].mxu0
      %v3771 = vpop.f32.mrb[0].mxu0
      %v3772 = vpop.f32.mrb[0].mxu0
      %3773 = vmatprep.mubr.bf16.mxu0 0
      %3774 = vmatmul.mubr.bf16.gmra.mrb[0].mxu0 %v3241
      %v3775 = vpop.f32.mrb[0].mxu0
      %v3776 = vadd.f32 0.0, %v3775
      %v3777 = vpop.f32.mrb[0].mxu0
      %v3778 = vpop.f32.mrb[0].mxu0
      %v3779 = vadd.f32 0.0, %v3778
      %v3780 = vpop.f32.mrb[0].mxu0
      %3781 = vmatprep.mubr.bf16.mxu0 0
      %3782 = vmatmul.mubr.bf16.gmra.mrb[0].mxu0 %v3243
      %v3783 = vpop.f32.mrb[0].mxu0
      %v3784 = vadd.f32 0.0, %v3783
      %v3785 = vpop.f32.mrb[0].mxu0
      %v3786 = vpop.f32.mrb[0].mxu0
      %v3787 = vpop.f32.mrb[0].mxu0
      %3788 = vdwg.mxu0
      %v3837 = vrot.slane %v3551, 1
      %v3838 = vrot.slane %v3554, 1
      %v3839 = vsel %vm1830, %v3837, %v3838
      %v3840 = vrot.slane %v3559, 1
      %v3841 = vsel %vm1830, %v3838, %v3840
      %v3842 = vrot.slane %v3566, 1
      %v3843 = vrot.slane %v3569, 1
      %v3844 = vsel %vm1830, %v3842, %v3843
      %v3845 = vrot.slane %v3574, 1
      %v3846 = vsel %vm1830, %v3843, %v3845
      %v3847 = vrot.slane %v3581, 1
      %v3848 = vrot.slane %v3584, 1
      %v3849 = vsel %vm1830, %v3847, %v3848
      %v3850 = vrot.slane %v3589, 1
      %v3851 = vsel %vm1830, %v3848, %v3850
      %v3852 = vrot.slane %v3596, 1
      %v3853 = vrot.slane %v3599, 1
      %v3854 = vsel %vm1830, %v3852, %v3853
      %v3855 = vrot.slane %v3604, 1
      %v3856 = vsel %vm1830, %v3853, %v3855
      %v3857 = vrot.slane %v3611, 1
      %v3858 = vrot.slane %v3614, 1
      %v3859 = vsel %vm1830, %v3857, %v3858
      %v3860 = vrot.slane %v3619, 1
      %v3861 = vsel %vm1830, %v3858, %v3860
      %v3862 = vrot.slane %v3626, 1
      %v3863 = vrot.slane %v3629, 1
      %v3864 = vsel %vm1830, %v3862, %v3863
      %v3865 = vrot.slane %v3634, 1
      %v3866 = vsel %vm1830, %v3863, %v3865
      %v3867 = vrot.slane %v3641, 1
      %v3868 = vrot.slane %v3644, 1
      %v3869 = vsel %vm1830, %v3867, %v3868
      %v3870 = vrot.slane %v3649, 1
      %v3871 = vsel %vm1830, %v3868, %v3870
      %v3872 = vrot.slane %v3656, 1
      %v3873 = vrot.slane %v3659, 1
      %v3874 = vsel %vm1830, %v3872, %v3873
      %v3875 = vrot.slane %v3664, 1
      %v3876 = vsel %vm1830, %v3873, %v3875
      %v3877 = vrot.slane %v3671, 1
      %v3878 = vrot.slane %v3674, 1
      %v3879 = vsel %vm1830, %v3877, %v3878
      %v3880 = vrot.slane %v3679, 1
      %v3881 = vsel %vm1830, %v3878, %v3880
      %v3882 = vrot.slane %v3686, 1
      %v3883 = vrot.slane %v3689, 1
      %v3884 = vsel %vm1830, %v3882, %v3883
      %v3885 = vrot.slane %v3694, 1
      %v3886 = vsel %vm1830, %v3883, %v3885
      %v3887 = vrot.slane %v3701, 1
      %v3888 = vrot.slane %v3704, 1
      %v3889 = vsel %vm1830, %v3887, %v3888
      %v3890 = vrot.slane %v3709, 1
      %v3891 = vsel %vm1830, %v3888, %v3890
      %v3892 = vrot.slane %v3716, 1
      %v3893 = vrot.slane %v3719, 1
      %v3894 = vsel %vm1830, %v3892, %v3893
      %v3895 = vrot.slane %v3724, 1
      %v3896 = vsel %vm1830, %v3893, %v3895
      %v3897 = vrot.slane %v3731, 1
      %v3898 = vrot.slane %v3734, 1
      %v3899 = vsel %vm1830, %v3897, %v3898
      %v3900 = vrot.slane %v3739, 1
      %v3901 = vsel %vm1830, %v3898, %v3900
      %v3902 = vrot.slane %v3746, 1
      %v3903 = vrot.slane %v3749, 1
      %v3904 = vsel %vm1830, %v3902, %v3903
      %v3905 = vrot.slane %v3754, 1
      %v3906 = vsel %vm1830, %v3903, %v3905
      %v3907 = vrot.slane %v3761, 1
      %v3908 = vrot.slane %v3764, 1
      %v3909 = vsel %vm1830, %v3907, %v3908
      %v3910 = vrot.slane %v3769, 1
      %v3911 = vsel %vm1830, %v3908, %v3910
      %v3912 = vrot.slane %v3776, 1
      %v3913 = vrot.slane %v3779, 1
      %v3914 = vsel %vm1830, %v3912, %v3913
      %v3915 = vrot.slane %v3784, 1
      %v3916 = vsel %vm1830, %v3913, %v3915
      %v3949 = vadd.f32 %v3283, %v3839
      %v3950 = vadd.f32 %v3286, %v3841
      %v3951 = vadd.f32 %v3297, %v3844
      %v3952 = vadd.f32 %v3300, %v3846
      %v3953 = vadd.f32 %v3311, %v3849
      %v3954 = vadd.f32 %v3314, %v3851
      %v3955 = vadd.f32 %v3325, %v3854
      %v3956 = vadd.f32 %v3328, %v3856
      %v3957 = vadd.f32 %v3339, %v3859
      %v3958 = vadd.f32 %v3342, %v3861
      %v3959 = vadd.f32 %v3353, %v3864
      %v3960 = vadd.f32 %v3356, %v3866
      %v3961 = vadd.f32 %v3367, %v3869
      %v3962 = vadd.f32 %v3370, %v3871
      %v3963 = vadd.f32 %v3381, %v3874
      %v3964 = vadd.f32 %v3384, %v3876
      %v3965 = vadd.f32 %v3395, %v3879
      %v3966 = vadd.f32 %v3398, %v3881
      %v3967 = vadd.f32 %v3409, %v3884
      %v3968 = vadd.f32 %v3412, %v3886
      %v3969 = vadd.f32 %v3423, %v3889
      %v3970 = vadd.f32 %v3426, %v3891
      %v3971 = vadd.f32 %v3437, %v3894
      %v3972 = vadd.f32 %v3440, %v3896
      %v3973 = vadd.f32 %v3451, %v3899
      %v3974 = vadd.f32 %v3454, %v3901
      %v3975 = vadd.f32 %v3465, %v3904
      %v3976 = vadd.f32 %v3468, %v3906
      %v3977 = vadd.f32 %v3479, %v3909
      %v3978 = vadd.f32 %v3482, %v3911
      %v3979 = vadd.f32 %v3493, %v3914
      %v3980 = vadd.f32 %v3496, %v3916
      %s3981 = scalar_lea.vmem %s4, 16
      %v3982 = vld [vmem:[%s3981] sm:$0xf]
      %v3983 = vld [vmem:[%s3981 + $0x4] sm:$0x3]
      %v3986 = vunpack.c.l.b16 %v3982
      %v3987 = vunpack.c.l.b16 %v3983
      %v3988 = vpack.c.b16 %v3987, %v3986
      %v3990 = vsel %vm1237, %v3988, 0
      %3992 = vmatprep.subr.bf16.mxu0 0
      %3993 = vmatpush1.bf16.msra.mxu0 %v3990
      %3994 = vmatprep.subr.bf16.mxu0 0
      %3995 = vmatpush1.bf16.msra.mxu0 0
      %3996 = vmatprep.subr.bf16.mxu0 0
      %3997 = vmatpush1.bf16.msra.mxu0 0
      %3998 = vmatprep.subr.bf16.mxu0 0
      %3999 = vmatpush1.bf16.msra.mxu0 0
      %4000 = vmatprep.subr.bf16.mxu0 0
      %4001 = vmatpush1.bf16.msra.mxu0 0
      %4002 = vmatprep.subr.bf16.mxu0 0
      %4003 = vmatpush1.bf16.msra.mxu0 0
      %4004 = vmatprep.subr.bf16.mxu0 0
      %4005 = vmatpush1.bf16.msra.mxu0 0
      %4006 = vmatprep.subr.bf16.mxu0 0
      %4007 = vmatpush1.bf16.msra.mxu0 0
      %4008 = vmatprep.subr.bf16.mxu0 0
      %4009 = vmatpush1.bf16.msra.mxu0 0
      %4010 = vmatprep.subr.bf16.mxu0 0
      %4011 = vmatpush1.bf16.msra.mxu0 0
      %4012 = vmatprep.subr.bf16.mxu0 0
      %4013 = vmatpush1.bf16.msra.mxu0 0
      %4014 = vmatprep.subr.bf16.mxu0 0
      %4015 = vmatpush1.bf16.msra.mxu0 0
      %4016 = vmatprep.subr.bf16.mxu0 0
      %4017 = vmatpush1.bf16.msra.mxu0 0
      %4018 = vmatprep.subr.bf16.mxu0 0
      %4019 = vmatpush1.bf16.msra.mxu0 0
      %4020 = vmatprep.subr.bf16.mxu0 0
      %4021 = vmatpush1.bf16.msra.mxu0 0
      %4022 = vmatprep.subr.bf16.mxu0 0
      %4023 = vmatpush1.bf16.msra.mxu0 0
      %4024 = vmatprep.mubr.bf16.mxu0 0
      %4025 = vmatmul.mubr.bf16.gmra.mrb[0].mxu0 %v3181
      %v4026 = vpop.f32.mrb[0].mxu0
      %v4027 = vadd.f32 0.0, %v4026
      %v4028 = vpop.f32.mrb[0].mxu0
      %v4029 = vpop.f32.mrb[0].mxu0
      %v4030 = vadd.f32 0.0, %v4029
      %v4031 = vpop.f32.mrb[0].mxu0
      %4032 = vmatprep.mubr.bf16.mxu0 0
      %4033 = vmatmul.mubr.bf16.gmra.mrb[0].mxu0 %v3183
      %v4034 = vpop.f32.mrb[0].mxu0
      %v4035 = vadd.f32 0.0, %v4034
      %v4036 = vpop.f32.mrb[0].mxu0
      %v4037 = vpop.f32.mrb[0].mxu0
      %v4038 = vpop.f32.mrb[0].mxu0
      %4039 = vmatprep.mubr.bf16.mxu0 0
      %4040 = vmatmul.mubr.bf16.gmra.mrb[0].mxu0 %v3185
      %v4041 = vpop.f32.mrb[0].mxu0
      %v4042 = vadd.f32 0.0, %v4041
      %v4043 = vpop.f32.mrb[0].mxu0
      %v4044 = vpop.f32.mrb[0].mxu0
      %v4045 = vadd.f32 0.0, %v4044
      %v4046 = vpop.f32.mrb[0].mxu0
      %4047 = vmatprep.mubr.bf16.mxu0 0
      %4048 = vmatmul.mubr.bf16.gmra.mrb[0].mxu0 %v3187
      %v4049 = vpop.f32.mrb[0].mxu0
      %v4050 = vadd.f32 0.0, %v4049
      %v4051 = vpop.f32.mrb[0].mxu0
      %v4052 = vpop.f32.mrb[0].mxu0
      %v4053 = vpop.f32.mrb[0].mxu0
      %4054 = vmatprep.mubr.bf16.mxu0 0
      %4055 = vmatmul.mubr.bf16.gmra.mrb[0].mxu0 %v3189
      %v4056 = vpop.f32.mrb[0].mxu0
      %v4057 = vadd.f32 0.0, %v4056
      %v4058 = vpop.f32.mrb[0].mxu0
      %v4059 = vpop.f32.mrb[0].mxu0
      %v4060 = vadd.f32 0.0, %v4059
      %v4061 = vpop.f32.mrb[0].mxu0
      %4062 = vmatprep.mubr.bf16.mxu0 0
      %4063 = vmatmul.mubr.bf16.gmra.mrb[0].mxu0 %v3191
      %v4064 = vpop.f32.mrb[0].mxu0
      %v4065 = vadd.f32 0.0, %v4064
      %v4066 = vpop.f32.mrb[0].mxu0
      %v4067 = vpop.f32.mrb[0].mxu0
      %v4068 = vpop.f32.mrb[0].mxu0
      %4069 = vmatprep.mubr.bf16.mxu0 0
      %4070 = vmatmul.mubr.bf16.gmra.mrb[0].mxu0 %v3193
      %v4071 = vpop.f32.mrb[0].mxu0
      %v4072 = vadd.f32 0.0, %v4071
      %v4073 = vpop.f32.mrb[0].mxu0
      %v4074 = vpop.f32.mrb[0].mxu0
      %v4075 = vadd.f32 0.0, %v4074
      %v4076 = vpop.f32.mrb[0].mxu0
      %4077 = vmatprep.mubr.bf16.mxu0 0
      %4078 = vmatmul.mubr.bf16.gmra.mrb[0].mxu0 %v3195
      %v4079 = vpop.f32.mrb[0].mxu0
      %v4080 = vadd.f32 0.0, %v4079
      %v4081 = vpop.f32.mrb[0].mxu0
      %v4082 = vpop.f32.mrb[0].mxu0
      %v4083 = vpop.f32.mrb[0].mxu0
      %4084 = vmatprep.mubr.bf16.mxu0 0
      %4085 = vmatmul.mubr.bf16.gmra.mrb[0].mxu0 %v3197
      %v4086 = vpop.f32.mrb[0].mxu0
      %v4087 = vadd.f32 0.0, %v4086
      %v4088 = vpop.f32.mrb[0].mxu0
      %v4089 = vpop.f32.mrb[0].mxu0
      %v4090 = vadd.f32 0.0, %v4089
      %v4091 = vpop.f32.mrb[0].mxu0
      %4092 = vmatprep.mubr.bf16.mxu0 0
      %4093 = vmatmul.mubr.bf16.gmra.mrb[0].mxu0 %v3199
      %v4094 = vpop.f32.mrb[0].mxu0
      %v4095 = vadd.f32 0.0, %v4094
      %v4096 = vpop.f32.mrb[0].mxu0
      %v4097 = vpop.f32.mrb[0].mxu0
      %v4098 = vpop.f32.mrb[0].mxu0
      %4099 = vmatprep.mubr.bf16.mxu0 0
      %4100 = vmatmul.mubr.bf16.gmra.mrb[0].mxu0 %v3201
      %v4101 = vpop.f32.mrb[0].mxu0
      %v4102 = vadd.f32 0.0, %v4101
      %v4103 = vpop.f32.mrb[0].mxu0
      %v4104 = vpop.f32.mrb[0].mxu0
      %v4105 = vadd.f32 0.0, %v4104
      %v4106 = vpop.f32.mrb[0].mxu0
      %4107 = vmatprep.mubr.bf16.mxu0 0
      %4108 = vmatmul.mubr.bf16.gmra.mrb[0].mxu0 %v3203
      %v4109 = vpop.f32.mrb[0].mxu0
      %v4110 = vadd.f32 0.0, %v4109
      %v4111 = vpop.f32.mrb[0].mxu0
      %v4112 = vpop.f32.mrb[0].mxu0
      %v4113 = vpop.f32.mrb[0].mxu0
      %4114 = vmatprep.mubr.bf16.mxu0 0
      %4115 = vmatmul.mubr.bf16.gmra.mrb[0].mxu0 %v3205
      %v4116 = vpop.f32.mrb[0].mxu0
      %v4117 = vadd.f32 0.0, %v4116
      %v4118 = vpop.f32.mrb[0].mxu0
      %v4119 = vpop.f32.mrb[0].mxu0
      %v4120 = vadd.f32 0.0, %v4119
      %v4121 = vpop.f32.mrb[0].mxu0
      %4122 = vmatprep.mubr.bf16.mxu0 0
      %4123 = vmatmul.mubr.bf16.gmra.mrb[0].mxu0 %v3207
      %v4124 = vpop.f32.mrb[0].mxu0
      %v4125 = vadd.f32 0.0, %v4124
      %v4126 = vpop.f32.mrb[0].mxu0
      %v4127 = vpop.f32.mrb[0].mxu0
      %v4128 = vpop.f32.mrb[0].mxu0
      %4129 = vmatprep.mubr.bf16.mxu0 0
      %4130 = vmatmul.mubr.bf16.gmra.mrb[0].mxu0 %v3209
      %v4131 = vpop.f32.mrb[0].mxu0
      %v4132 = vadd.f32 0.0, %v4131
      %v4133 = vpop.f32.mrb[0].mxu0
      %v4134 = vpop.f32.mrb[0].mxu0
      %v4135 = vadd.f32 0.0, %v4134
      %v4136 = vpop.f32.mrb[0].mxu0
      %4137 = vmatprep.mubr.bf16.mxu0 0
      %4138 = vmatmul.mubr.bf16.gmra.mrb[0].mxu0 %v3211
      %v4139 = vpop.f32.mrb[0].mxu0
      %v4140 = vadd.f32 0.0, %v4139
      %v4141 = vpop.f32.mrb[0].mxu0
      %v4142 = vpop.f32.mrb[0].mxu0
      %v4143 = vpop.f32.mrb[0].mxu0
      %4144 = vmatprep.mubr.bf16.mxu0 0
      %4145 = vmatmul.mubr.bf16.gmra.mrb[0].mxu0 %v3213
      %v4146 = vpop.f32.mrb[0].mxu0
      %v4147 = vadd.f32 0.0, %v4146
      %v4148 = vpop.f32.mrb[0].mxu0
      %v4149 = vpop.f32.mrb[0].mxu0
      %v4150 = vadd.f32 0.0, %v4149
      %v4151 = vpop.f32.mrb[0].mxu0
      %4152 = vmatprep.mubr.bf16.mxu0 0
      %4153 = vmatmul.mubr.bf16.gmra.mrb[0].mxu0 %v3215
      %v4154 = vpop.f32.mrb[0].mxu0
      %v4155 = vadd.f32 0.0, %v4154
      %v4156 = vpop.f32.mrb[0].mxu0
      %v4157 = vpop.f32.mrb[0].mxu0
      %v4158 = vpop.f32.mrb[0].mxu0
      %4159 = vmatprep.mubr.bf16.mxu0 0
      %4160 = vmatmul.mubr.bf16.gmra.mrb[0].mxu0 %v3217
      %v4161 = vpop.f32.mrb[0].mxu0
      %v4162 = vadd.f32 0.0, %v4161
      %v4163 = vpop.f32.mrb[0].mxu0
      %v4164 = vpop.f32.mrb[0].mxu0
      %v4165 = vadd.f32 0.0, %v4164
      %v4166 = vpop.f32.mrb[0].mxu0
      %4167 = vmatprep.mubr.bf16.mxu0 0
      %4168 = vmatmul.mubr.bf16.gmra.mrb[0].mxu0 %v3219
      %v4169 = vpop.f32.mrb[0].mxu0
      %v4170 = vadd.f32 0.0, %v4169
      %v4171 = vpop.f32.mrb[0].mxu0
      %v4172 = vpop.f32.mrb[0].mxu0
      %v4173 = vpop.f32.mrb[0].mxu0
      %4174 = vmatprep.mubr.bf16.mxu0 0
      %4175 = vmatmul.mubr.bf16.gmra.mrb[0].mxu0 %v3221
      %v4176 = vpop.f32.mrb[0].mxu0
      %v4177 = vadd.f32 0.0, %v4176
      %v4178 = vpop.f32.mrb[0].mxu0
      %v4179 = vpop.f32.mrb[0].mxu0
      %v4180 = vadd.f32 0.0, %v4179
      %v4181 = vpop.f32.mrb[0].mxu0
      %4182 = vmatprep.mubr.bf16.mxu0 0
      %4183 = vmatmul.mubr.bf16.gmra.mrb[0].mxu0 %v3223
      %v4184 = vpop.f32.mrb[0].mxu0
      %v4185 = vadd.f32 0.0, %v4184
      %v4186 = vpop.f32.mrb[0].mxu0
      %v4187 = vpop.f32.mrb[0].mxu0
      %v4188 = vpop.f32.mrb[0].mxu0
      %4189 = vmatprep.mubr.bf16.mxu0 0
      %4190 = vmatmul.mubr.bf16.gmra.mrb[0].mxu0 %v3225
      %v4191 = vpop.f32.mrb[0].mxu0
      %v4192 = vadd.f32 0.0, %v4191
      %v4193 = vpop.f32.mrb[0].mxu0
      %v4194 = vpop.f32.mrb[0].mxu0
      %v4195 = vadd.f32 0.0, %v4194
      %v4196 = vpop.f32.mrb[0].mxu0
      %4197 = vmatprep.mubr.bf16.mxu0 0
      %4198 = vmatmul.mubr.bf16.gmra.mrb[0].mxu0 %v3227
      %v4199 = vpop.f32.mrb[0].mxu0
      %v4200 = vadd.f32 0.0, %v4199
      %v4201 = vpop.f32.mrb[0].mxu0
      %v4202 = vpop.f32.mrb[0].mxu0
      %v4203 = vpop.f32.mrb[0].mxu0
      %4204 = vmatprep.mubr.bf16.mxu0 0
      %4205 = vmatmul.mubr.bf16.gmra.mrb[0].mxu0 %v3229
      %v4206 = vpop.f32.mrb[0].mxu0
      %v4207 = vadd.f32 0.0, %v4206
      %v4208 = vpop.f32.mrb[0].mxu0
      %v4209 = vpop.f32.mrb[0].mxu0
      %v4210 = vadd.f32 0.0, %v4209
      %v4211 = vpop.f32.mrb[0].mxu0
      %4212 = vmatprep.mubr.bf16.mxu0 0
      %4213 = vmatmul.mubr.bf16.gmra.mrb[0].mxu0 %v3231
      %v4214 = vpop.f32.mrb[0].mxu0
      %v4215 = vadd.f32 0.0, %v4214
      %v4216 = vpop.f32.mrb[0].mxu0
      %v4217 = vpop.f32.mrb[0].mxu0
      %v4218 = vpop.f32.mrb[0].mxu0
      %4219 = vmatprep.mubr.bf16.mxu0 0
      %4220 = vmatmul.mubr.bf16.gmra.mrb[0].mxu0 %v3233
      %v4221 = vpop.f32.mrb[0].mxu0
      %v4222 = vadd.f32 0.0, %v4221
      %v4223 = vpop.f32.mrb[0].mxu0
      %v4224 = vpop.f32.mrb[0].mxu0
      %v4225 = vadd.f32 0.0, %v4224
      %v4226 = vpop.f32.mrb[0].mxu0
      %4227 = vmatprep.mubr.bf16.mxu0 0
      %4228 = vmatmul.mubr.bf16.gmra.mrb[0].mxu0 %v3235
      %v4229 = vpop.f32.mrb[0].mxu0
      %v4230 = vadd.f32 0.0, %v4229
      %v4231 = vpop.f32.mrb[0].mxu0
      %v4232 = vpop.f32.mrb[0].mxu0
      %v4233 = vpop.f32.mrb[0].mxu0
      %4234 = vmatprep.mubr.bf16.mxu0 0
      %4235 = vmatmul.mubr.bf16.gmra.mrb[0].mxu0 %v3237
      %v4236 = vpop.f32.mrb[0].mxu0
      %v4237 = vadd.f32 0.0, %v4236
      %v4238 = vpop.f32.mrb[0].mxu0
      %v4239 = vpop.f32.mrb[0].mxu0
      %v4240 = vadd.f32 0.0, %v4239
      %v4241 = vpop.f32.mrb[0].mxu0
      %4242 = vmatprep.mubr.bf16.mxu0 0
      %4243 = vmatmul.mubr.bf16.gmra.mrb[0].mxu0 %v3239
      %v4244 = vpop.f32.mrb[0].mxu0
      %v4245 = vadd.f32 0.0, %v4244
      %v4246 = vpop.f32.mrb[0].mxu0
      %v4247 = vpop.f32.mrb[0].mxu0
      %v4248 = vpop.f32.mrb[0].mxu0
      %4249 = vmatprep.mubr.bf16.mxu0 0
      %4250 = vmatmul.mubr.bf16.gmra.mrb[0].mxu0 %v3241
      %v4251 = vpop.f32.mrb[0].mxu0
      %v4252 = vadd.f32 0.0, %v4251
      %v4253 = vpop.f32.mrb[0].mxu0
      %v4254 = vpop.f32.mrb[0].mxu0
      %v4255 = vadd.f32 0.0, %v4254
      %v4256 = vpop.f32.mrb[0].mxu0
      %4257 = vmatprep.mubr.bf16.mxu0 0
      %4258 = vmatmul.mubr.bf16.gmra.mrb[0].mxu0 %v3243
      %v4259 = vpop.f32.mrb[0].mxu0
      %v4260 = vadd.f32 0.0, %v4259
      %v4261 = vpop.f32.mrb[0].mxu0
      %v4262 = vpop.f32.mrb[0].mxu0
      %v4263 = vpop.f32.mrb[0].mxu0
      %4264 = vdwg.mxu0
      %v4313 = vrot.slane %v4027, 2
      %v4314 = vrot.slane %v4030, 2
      %v4315 = vsel %vm1237, %v4313, %v4314
      %v4316 = vrot.slane %v4035, 2
      %v4317 = vsel %vm1237, %v4314, %v4316
      %v4318 = vrot.slane %v4042, 2
      %v4319 = vrot.slane %v4045, 2
      %v4320 = vsel %vm1237, %v4318, %v4319
      %v4321 = vrot.slane %v4050, 2
      %v4322 = vsel %vm1237, %v4319, %v4321
      %v4323 = vrot.slane %v4057, 2
      %v4324 = vrot.slane %v4060, 2
      %v4325 = vsel %vm1237, %v4323, %v4324
      %v4326 = vrot.slane %v4065, 2
      %v4327 = vsel %vm1237, %v4324, %v4326
      %v4328 = vrot.slane %v4072, 2
      %v4329 = vrot.slane %v4075, 2
      %v4330 = vsel %vm1237, %v4328, %v4329
      %v4331 = vrot.slane %v4080, 2
      %v4332 = vsel %vm1237, %v4329, %v4331
      %v4333 = vrot.slane %v4087, 2
      %v4334 = vrot.slane %v4090, 2
      %v4335 = vsel %vm1237, %v4333, %v4334
      %v4336 = vrot.slane %v4095, 2
      %v4337 = vsel %vm1237, %v4334, %v4336
      %v4338 = vrot.slane %v4102, 2
      %v4339 = vrot.slane %v4105, 2
      %v4340 = vsel %vm1237, %v4338, %v4339
      %v4341 = vrot.slane %v4110, 2
      %v4342 = vsel %vm1237, %v4339, %v4341
      %v4343 = vrot.slane %v4117, 2
      %v4344 = vrot.slane %v4120, 2
      %v4345 = vsel %vm1237, %v4343, %v4344
      %v4346 = vrot.slane %v4125, 2
      %v4347 = vsel %vm1237, %v4344, %v4346
      %v4348 = vrot.slane %v4132, 2
      %v4349 = vrot.slane %v4135, 2
      %v4350 = vsel %vm1237, %v4348, %v4349
      %v4351 = vrot.slane %v4140, 2
      %v4352 = vsel %vm1237, %v4349, %v4351
      %v4353 = vrot.slane %v4147, 2
      %v4354 = vrot.slane %v4150, 2
      %v4355 = vsel %vm1237, %v4353, %v4354
      %v4356 = vrot.slane %v4155, 2
      %v4357 = vsel %vm1237, %v4354, %v4356
      %v4358 = vrot.slane %v4162, 2
      %v4359 = vrot.slane %v4165, 2
      %v4360 = vsel %vm1237, %v4358, %v4359
      %v4361 = vrot.slane %v4170, 2
      %v4362 = vsel %vm1237, %v4359, %v4361
      %v4363 = vrot.slane %v4177, 2
      %v4364 = vrot.slane %v4180, 2
      %v4365 = vsel %vm1237, %v4363, %v4364
      %v4366 = vrot.slane %v4185, 2
      %v4367 = vsel %vm1237, %v4364, %v4366
      %v4368 = vrot.slane %v4192, 2
      %v4369 = vrot.slane %v4195, 2
      %v4370 = vsel %vm1237, %v4368, %v4369
      %v4371 = vrot.slane %v4200, 2
      %v4372 = vsel %vm1237, %v4369, %v4371
      %v4373 = vrot.slane %v4207, 2
      %v4374 = vrot.slane %v4210, 2
      %v4375 = vsel %vm1237, %v4373, %v4374
      %v4376 = vrot.slane %v4215, 2
      %v4377 = vsel %vm1237, %v4374, %v4376
      %v4378 = vrot.slane %v4222, 2
      %v4379 = vrot.slane %v4225, 2
      %v4380 = vsel %vm1237, %v4378, %v4379
      %v4381 = vrot.slane %v4230, 2
      %v4382 = vsel %vm1237, %v4379, %v4381
      %v4383 = vrot.slane %v4237, 2
      %v4384 = vrot.slane %v4240, 2
      %v4385 = vsel %vm1237, %v4383, %v4384
      %v4386 = vrot.slane %v4245, 2
      %v4387 = vsel %vm1237, %v4384, %v4386
      %v4388 = vrot.slane %v4252, 2
      %v4389 = vrot.slane %v4255, 2
      %v4390 = vsel %vm1237, %v4388, %v4389
      %v4391 = vrot.slane %v4260, 2
      %v4392 = vsel %vm1237, %v4389, %v4391
      %v4425 = vadd.f32 %v3949, %v4315
      %v4426 = vadd.f32 %v3950, %v4317
      %v4427 = vadd.f32 %v3951, %v4320
      %v4428 = vadd.f32 %v3952, %v4322
      %v4429 = vadd.f32 %v3953, %v4325
      %v4430 = vadd.f32 %v3954, %v4327
      %v4431 = vadd.f32 %v3955, %v4330
      %v4432 = vadd.f32 %v3956, %v4332
      %v4433 = vadd.f32 %v3957, %v4335
      %v4434 = vadd.f32 %v3958, %v4337
      %v4435 = vadd.f32 %v3959, %v4340
      %v4436 = vadd.f32 %v3960, %v4342
      %v4437 = vadd.f32 %v3961, %v4345
      %v4438 = vadd.f32 %v3962, %v4347
      %v4439 = vadd.f32 %v3963, %v4350
      %v4440 = vadd.f32 %v3964, %v4352
      %v4441 = vadd.f32 %v3965, %v4355
      %v4442 = vadd.f32 %v3966, %v4357
      %v4443 = vadd.f32 %v3967, %v4360
      %v4444 = vadd.f32 %v3968, %v4362
      %v4445 = vadd.f32 %v3969, %v4365
      %v4446 = vadd.f32 %v3970, %v4367
      %v4447 = vadd.f32 %v3971, %v4370
      %v4448 = vadd.f32 %v3972, %v4372
      %v4449 = vadd.f32 %v3973, %v4375
      %v4450 = vadd.f32 %v3974, %v4377
      %v4451 = vadd.f32 %v3975, %v4380
      %v4452 = vadd.f32 %v3976, %v4382
      %v4453 = vadd.f32 %v3977, %v4385
      %v4454 = vadd.f32 %v3978, %v4387
      %v4455 = vadd.f32 %v3979, %v4390
      %v4456 = vadd.f32 %v3980, %v4392
      %v4458 = vlaneseq
      %v4459 = vshrl.u32 %v4458, 7
      %v4460 = vsub.s32 0, %v4459
      %v4461 = vrot.slane %v515, %v4460
      %v4463 = vmul.f32 %v4425, %v4461
      %v4464 = vmul.f32 %v4426, %v4461
      %v4465 = vmul.f32 %v4427, %v4461
      %v4466 = vmul.f32 %v4428, %v4461
      %v4467 = vmul.f32 %v4429, %v4461
      %v4468 = vmul.f32 %v4430, %v4461
      %v4469 = vmul.f32 %v4431, %v4461
      %v4470 = vmul.f32 %v4432, %v4461
      %v4471 = vmul.f32 %v4433, %v4461
      %v4472 = vmul.f32 %v4434, %v4461
      %v4473 = vmul.f32 %v4435, %v4461
      %v4474 = vmul.f32 %v4436, %v4461
      %v4475 = vmul.f32 %v4437, %v4461
      %v4476 = vmul.f32 %v4438, %v4461
      %v4477 = vmul.f32 %v4439, %v4461
      %v4478 = vmul.f32 %v4440, %v4461
      %v4479 = vmul.f32 %v4441, %v4461
      %v4480 = vmul.f32 %v4442, %v4461
      %v4481 = vmul.f32 %v4443, %v4461
      %v4482 = vmul.f32 %v4444, %v4461
      %v4483 = vmul.f32 %v4445, %v4461
      %v4484 = vmul.f32 %v4446, %v4461
      %v4485 = vmul.f32 %v4447, %v4461
      %v4486 = vmul.f32 %v4448, %v4461
      %v4487 = vmul.f32 %v4449, %v4461
      %v4488 = vmul.f32 %v4450, %v4461
      %v4489 = vmul.f32 %v4451, %v4461
      %v4490 = vmul.f32 %v4452, %v4461
      %v4491 = vmul.f32 %v4453, %v4461
      %v4492 = vmul.f32 %v4454, %v4461
      %v4493 = vmul.f32 %v4455, %v4461
      %v4494 = vmul.f32 %v4456, %v4461
      %v4496 = vlaneseq
      %v4497 = vshrl.u32 %v4496, 7
      %v4498 = vsub.s32 0, %v4497
      %v4499 = vrot.slane %v516, %v4498
      %v4501 = vadd.f32 %v4463, %v4499
      %v4502 = vadd.f32 %v4464, %v4499
      %v4503 = vadd.f32 %v4465, %v4499
      %v4504 = vadd.f32 %v4466, %v4499
      %v4505 = vadd.f32 %v4467, %v4499
      %v4506 = vadd.f32 %v4468, %v4499
      %v4507 = vadd.f32 %v4469, %v4499
      %v4508 = vadd.f32 %v4470, %v4499
      %v4509 = vadd.f32 %v4471, %v4499
      %v4510 = vadd.f32 %v4472, %v4499
      %v4511 = vadd.f32 %v4473, %v4499
      %v4512 = vadd.f32 %v4474, %v4499
      %v4513 = vadd.f32 %v4475, %v4499
      %v4514 = vadd.f32 %v4476, %v4499
      %v4515 = vadd.f32 %v4477, %v4499
      %v4516 = vadd.f32 %v4478, %v4499
      %v4517 = vadd.f32 %v4479, %v4499
      %v4518 = vadd.f32 %v4480, %v4499
      %v4519 = vadd.f32 %v4481, %v4499
      %v4520 = vadd.f32 %v4482, %v4499
      %v4521 = vadd.f32 %v4483, %v4499
      %v4522 = vadd.f32 %v4484, %v4499
      %v4523 = vadd.f32 %v4485, %v4499
      %v4524 = vadd.f32 %v4486, %v4499
      %v4525 = vadd.f32 %v4487, %v4499
      %v4526 = vadd.f32 %v4488, %v4499
      %v4527 = vadd.f32 %v4489, %v4499
      %v4528 = vadd.f32 %v4490, %v4499
      %v4529 = vadd.f32 %v4491, %v4499
      %v4530 = vadd.f32 %v4492, %v4499
      %v4531 = vadd.f32 %v4493, %v4499
      %v4532 = vadd.f32 %v4494, %v4499
      %v4533 = vld [vmem:[%s273] sm:$0xff]
      %v4534 = vld [vmem:[%s273 + $0x8] sm:$0xff]
      %v4535 = vld [vmem:[%s273 + $0x10] sm:$0xff]
      %v4536 = vld [vmem:[%s273 + $0x18] sm:$0xff]
      %v4537 = vld [vmem:[%s273 + $0x20] sm:$0xff]
      %v4538 = vld [vmem:[%s273 + $0x28] sm:$0xff]
      %v4539 = vld [vmem:[%s273 + $0x30] sm:$0xff]
      %v4540 = vld [vmem:[%s273 + $0x38] sm:$0xff]
      %v4541 = vld [vmem:[%s273 + $0x40] sm:$0xff]
      %v4542 = vld [vmem:[%s273 + $0x48] sm:$0xff]
      %v4543 = vld [vmem:[%s273 + $0x50] sm:$0xff]
      %v4544 = vld [vmem:[%s273 + $0x58] sm:$0xff]
      %v4545 = vld [vmem:[%s273 + $0x60] sm:$0xff]
      %v4546 = vld [vmem:[%s273 + $0x68] sm:$0xff]
      %v4547 = vld [vmem:[%s273 + $0x70] sm:$0xff]
      %v4548 = vld [vmem:[%s273 + $0x78] sm:$0xff]
      %v4549 = vld [vmem:[%s273 + $0x80] sm:$0xff]
      %v4550 = vld [vmem:[%s273 + $0x88] sm:$0xff]
      %v4551 = vld [vmem:[%s273 + $0x90] sm:$0xff]
      %v4552 = vld [vmem:[%s273 + $0x98] sm:$0xff]
      %v4553 = vld [vmem:[%s273 + $0xa0] sm:$0xff]
      %v4554 = vld [vmem:[%s273 + $0xa8] sm:$0xff]
      %v4555 = vld [vmem:[%s273 + $0xb0] sm:$0xff]
      %v4556 = vld [vmem:[%s273 + $0xb8] sm:$0xff]
      %v4557 = vld [vmem:[%s273 + $0xc0] sm:$0xff]
      %v4558 = vld [vmem:[%s273 + $0xc8] sm:$0xff]
      %v4559 = vld [vmem:[%s273 + $0xd0] sm:$0xff]
      %v4560 = vld [vmem:[%s273 + $0xd8] sm:$0xff]
      %v4561 = vld [vmem:[%s273 + $0xe0] sm:$0xff]
      %v4562 = vld [vmem:[%s273 + $0xe8] sm:$0xff]
      %v4563 = vld [vmem:[%s273 + $0xf0] sm:$0xff]
      %v4564 = vld [vmem:[%s273 + $0xf8] sm:$0xff]
      %v4565 = vadd.f32 %v4501, %v4533
      %v4566 = vadd.f32 %v4502, %v4534
      %v4567 = vadd.f32 %v4503, %v4535
      %v4568 = vadd.f32 %v4504, %v4536
      %v4569 = vadd.f32 %v4505, %v4537
      %v4570 = vadd.f32 %v4506, %v4538
      %v4571 = vadd.f32 %v4507, %v4539
      %v4572 = vadd.f32 %v4508, %v4540
      %v4573 = vadd.f32 %v4509, %v4541
      %v4574 = vadd.f32 %v4510, %v4542
      %v4575 = vadd.f32 %v4511, %v4543
      %v4576 = vadd.f32 %v4512, %v4544
      %v4577 = vadd.f32 %v4513, %v4545
      %v4578 = vadd.f32 %v4514, %v4546
      %v4579 = vadd.f32 %v4515, %v4547
      %v4580 = vadd.f32 %v4516, %v4548
      %v4581 = vadd.f32 %v4517, %v4549
      %v4582 = vadd.f32 %v4518, %v4550
      %v4583 = vadd.f32 %v4519, %v4551
      %v4584 = vadd.f32 %v4520, %v4552
      %v4585 = vadd.f32 %v4521, %v4553
      %v4586 = vadd.f32 %v4522, %v4554
      %v4587 = vadd.f32 %v4523, %v4555
      %v4588 = vadd.f32 %v4524, %v4556
      %v4589 = vadd.f32 %v4525, %v4557
      %v4590 = vadd.f32 %v4526, %v4558
      %v4591 = vadd.f32 %v4527, %v4559
      %v4592 = vadd.f32 %v4528, %v4560
      %v4593 = vadd.f32 %v4529, %v4561
      %v4594 = vadd.f32 %v4530, %v4562
      %v4595 = vadd.f32 %v4531, %v4563
      %v4596 = vadd.f32 %v4532, %v4564
      %v4597 = vmax.f32 %v4565, 0.0
      %v4598 = vmax.f32 %v4566, 0.0
      %v4599 = vmax.f32 %v4567, 0.0
      %v4600 = vmax.f32 %v4568, 0.0
      %v4601 = vmax.f32 %v4569, 0.0
      %v4602 = vmax.f32 %v4570, 0.0
      %v4603 = vmax.f32 %v4571, 0.0
      %v4604 = vmax.f32 %v4572, 0.0
      %v4605 = vmax.f32 %v4573, 0.0
      %v4606 = vmax.f32 %v4574, 0.0
      %v4607 = vmax.f32 %v4575, 0.0
      %v4608 = vmax.f32 %v4576, 0.0
      %v4609 = vmax.f32 %v4577, 0.0
      %v4610 = vmax.f32 %v4578, 0.0
      %v4611 = vmax.f32 %v4579, 0.0
      %v4612 = vmax.f32 %v4580, 0.0
      %v4613 = vmax.f32 %v4581, 0.0
      %v4614 = vmax.f32 %v4582, 0.0
      %v4615 = vmax.f32 %v4583, 0.0
      %v4616 = vmax.f32 %v4584, 0.0
      %v4617 = vmax.f32 %v4585, 0.0
      %v4618 = vmax.f32 %v4586, 0.0
      %v4619 = vmax.f32 %v4587, 0.0
      %v4620 = vmax.f32 %v4588, 0.0
      %v4621 = vmax.f32 %v4589, 0.0
      %v4622 = vmax.f32 %v4590, 0.0
      %v4623 = vmax.f32 %v4591, 0.0
      %v4624 = vmax.f32 %v4592, 0.0
      %v4625 = vmax.f32 %v4593, 0.0
      %v4626 = vmax.f32 %v4594, 0.0
      %v4627 = vmax.f32 %v4595, 0.0
      %v4628 = vmax.f32 %v4596, 0.0
      %4629 = vst.msk [vmem:[%s278] sm:$0xff] %vm280, %v4597
      %4630 = vst.msk [vmem:[%s278 + $0x8] sm:$0xff] %vm280, %v4598
      %4631 = vst.msk [vmem:[%s278 + $0x10] sm:$0xff] %vm280, %v4599
      %4632 = vst.msk [vmem:[%s278 + $0x18] sm:$0xff] %vm280, %v4600
      %4633 = vst.msk [vmem:[%s278 + $0x20] sm:$0xff] %vm280, %v4601
      %4634 = vst.msk [vmem:[%s278 + $0x28] sm:$0xff] %vm280, %v4602
      %4635 = vst.msk [vmem:[%s278 + $0x30] sm:$0xff] %vm280, %v4603
      %4636 = vst.msk [vmem:[%s278 + $0x38] sm:$0xff] %vm280, %v4604
      %4637 = vst.msk [vmem:[%s278 + $0x40] sm:$0xff] %vm280, %v4605
      %4638 = vst.msk [vmem:[%s278 + $0x48] sm:$0xff] %vm280, %v4606
      %4639 = vst.msk [vmem:[%s278 + $0x50] sm:$0xff] %vm280, %v4607
      %4640 = vst.msk [vmem:[%s278 + $0x58] sm:$0xff] %vm280, %v4608
      %4641 = vst.msk [vmem:[%s278 + $0x60] sm:$0xff] %vm280, %v4609
      %4642 = vst.msk [vmem:[%s278 + $0x68] sm:$0xff] %vm280, %v4610
      %4643 = vst.msk [vmem:[%s278 + $0x70] sm:$0xff] %vm280, %v4611
      %4644 = vst.msk [vmem:[%s278 + $0x78] sm:$0xff] %vm280, %v4612
      %4645 = vst.msk [vmem:[%s278 + $0x80] sm:$0xff] %vm280, %v4613
      %4646 = vst.msk [vmem:[%s278 + $0x88] sm:$0xff] %vm280, %v4614
      %4647 = vst.msk [vmem:[%s278 + $0x90] sm:$0xff] %vm280, %v4615
      %4648 = vst.msk [vmem:[%s278 + $0x98] sm:$0xff] %vm280, %v4616
      %4649 = vst.msk [vmem:[%s278 + $0xa0] sm:$0xff] %vm280, %v4617
      %4650 = vst.msk [vmem:[%s278 + $0xa8] sm:$0xff] %vm280, %v4618
      %4651 = vst.msk [vmem:[%s278 + $0xb0] sm:$0xff] %vm280, %v4619
      %4652 = vst.msk [vmem:[%s278 + $0xb8] sm:$0xff] %vm280, %v4620
      %4653 = vst.msk [vmem:[%s278 + $0xc0] sm:$0xff] %vm280, %v4621
      %4654 = vst.msk [vmem:[%s278 + $0xc8] sm:$0xff] %vm280, %v4622
      %4655 = vst.msk [vmem:[%s278 + $0xd0] sm:$0xff] %vm280, %v4623
      %4656 = vst.msk [vmem:[%s278 + $0xd8] sm:$0xff] %vm280, %v4624
      %4657 = vst.msk [vmem:[%s278 + $0xe0] sm:$0xff] %vm280, %v4625
      %4658 = vst.msk [vmem:[%s278 + $0xe8] sm:$0xff] %vm280, %v4626
      %4659 = vst.msk [vmem:[%s278 + $0xf0] sm:$0xff] %vm280, %v4627
      %4660 = vst.msk [vmem:[%s278 + $0xf8] sm:$0xff] %vm280, %v4628
      %p4661 = scmp.lt.s32.totalorder %s18, 1
      %s4662 = scalar_select %p4661, %s18, 1
      %s4663 = smul.addr %s4662, 32
      %s4664 = smul.addr %s4663, 8
      %s4665 = scalar_lea.vmem %s7, %s4664
      // Predicated region
      $region49: #{attn_basic_block_nhwc.1} parent=47 // pred_check
        %p4666 = pneg %p188
      $region50: #{attn_basic_block_nhwc.1} parent=47 // pred_check_branch
        %4668 = sbr.rel (%p4666) target = $region52
      $region51: #{attn_basic_block_nhwc.1} parent=47 // pred_region
        _
      $region52: #{attn_basic_block_nhwc.1} parent=47 // pred_fallthru
        _
    $region48: #{attn_basic_block_nhwc.1} parent=5 // pred_fallthru
      _
    %p4669 = scmp.le.s32.totalorder 2, %s13
    // Predicated region
    $region53: #{attn_basic_block_nhwc.1} parent=5 // pred_check
      %p4670 = pneg %p4669
    $region54: #{attn_basic_block_nhwc.1} parent=5 // pred_check_branch
      %4672 = sbr.rel (%p4670) target = $region56
    $region55: #{attn_basic_block_nhwc.1} parent=5 // pred_region
      %s4673 = ssub.s32 %s13, 2
      // Predicated region
      $region57: #{attn_basic_block_nhwc.1} parent=55 // pred_check
        %p4674 = pneg %p194
      $region58: #{attn_basic_block_nhwc.1} parent=55 // pred_check_branch
        %4676 = sbr.rel (%p4674) target = $region60
      $region59: #{attn_basic_block_nhwc.1} parent=55 // pred_region
        %p4677 = scmp.lt.s32.totalorder %s19, 1
        %s4678 = scalar_select %p4677, %s19, 1
        %s4679 = smul.addr %s4678, 32
        %s4680 = smul.addr %s4679, 8
        %s4681 = scalar_lea.vmem %s7, %s4680
      $region60: #{attn_basic_block_nhwc.1} parent=55 // pred_fallthru
        _
    $region56: #{attn_basic_block_nhwc.1} parent=5 // pred_fallthru
      _
  $region6: #{attn_basic_block_nhwc.1} parent=0 // loop_footer
    %s17 = sadd.s32 1, %s13
  $region7: #{attn_basic_block_nhwc.1} parent=0 // loop_footer_branch
    %12 = sbr.rel target = $region3
  $region8: #{attn_basic_block_nhwc.1} parent=0 // loop_exit
    _

</llo_original>
